<compile_context>
chip_gen: v5e
topology: v5e:2x2
jax: 0.10.0
libtpu: 0.0.40
codegen_flags: <defaults>
</compile_context>

<pallas_src>
import jax
import jax.numpy as jnp
import numpy as np
from jax.experimental import pallas as pl
from jax.experimental.pallas import tpu as pltpu

C_HID = 10
K = 3


def _sr_kernel(x_ref, w1_ref, b1_ref, w2_ref, b2_ref, out_ref):
    # x_ref  : (H+4, W+4) f32 VMEM  -- full by-2 padded image for this batch element
    # w1_ref : (9*C_HID,) f32 SMEM  -- w1[(ky*3+kx)*C_HID + c]
    # b1_ref : (C_HID,)   f32 SMEM
    # w2_ref : (9*C_HID,) f32 SMEM  -- w2[(ky*3+kx)*C_HID + c]
    # b2_ref : (1,)       f32 SMEM
    # out_ref: (TH, W)    f32 VMEM  -- one output row strip (W on lanes)
    TH, W = out_ref.shape
    n_strips = pl.num_programs(1)
    H = TH * n_strips                     # wrapper guarantees H % TH == 0
    s = pl.program_id(1)

    row0 = s * TH
    if TH % 8 == 0:
        row0 = pl.multiple_of(row0, 8)    # strip window starts on an 8-sublane boundary
    xwin = x_ref[pl.ds(row0, TH + 4), :]  # (TH+4, W+4) strip of the by-2 padded input

    # Validity mask for the conv2 halo ring: hidden position (gi, gj) is real iff it
    # lies inside the HxW image; outside -> 0 (this IS conv2's zero padding, and for
    # interior strip boundaries the halo row is the true neighbouring-strip value).
    gi = s * TH - 1 + jax.lax.broadcasted_iota(jnp.int32, (TH + 2, W + 2), 0)
    gj = -1 + jax.lax.broadcasted_iota(jnp.int32, (TH + 2, W + 2), 1)
    valid = (gi >= 0) & (gi < H) & (gj >= 0) & (gj < W)

    acc = jnp.zeros((TH, W), jnp.float32)
    for c in range(C_HID):
        # ---- Conv1 (1 -> channel c), 3x3, evaluated on the 1-px-extended grid -------
        pre = jnp.zeros((TH + 2, W + 2), jnp.float32)
        for ky in range(K):
            for kx in range(K):
                w = w1_ref[(ky * K + kx) * C_HID + c]           # scalar read from SMEM
                pre = pre + w * xwin[ky:ky + TH + 2, kx:kx + W + 2]
        hidden = jnp.where(valid, jnp.maximum(pre + b1_ref[c], 0.0), 0.0)

        # ---- Conv2 (channel c -> 1): 9 shifted, w2-weighted taps, fused -------------
        for ky in range(K):
            for kx in range(K):
                w = w2_ref[(ky * K + kx) * C_HID + c]           # scalar read from SMEM
                acc = acc + w * hidden[ky:ky + TH, kx:kx + W]

    # Single lane-dense store for the whole strip.
    out_ref[...] = jax.nn.sigmoid(acc + b2_ref[0]).astype(out_ref.dtype)


def _pick_strip_rows(H, W, max_rows=128):
    """Largest row-strip size: whole image if small, else a divisor of H that is a
    multiple of 8 (BlockSpec sublane rule) -- only when W is lane-aligned (mult of 128)."""
    if H <= max_rows:
        return H
    if W % 128 != 0:
        return H  # strip blocks would violate the (8,128) rule; fall back to whole image
    for th in range(max_rows, 7, -1):
        if H % th == 0 and th % 8 == 0:
            return th
    return H


def sr_forward(x_nchw, w1, b1, w2, b2, *, max_strip_rows=128):
    """Forward pass matching MySRModel. x_nchw: (N, 1, H, W) float32 -> (N, 1, H, W)."""
    N, C, H, W = x_nchw.shape
    assert C == 1
    x = x_nchw[:, 0].astype(jnp.float32)                       # (N, H, W), W on lanes
    xp2 = jnp.pad(x, ((0, 0), (2, 2), (2, 2)))                 # padded by 2: (N, H+4, W+4)
    Hp2, Wp2 = H + 4, W + 4

    TH = _pick_strip_rows(H, W, max_strip_rows)
    n_strips = H // TH

    # Flatten weights so they can live in SMEM and be read as scalars in the kernel.
    w1_s = jnp.asarray(w1, jnp.float32).reshape(K * K * 1 * C_HID)   # (ky*3+kx)*10 + c
    b1_s = jnp.asarray(b1, jnp.float32).reshape(C_HID)
    w2_s = jnp.asarray(w2, jnp.float32).reshape(K * K * C_HID * 1)   # (ky*3+kx)*10 + c
    b2_s = jnp.asarray(b2, jnp.float32).reshape(1)

    out_nhw = pl.pallas_call(
        _sr_kernel,
        out_shape=jax.ShapeDtypeStruct((N, H, W), jnp.float32),
        grid_spec=pltpu.PrefetchScalarGridSpec(
            num_scalar_prefetch=0,
            grid=(N, n_strips),
            in_specs=[
                # Batch dim squeezed (None) -> kernel sees a 2-D (H+4, W+4) plane.
                # Index map ignores the strip axis, so the plane stays resident.
                pl.BlockSpec((None, Hp2, Wp2), lambda n, s: (n, 0, 0)),
                pl.BlockSpec(memory_space=pltpu.MemorySpace.SMEM),   # w1 (90,)
                pl.BlockSpec(memory_space=pltpu.MemorySpace.SMEM),   # b1 (10,)
                pl.BlockSpec(memory_space=pltpu.MemorySpace.SMEM),   # w2 (90,)
                pl.BlockSpec(memory_space=pltpu.MemorySpace.SMEM),   # b2 (1,)
            ],
            out_specs=pl.BlockSpec((None, TH, W), lambda n, s: (n, s, 0)),
        ),
        compiler_params=pltpu.CompilerParams(
            # Both axes embarrassingly parallel -> megacore sharding on v7x.
            dimension_semantics=("parallel", "parallel"),
            # Explicit, generation-portable budget (<= v7x's 64 MiB physical VMEM).
            vmem_limit_bytes=32 * 1024 * 1024,
        ),
    )(xp2, w1_s, b1_s, w2_s, b2_s)

    return out_nhw[:, None, :, :]                               # back to NCHW


def _reference(x_nchw, w1, b1, w2, b2):
    """Pure-JAX reference (lax convolutions), mirrors the PyTorch forward."""
    w1_oihw = jnp.transpose(w1, (3, 2, 0, 1))   # HWIO -> OIHW
    w2_oihw = jnp.transpose(w2, (3, 2, 0, 1))
    h = jax.lax.conv_general_dilated(
        x_nchw, w1_oihw, (1, 1), "SAME",
        dimension_numbers=("NCHW", "OIHW", "NCHW"))
    h = jnp.maximum(h + b1.reshape(1, C_HID, 1, 1), 0.0)
    o = jax.lax.conv_general_dilated(
        h, w2_oihw, (1, 1), "SAME",
        dimension_numbers=("NCHW", "OIHW", "NCHW"))
    return jax.nn.sigmoid(o + b2.reshape(1, 1, 1, 1))


if __name__ == "__main__":
    key = jax.random.PRNGKey(0)
    k1, k2, k3, k4, kx = jax.random.split(key, 5)

    # Deterministic synthetic parameters (shapes from the module's __init__), HWIO.
    w1 = jax.random.normal(k1, (K, K, 1, C_HID), jnp.float32) * 0.2   # Conv2d(1, 10, 3)
    b1 = jax.random.normal(k2, (C_HID,), jnp.float32) * 0.1
    w2 = jax.random.normal(k3, (K, K, C_HID, 1), jnp.float32) * 0.2   # Conv2d(10, 1, 3)
    b2 = jax.random.normal(k4, (1,), jnp.float32) * 0.1

    # NCHW input, channels=1 as implied by the first conv.
    x = jax.random.normal(kx, (2, 1, 16, 16), jnp.float32)

    out = jax.block_until_ready(sr_forward(x, w1, b1, w2, b2))
    ref = jax.block_until_ready(_reference(x, w1, b1, w2, b2))

    assert out.shape == (2, 1, 16, 16), out.shape
    assert np.allclose(np.asarray(out), np.asarray(ref), atol=1e-5, rtol=1e-5), (
        np.max(np.abs(np.asarray(out) - np.asarray(ref))))

    print("KERNEL_OK")
</pallas_src>

<mosaic_0001>
module attributes {stable_mosaic.version = 11 : i64} {
  func.func @_sr_kernel(%arg0: i32, %arg1: i32, %arg2: memref<1x20x20xf32, #tpu.memory_space<vmem>>, %arg3: memref<90xf32, #tpu.memory_space<smem>>, %arg4: memref<10xf32, #tpu.memory_space<smem>>, %arg5: memref<90xf32, #tpu.memory_space<smem>>, %arg6: memref<1xf32, #tpu.memory_space<smem>>, %arg7: memref<1x16x16xf32, #tpu.memory_space<vmem>>) attributes {dimension_semantics = [#tpu.dimension_semantics<parallel>, #tpu.dimension_semantics<parallel>], iteration_bounds = array<i64: 2, 1>, scalar_prefetch = 0 : i64, scratch_operands = 0 : i64, tpu.core_type = #tpu.core_type<tc>, window_params = [{transform_indices = @transform_0, window_bounds = array<i64: 1, 20, 20>}, {transform_indices = @transform_1, window_bounds = array<i64: 90>}, {transform_indices = @transform_2, window_bounds = array<i64: 10>}, {transform_indices = @transform_3, window_bounds = array<i64: 90>}, {transform_indices = @transform_4, window_bounds = array<i64: 1>}, {transform_indices = @transform_5, window_bounds = array<i64: 1, 16, 16>}]} {
    %c16_i32 = arith.constant 16 : i32
    %0 = arith.muli %arg1, %c16_i32 : i32
    %1 = tpu.assume_multiple %0, 8 : i32
    %c0 = arith.constant 0 : index
    %2 = arith.index_cast %1 : i32 to index
    %c0_0 = arith.constant 0 : index
    %3 = vector.load %arg2[%c0, %2, %c0_0] : memref<1x20x20xf32, #tpu.memory_space<vmem>>, vector<1x20x20xf32>
    %4 = vector.shape_cast %3 : vector<1x20x20xf32> to vector<20x20xf32>
    %c16_i32_1 = arith.constant 16 : i32
    %5 = arith.muli %arg1, %c16_i32_1 : i32
    %c1_i32 = arith.constant 1 : i32
    %6 = arith.subi %5, %c1_i32 : i32
    %7 = tpu.iota {dimensions = array<i32: 0>} : vector<18x18xi32>
    %8 = vector.broadcast %6 : i32 to vector<18x18xi32>
    %9 = arith.addi %8, %7 : vector<18x18xi32>
    %10 = tpu.iota {dimensions = array<i32: 1>} : vector<18x18xi32>
    %c-1_i32 = arith.constant -1 : i32
    %11 = vector.broadcast %c-1_i32 : i32 to vector<18x18xi32>
    %12 = arith.addi %11, %10 : vector<18x18xi32>
    %c0_i32 = arith.constant 0 : i32
    %13 = vector.broadcast %c0_i32 : i32 to vector<18x18xi32>
    %14 = arith.cmpi sge, %9, %13 : vector<18x18xi32>
    %c16_i32_2 = arith.constant 16 : i32
    %15 = vector.broadcast %c16_i32_2 : i32 to vector<18x18xi32>
    %16 = arith.cmpi slt, %9, %15 : vector<18x18xi32>
    %17 = arith.andi %14, %16 : vector<18x18xi1>
    %c0_i32_3 = arith.constant 0 : i32
    %18 = vector.broadcast %c0_i32_3 : i32 to vector<18x18xi32>
    %19 = arith.cmpi sge, %12, %18 : vector<18x18xi32>
    %20 = arith.andi %17, %19 : vector<18x18xi1>
    %c16_i32_4 = arith.constant 16 : i32
    %21 = vector.broadcast %c16_i32_4 : i32 to vector<18x18xi32>
    %22 = arith.cmpi slt, %12, %21 : vector<18x18xi32>
    %23 = arith.andi %20, %22 : vector<18x18xi1>
    %cst = arith.constant 0.000000e+00 : f32
    %24 = vector.broadcast %cst : f32 to vector<16x16xf32>
    %cst_5 = arith.constant 0.000000e+00 : f32
    %25 = vector.broadcast %cst_5 : f32 to vector<18x18xf32>
    %c0_6 = arith.constant 0 : index
    %26 = memref.load %arg3[%c0_6] : memref<90xf32, #tpu.memory_space<smem>>
    %27 = vector.extract_strided_slice %4 {offsets = [0, 0], sizes = [18, 18], strides = [1, 1]} : vector<20x20xf32> to vector<18x18xf32>
    %28 = vector.broadcast %26 : f32 to vector<18x18xf32>
    %29 = arith.mulf %28, %27 : vector<18x18xf32>
    %30 = arith.addf %25, %29 : vector<18x18xf32>
    %c10 = arith.constant 10 : index
    %31 = memref.load %arg3[%c10] : memref<90xf32, #tpu.memory_space<smem>>
    %32 = vector.extract_strided_slice %4 {offsets = [0, 1], sizes = [18, 18], strides = [1, 1]} : vector<20x20xf32> to vector<18x18xf32>
    %33 = vector.broadcast %31 : f32 to vector<18x18xf32>
    %34 = arith.mulf %33, %32 : vector<18x18xf32>
    %35 = arith.addf %30, %34 : vector<18x18xf32>
    %c20 = arith.constant 20 : index
    %36 = memref.load %arg3[%c20] : memref<90xf32, #tpu.memory_space<smem>>
    %37 = vector.extract_strided_slice %4 {offsets = [0, 2], sizes = [18, 18], strides = [1, 1]} : vector<20x20xf32> to vector<18x18xf32>
    %38 = vector.broadcast %36 : f32 to vector<18x18xf32>
    %39 = arith.mulf %38, %37 : vector<18x18xf32>
    %40 = arith.addf %35, %39 : vector<18x18xf32>
    %c30 = arith.constant 30 : index
    %41 = memref.load %arg3[%c30] : memref<90xf32, #tpu.memory_space<smem>>
    %42 = vector.extract_strided_slice %4 {offsets = [1, 0], sizes = [18, 18], strides = [1, 1]} : vector<20x20xf32> to vector<18x18xf32>
    %43 = vector.broadcast %41 : f32 to vector<18x18xf32>
    %44 = arith.mulf %43, %42 : vector<18x18xf32>
    %45 = arith.addf %40, %44 : vector<18x18xf32>
    %c40 = arith.constant 40 : index
    %46 = memref.load %arg3[%c40] : memref<90xf32, #tpu.memory_space<smem>>
    %47 = vector.extract_strided_slice %4 {offsets = [1, 1], sizes = [18, 18], strides = [1, 1]} : vector<20x20xf32> to vector<18x18xf32>
    %48 = vector.broadcast %46 : f32 to vector<18x18xf32>
    %49 = arith.mulf %48, %47 : vector<18x18xf32>
    %50 = arith.addf %45, %49 : vector<18x18xf32>
    %c50 = arith.constant 50 : index
    %51 = memref.load %arg3[%c50] : memref<90xf32, #tpu.memory_space<smem>>
    %52 = vector.extract_strided_slice %4 {offsets = [1, 2], sizes = [18, 18], strides = [1, 1]} : vector<20x20xf32> to vector<18x18xf32>
    %53 = vector.broadcast %51 : f32 to vector<18x18xf32>
    %54 = arith.mulf %53, %52 : vector<18x18xf32>
    %55 = arith.addf %50, %54 : vector<18x18xf32>
    %c60 = arith.constant 60 : index
    %56 = memref.load %arg3[%c60] : memref<90xf32, #tpu.memory_space<smem>>
    %57 = vector.extract_strided_slice %4 {offsets = [2, 0], sizes = [18, 18], strides = [1, 1]} : vector<20x20xf32> to vector<18x18xf32>
    %58 = vector.broadcast %56 : f32 to vector<18x18xf32>
    %59 = arith.mulf %58, %57 : vector<18x18xf32>
    %60 = arith.addf %55, %59 : vector<18x18xf32>
    %c70 = arith.constant 70 : index
    %61 = memref.load %arg3[%c70] : memref<90xf32, #tpu.memory_space<smem>>
    %62 = vector.extract_strided_slice %4 {offsets = [2, 1], sizes = [18, 18], strides = [1, 1]} : vector<20x20xf32> to vector<18x18xf32>
    %63 = vector.broadcast %61 : f32 to vector<18x18xf32>
    %64 = arith.mulf %63, %62 : vector<18x18xf32>
    %65 = arith.addf %60, %64 : vector<18x18xf32>
    %c80 = arith.constant 80 : index
    %66 = memref.load %arg3[%c80] : memref<90xf32, #tpu.memory_space<smem>>
    %67 = vector.extract_strided_slice %4 {offsets = [2, 2], sizes = [18, 18], strides = [1, 1]} : vector<20x20xf32> to vector<18x18xf32>
    %68 = vector.broadcast %66 : f32 to vector<18x18xf32>
    %69 = arith.mulf %68, %67 : vector<18x18xf32>
    %70 = arith.addf %65, %69 : vector<18x18xf32>
    %c0_7 = arith.constant 0 : index
    %71 = memref.load %arg4[%c0_7] : memref<10xf32, #tpu.memory_space<smem>>
    %72 = vector.broadcast %71 : f32 to vector<18x18xf32>
    %73 = arith.addf %70, %72 : vector<18x18xf32>
    %cst_8 = arith.constant 0.000000e+00 : f32
    %74 = vector.broadcast %cst_8 : f32 to vector<18x18xf32>
    %75 = arith.maximumf %73, %74 : vector<18x18xf32>
    %cst_9 = arith.constant 0.000000e+00 : f32
    %76 = vector.broadcast %cst_9 : f32 to vector<18x18xf32>
    %77 = arith.select %23, %75, %76 : vector<18x18xi1>, vector<18x18xf32>
    %c0_10 = arith.constant 0 : index
    %78 = memref.load %arg5[%c0_10] : memref<90xf32, #tpu.memory_space<smem>>
    %79 = vector.extract_strided_slice %77 {offsets = [0, 0], sizes = [16, 16], strides = [1, 1]} : vector<18x18xf32> to vector<16x16xf32>
    %80 = vector.broadcast %78 : f32 to vector<16x16xf32>
    %81 = arith.mulf %80, %79 : vector<16x16xf32>
    %82 = arith.addf %24, %81 : vector<16x16xf32>
    %c10_11 = arith.constant 10 : index
    %83 = memref.load %arg5[%c10_11] : memref<90xf32, #tpu.memory_space<smem>>
    %84 = vector.extract_strided_slice %77 {offsets = [0, 1], sizes = [16, 16], strides = [1, 1]} : vector<18x18xf32> to vector<16x16xf32>
    %85 = vector.broadcast %83 : f32 to vector<16x16xf32>
    %86 = arith.mulf %85, %84 : vector<16x16xf32>
    %87 = arith.addf %82, %86 : vector<16x16xf32>
    %c20_12 = arith.constant 20 : index
    %88 = memref.load %arg5[%c20_12] : memref<90xf32, #tpu.memory_space<smem>>
    %89 = vector.extract_strided_slice %77 {offsets = [0, 2], sizes = [16, 16], strides = [1, 1]} : vector<18x18xf32> to vector<16x16xf32>
    %90 = vector.broadcast %88 : f32 to vector<16x16xf32>
    %91 = arith.mulf %90, %89 : vector<16x16xf32>
    %92 = arith.addf %87, %91 : vector<16x16xf32>
    %c30_13 = arith.constant 30 : index
    %93 = memref.load %arg5[%c30_13] : memref<90xf32, #tpu.memory_space<smem>>
    %94 = vector.extract_strided_slice %77 {offsets = [1, 0], sizes = [16, 16], strides = [1, 1]} : vector<18x18xf32> to vector<16x16xf32>
    %95 = vector.broadcast %93 : f32 to vector<16x16xf32>
    %96 = arith.mulf %95, %94 : vector<16x16xf32>
    %97 = arith.addf %92, %96 : vector<16x16xf32>
    %c40_14 = arith.constant 40 : index
    %98 = memref.load %arg5[%c40_14] : memref<90xf32, #tpu.memory_space<smem>>
    %99 = vector.extract_strided_slice %77 {offsets = [1, 1], sizes = [16, 16], strides = [1, 1]} : vector<18x18xf32> to vector<16x16xf32>
    %100 = vector.broadcast %98 : f32 to vector<16x16xf32>
    %101 = arith.mulf %100, %99 : vector<16x16xf32>
    %102 = arith.addf %97, %101 : vector<16x16xf32>
    %c50_15 = arith.constant 50 : index
    %103 = memref.load %arg5[%c50_15] : memref<90xf32, #tpu.memory_space<smem>>
    %104 = vector.extract_strided_slice %77 {offsets = [1, 2], sizes = [16, 16], strides = [1, 1]} : vector<18x18xf32> to vector<16x16xf32>
    %105 = vector.broadcast %103 : f32 to vector<16x16xf32>
    %106 = arith.mulf %105, %104 : vector<16x16xf32>
    %107 = arith.addf %102, %106 : vector<16x16xf32>
    %c60_16 = arith.constant 60 : index
    %108 = memref.load %arg5[%c60_16] : memref<90xf32, #tpu.memory_space<smem>>
    %109 = vector.extract_strided_slice %77 {offsets = [2, 0], sizes = [16, 16], strides = [1, 1]} : vector<18x18xf32> to vector<16x16xf32>
    %110 = vector.broadcast %108 : f32 to vector<16x16xf32>
    %111 = arith.mulf %110, %109 : vector<16x16xf32>
    %112 = arith.addf %107, %111 : vector<16x16xf32>
    %c70_17 = arith.constant 70 : index
    %113 = memref.load %arg5[%c70_17] : memref<90xf32, #tpu.memory_space<smem>>
    %114 = vector.extract_strided_slice %77 {offsets = [2, 1], sizes = [16, 16], strides = [1, 1]} : vector<18x18xf32> to vector<16x16xf32>
    %115 = vector.broadcast %113 : f32 to vector<16x16xf32>
    %116 = arith.mulf %115, %114 : vector<16x16xf32>
    %117 = arith.addf %112, %116 : vector<16x16xf32>
    %c80_18 = arith.constant 80 : index
    %118 = memref.load %arg5[%c80_18] : memref<90xf32, #tpu.memory_space<smem>>
    %119 = vector.extract_strided_slice %77 {offsets = [2, 2], sizes = [16, 16], strides = [1, 1]} : vector<18x18xf32> to vector<16x16xf32>
    %120 = vector.broadcast %118 : f32 to vector<16x16xf32>
    %121 = arith.mulf %120, %119 : vector<16x16xf32>
    %122 = arith.addf %117, %121 : vector<16x16xf32>
    %cst_19 = arith.constant 0.000000e+00 : f32
    %123 = vector.broadcast %cst_19 : f32 to vector<18x18xf32>
    %c1 = arith.constant 1 : index
    %124 = memref.load %arg3[%c1] : memref<90xf32, #tpu.memory_space<smem>>
    %125 = vector.extract_strided_slice %4 {offsets = [0, 0], sizes = [18, 18], strides = [1, 1]} : vector<20x20xf32> to vector<18x18xf32>
    %126 = vector.broadcast %124 : f32 to vector<18x18xf32>
    %127 = arith.mulf %126, %125 : vector<18x18xf32>
    %128 = arith.addf %123, %127 : vector<18x18xf32>
    %c11 = arith.constant 11 : index
    %129 = memref.load %arg3[%c11] : memref<90xf32, #tpu.memory_space<smem>>
    %130 = vector.extract_strided_slice %4 {offsets = [0, 1], sizes = [18, 18], strides = [1, 1]} : vector<20x20xf32> to vector<18x18xf32>
    %131 = vector.broadcast %129 : f32 to vector<18x18xf32>
    %132 = arith.mulf %131, %130 : vector<18x18xf32>
    %133 = arith.addf %128, %132 : vector<18x18xf32>
    %c21 = arith.constant 21 : index
    %134 = memref.load %arg3[%c21] : memref<90xf32, #tpu.memory_space<smem>>
    %135 = vector.extract_strided_slice %4 {offsets = [0, 2], sizes = [18, 18], strides = [1, 1]} : vector<20x20xf32> to vector<18x18xf32>
    %136 = vector.broadcast %134 : f32 to vector<18x18xf32>
    %137 = arith.mulf %136, %135 : vector<18x18xf32>
    %138 = arith.addf %133, %137 : vector<18x18xf32>
    %c31 = arith.constant 31 : index
    %139 = memref.load %arg3[%c31] : memref<90xf32, #tpu.memory_space<smem>>
    %140 = vector.extract_strided_slice %4 {offsets = [1, 0], sizes = [18, 18], strides = [1, 1]} : vector<20x20xf32> to vector<18x18xf32>
    %141 = vector.broadcast %139 : f32 to vector<18x18xf32>
    %142 = arith.mulf %141, %140 : vector<18x18xf32>
    %143 = arith.addf %138, %142 : vector<18x18xf32>
    %c41 = arith.constant 41 : index
    %144 = memref.load %arg3[%c41] : memref<90xf32, #tpu.memory_space<smem>>
    %145 = vector.extract_strided_slice %4 {offsets = [1, 1], sizes = [18, 18], strides = [1, 1]} : vector<20x20xf32> to vector<18x18xf32>
    %146 = vector.broadcast %144 : f32 to vector<18x18xf32>
    %147 = arith.mulf %146, %145 : vector<18x18xf32>
    %148 = arith.addf %143, %147 : vector<18x18xf32>
    %c51 = arith.constant 51 : index
    %149 = memref.load %arg3[%c51] : memref<90xf32, #tpu.memory_space<smem>>
    %150 = vector.extract_strided_slice %4 {offsets = [1, 2], sizes = [18, 18], strides = [1, 1]} : vector<20x20xf32> to vector<18x18xf32>
    %151 = vector.broadcast %149 : f32 to vector<18x18xf32>
    %152 = arith.mulf %151, %150 : vector<18x18xf32>
    %153 = arith.addf %148, %152 : vector<18x18xf32>
    %c61 = arith.constant 61 : index
    %154 = memref.load %arg3[%c61] : memref<90xf32, #tpu.memory_space<smem>>
    %155 = vector.extract_strided_slice %4 {offsets = [2, 0], sizes = [18, 18], strides = [1, 1]} : vector<20x20xf32> to vector<18x18xf32>
    %156 = vector.broadcast %154 : f32 to vector<18x18xf32>
    %157 = arith.mulf %156, %155 : vector<18x18xf32>
    %158 = arith.addf %153, %157 : vector<18x18xf32>
    %c71 = arith.constant 71 : index
    %159 = memref.load %arg3[%c71] : memref<90xf32, #tpu.memory_space<smem>>
    %160 = vector.extract_strided_slice %4 {offsets = [2, 1], sizes = [18, 18], strides = [1, 1]} : vector<20x20xf32> to vector<18x18xf32>
    %161 = vector.broadcast %159 : f32 to vector<18x18xf32>
    %162 = arith.mulf %161, %160 : vector<18x18xf32>
    %163 = arith.addf %158, %162 : vector<18x18xf32>
    %c81 = arith.constant 81 : index
    %164 = memref.load %arg3[%c81] : memref<90xf32, #tpu.memory_space<smem>>
    %165 = vector.extract_strided_slice %4 {offsets = [2, 2], sizes = [18, 18], strides = [1, 1]} : vector<20x20xf32> to vector<18x18xf32>
    %166 = vector.broadcast %164 : f32 to vector<18x18xf32>
    %167 = arith.mulf %166, %165 : vector<18x18xf32>
    %168 = arith.addf %163, %167 : vector<18x18xf32>
    %c1_20 = arith.constant 1 : index
    %169 = memref.load %arg4[%c1_20] : memref<10xf32, #tpu.memory_space<smem>>
    %170 = vector.broadcast %169 : f32 to vector<18x18xf32>
    %171 = arith.addf %168, %170 : vector<18x18xf32>
    %cst_21 = arith.constant 0.000000e+00 : f32
    %172 = vector.broadcast %cst_21 : f32 to vector<18x18xf32>
    %173 = arith.maximumf %171, %172 : vector<18x18xf32>
    %cst_22 = arith.constant 0.000000e+00 : f32
    %174 = vector.broadcast %cst_22 : f32 to vector<18x18xf32>
    %175 = arith.select %23, %173, %174 : vector<18x18xi1>, vector<18x18xf32>
    %c1_23 = arith.constant 1 : index
    %176 = memref.load %arg5[%c1_23] : memref<90xf32, #tpu.memory_space<smem>>
    %177 = vector.extract_strided_slice %175 {offsets = [0, 0], sizes = [16, 16], strides = [1, 1]} : vector<18x18xf32> to vector<16x16xf32>
    %178 = vector.broadcast %176 : f32 to vector<16x16xf32>
    %179 = arith.mulf %178, %177 : vector<16x16xf32>
    %180 = arith.addf %122, %179 : vector<16x16xf32>
    %c11_24 = arith.constant 11 : index
    %181 = memref.load %arg5[%c11_24] : memref<90xf32, #tpu.memory_space<smem>>
    %182 = vector.extract_strided_slice %175 {offsets = [0, 1], sizes = [16, 16], strides = [1, 1]} : vector<18x18xf32> to vector<16x16xf32>
    %183 = vector.broadcast %181 : f32 to vector<16x16xf32>
    %184 = arith.mulf %183, %182 : vector<16x16xf32>
    %185 = arith.addf %180, %184 : vector<16x16xf32>
    %c21_25 = arith.constant 21 : index
    %186 = memref.load %arg5[%c21_25] : memref<90xf32, #tpu.memory_space<smem>>
    %187 = vector.extract_strided_slice %175 {offsets = [0, 2], sizes = [16, 16], strides = [1, 1]} : vector<18x18xf32> to vector<16x16xf32>
    %188 = vector.broadcast %186 : f32 to vector<16x16xf32>
    %189 = arith.mulf %188, %187 : vector<16x16xf32>
    %190 = arith.addf %185, %189 : vector<16x16xf32>
    %c31_26 = arith.constant 31 : index
    %191 = memref.load %arg5[%c31_26] : memref<90xf32, #tpu.memory_space<smem>>
    %192 = vector.extract_strided_slice %175 {offsets = [1, 0], sizes = [16, 16], strides = [1, 1]} : vector<18x18xf32> to vector<16x16xf32>
    %193 = vector.broadcast %191 : f32 to vector<16x16xf32>
    %194 = arith.mulf %193, %192 : vector<16x16xf32>
    %195 = arith.addf %190, %194 : vector<16x16xf32>
    %c41_27 = arith.constant 41 : index
    %196 = memref.load %arg5[%c41_27] : memref<90xf32, #tpu.memory_space<smem>>
    %197 = vector.extract_strided_slice %175 {offsets = [1, 1], sizes = [16, 16], strides = [1, 1]} : vector<18x18xf32> to vector<16x16xf32>
    %198 = vector.broadcast %196 : f32 to vector<16x16xf32>
    %199 = arith.mulf %198, %197 : vector<16x16xf32>
    %200 = arith.addf %195, %199 : vector<16x16xf32>
    %c51_28 = arith.constant 51 : index
    %201 = memref.load %arg5[%c51_28] : memref<90xf32, #tpu.memory_space<smem>>
    %202 = vector.extract_strided_slice %175 {offsets = [1, 2], sizes = [16, 16], strides = [1, 1]} : vector<18x18xf32> to vector<16x16xf32>
    %203 = vector.broadcast %201 : f32 to vector<16x16xf32>
    %204 = arith.mulf %203, %202 : vector<16x16xf32>
    %205 = arith.addf %200, %204 : vector<16x16xf32>
    %c61_29 = arith.constant 61 : index
    %206 = memref.load %arg5[%c61_29] : memref<90xf32, #tpu.memory_space<smem>>
    %207 = vector.extract_strided_slice %175 {offsets = [2, 0], sizes = [16, 16], strides = [1, 1]} : vector<18x18xf32> to vector<16x16xf32>
    %208 = vector.broadcast %206 : f32 to vector<16x16xf32>
    %209 = arith.mulf %208, %207 : vector<16x16xf32>
    %210 = arith.addf %205, %209 : vector<16x16xf32>
    %c71_30 = arith.constant 71 : index
    %211 = memref.load %arg5[%c71_30] : memref<90xf32, #tpu.memory_space<smem>>
    %212 = vector.extract_strided_slice %175 {offsets = [2, 1], sizes = [16, 16], strides = [1, 1]} : vector<18x18xf32> to vector<16x16xf32>
    %213 = vector.broadcast %211 : f32 to vector<16x16xf32>
    %214 = arith.mulf %213, %212 : vector<16x16xf32>
    %215 = arith.addf %210, %214 : vector<16x16xf32>
    %c81_31 = arith.constant 81 : index
    %216 = memref.load %arg5[%c81_31] : memref<90xf32, #tpu.memory_space<smem>>
    %217 = vector.extract_strided_slice %175 {offsets = [2, 2], sizes = [16, 16], strides = [1, 1]} : vector<18x18xf32> to vector<16x16xf32>
    %218 = vector.broadcast %216 : f32 to vector<16x16xf32>
    %219 = arith.mulf %218, %217 : vector<16x16xf32>
    %220 = arith.addf %215, %219 : vector<16x16xf32>
    %cst_32 = arith.constant 0.000000e+00 : f32
    %221 = vector.broadcast %cst_32 : f32 to vector<18x18xf32>
    %c2 = arith.constant 2 : index
    %222 = memref.load %arg3[%c2] : memref<90xf32, #tpu.memory_space<smem>>
    %223 = vector.extract_strided_slice %4 {offsets = [0, 0], sizes = [18, 18], strides = [1, 1]} : vector<20x20xf32> to vector<18x18xf32>
    %224 = vector.broadcast %222 : f32 to vector<18x18xf32>
    %225 = arith.mulf %224, %223 : vector<18x18xf32>
    %226 = arith.addf %221, %225 : vector<18x18xf32>
    %c12 = arith.constant 12 : index
    %227 = memref.load %arg3[%c12] : memref<90xf32, #tpu.memory_space<smem>>
    %228 = vector.extract_strided_slice %4 {offsets = [0, 1], sizes = [18, 18], strides = [1, 1]} : vector<20x20xf32> to vector<18x18xf32>
    %229 = vector.broadcast %227 : f32 to vector<18x18xf32>
    %230 = arith.mulf %229, %228 : vector<18x18xf32>
    %231 = arith.addf %226, %230 : vector<18x18xf32>
    %c22 = arith.constant 22 : index
    %232 = memref.load %arg3[%c22] : memref<90xf32, #tpu.memory_space<smem>>
    %233 = vector.extract_strided_slice %4 {offsets = [0, 2], sizes = [18, 18], strides = [1, 1]} : vector<20x20xf32> to vector<18x18xf32>
    %234 = vector.broadcast %232 : f32 to vector<18x18xf32>
    %235 = arith.mulf %234, %233 : vector<18x18xf32>
    %236 = arith.addf %231, %235 : vector<18x18xf32>
    %c32 = arith.constant 32 : index
    %237 = memref.load %arg3[%c32] : memref<90xf32, #tpu.memory_space<smem>>
    %238 = vector.extract_strided_slice %4 {offsets = [1, 0], sizes = [18, 18], strides = [1, 1]} : vector<20x20xf32> to vector<18x18xf32>
    %239 = vector.broadcast %237 : f32 to vector<18x18xf32>
    %240 = arith.mulf %239, %238 : vector<18x18xf32>
    %241 = arith.addf %236, %240 : vector<18x18xf32>
    %c42 = arith.constant 42 : index
    %242 = memref.load %arg3[%c42] : memref<90xf32, #tpu.memory_space<smem>>
    %243 = vector.extract_strided_slice %4 {offsets = [1, 1], sizes = [18, 18], strides = [1, 1]} : vector<20x20xf32> to vector<18x18xf32>
    %244 = vector.broadcast %242 : f32 to vector<18x18xf32>
    %245 = arith.mulf %244, %243 : vector<18x18xf32>
    %246 = arith.addf %241, %245 : vector<18x18xf32>
    %c52 = arith.constant 52 : index
    %247 = memref.load %arg3[%c52] : memref<90xf32, #tpu.memory_space<smem>>
    %248 = vector.extract_strided_slice %4 {offsets = [1, 2], sizes = [18, 18], strides = [1, 1]} : vector<20x20xf32> to vector<18x18xf32>
    %249 = vector.broadcast %247 : f32 to vector<18x18xf32>
    %250 = arith.mulf %249, %248 : vector<18x18xf32>
    %251 = arith.addf %246, %250 : vector<18x18xf32>
    %c62 = arith.constant 62 : index
    %252 = memref.load %arg3[%c62] : memref<90xf32, #tpu.memory_space<smem>>
    %253 = vector.extract_strided_slice %4 {offsets = [2, 0], sizes = [18, 18], strides = [1, 1]} : vector<20x20xf32> to vector<18x18xf32>
    %254 = vector.broadcast %252 : f32 to vector<18x18xf32>
    %255 = arith.mulf %254, %253 : vector<18x18xf32>
    %256 = arith.addf %251, %255 : vector<18x18xf32>
    %c72 = arith.constant 72 : index
    %257 = memref.load %arg3[%c72] : memref<90xf32, #tpu.memory_space<smem>>
    %258 = vector.extract_strided_slice %4 {offsets = [2, 1], sizes = [18, 18], strides = [1, 1]} : vector<20x20xf32> to vector<18x18xf32>
    %259 = vector.broadcast %257 : f32 to vector<18x18xf32>
    %260 = arith.mulf %259, %258 : vector<18x18xf32>
    %261 = arith.addf %256, %260 : vector<18x18xf32>
    %c82 = arith.constant 82 : index
    %262 = memref.load %arg3[%c82] : memref<90xf32, #tpu.memory_space<smem>>
    %263 = vector.extract_strided_slice %4 {offsets = [2, 2], sizes = [18, 18], strides = [1, 1]} : vector<20x20xf32> to vector<18x18xf32>
    %264 = vector.broadcast %262 : f32 to vector<18x18xf32>
    %265 = arith.mulf %264, %263 : vector<18x18xf32>
    %266 = arith.addf %261, %265 : vector<18x18xf32>
    %c2_33 = arith.constant 2 : index
    %267 = memref.load %arg4[%c2_33] : memref<10xf32, #tpu.memory_space<smem>>
    %268 = vector.broadcast %267 : f32 to vector<18x18xf32>
    %269 = arith.addf %266, %268 : vector<18x18xf32>
    %cst_34 = arith.constant 0.000000e+00 : f32
    %270 = vector.broadcast %cst_34 : f32 to vector<18x18xf32>
    %271 = arith.maximumf %269, %270 : vector<18x18xf32>
    %cst_35 = arith.constant 0.000000e+00 : f32
    %272 = vector.broadcast %cst_35 : f32 to vector<18x18xf32>
    %273 = arith.select %23, %271, %272 : vector<18x18xi1>, vector<18x18xf32>
    %c2_36 = arith.constant 2 : index
    %274 = memref.load %arg5[%c2_36] : memref<90xf32, #tpu.memory_space<smem>>
    %275 = vector.extract_strided_slice %273 {offsets = [0, 0], sizes = [16, 16], strides = [1, 1]} : vector<18x18xf32> to vector<16x16xf32>
    %276 = vector.broadcast %274 : f32 to vector<16x16xf32>
    %277 = arith.mulf %276, %275 : vector<16x16xf32>
    %278 = arith.addf %220, %277 : vector<16x16xf32>
    %c12_37 = arith.constant 12 : index
    %279 = memref.load %arg5[%c12_37] : memref<90xf32, #tpu.memory_space<smem>>
    %280 = vector.extract_strided_slice %273 {offsets = [0, 1], sizes = [16, 16], strides = [1, 1]} : vector<18x18xf32> to vector<16x16xf32>
    %281 = vector.broadcast %279 : f32 to vector<16x16xf32>
    %282 = arith.mulf %281, %280 : vector<16x16xf32>
    %283 = arith.addf %278, %282 : vector<16x16xf32>
    %c22_38 = arith.constant 22 : index
    %284 = memref.load %arg5[%c22_38] : memref<90xf32, #tpu.memory_space<smem>>
    %285 = vector.extract_strided_slice %273 {offsets = [0, 2], sizes = [16, 16], strides = [1, 1]} : vector<18x18xf32> to vector<16x16xf32>
    %286 = vector.broadcast %284 : f32 to vector<16x16xf32>
    %287 = arith.mulf %286, %285 : vector<16x16xf32>
    %288 = arith.addf %283, %287 : vector<16x16xf32>
    %c32_39 = arith.constant 32 : index
    %289 = memref.load %arg5[%c32_39] : memref<90xf32, #tpu.memory_space<smem>>
    %290 = vector.extract_strided_slice %273 {offsets = [1, 0], sizes = [16, 16], strides = [1, 1]} : vector<18x18xf32> to vector<16x16xf32>
    %291 = vector.broadcast %289 : f32 to vector<16x16xf32>
    %292 = arith.mulf %291, %290 : vector<16x16xf32>
    %293 = arith.addf %288, %292 : vector<16x16xf32>
    %c42_40 = arith.constant 42 : index
    %294 = memref.load %arg5[%c42_40] : memref<90xf32, #tpu.memory_space<smem>>
    %295 = vector.extract_strided_slice %273 {offsets = [1, 1], sizes = [16, 16], strides = [1, 1]} : vector<18x18xf32> to vector<16x16xf32>
    %296 = vector.broadcast %294 : f32 to vector<16x16xf32>
    %297 = arith.mulf %296, %295 : vector<16x16xf32>
    %298 = arith.addf %293, %297 : vector<16x16xf32>
    %c52_41 = arith.constant 52 : index
    %299 = memref.load %arg5[%c52_41] : memref<90xf32, #tpu.memory_space<smem>>
    %300 = vector.extract_strided_slice %273 {offsets = [1, 2], sizes = [16, 16], strides = [1, 1]} : vector<18x18xf32> to vector<16x16xf32>
    %301 = vector.broadcast %299 : f32 to vector<16x16xf32>
    %302 = arith.mulf %301, %300 : vector<16x16xf32>
    %303 = arith.addf %298, %302 : vector<16x16xf32>
    %c62_42 = arith.constant 62 : index
    %304 = memref.load %arg5[%c62_42] : memref<90xf32, #tpu.memory_space<smem>>
    %305 = vector.extract_strided_slice %273 {offsets = [2, 0], sizes = [16, 16], strides = [1, 1]} : vector<18x18xf32> to vector<16x16xf32>
    %306 = vector.broadcast %304 : f32 to vector<16x16xf32>
    %307 = arith.mulf %306, %305 : vector<16x16xf32>
    %308 = arith.addf %303, %307 : vector<16x16xf32>
    %c72_43 = arith.constant 72 : index
    %309 = memref.load %arg5[%c72_43] : memref<90xf32, #tpu.memory_space<smem>>
    %310 = vector.extract_strided_slice %273 {offsets = [2, 1], sizes = [16, 16], strides = [1, 1]} : vector<18x18xf32> to vector<16x16xf32>
    %311 = vector.broadcast %309 : f32 to vector<16x16xf32>
    %312 = arith.mulf %311, %310 : vector<16x16xf32>
    %313 = arith.addf %308, %312 : vector<16x16xf32>
    %c82_44 = arith.constant 82 : index
    %314 = memref.load %arg5[%c82_44] : memref<90xf32, #tpu.memory_space<smem>>
    %315 = vector.extract_strided_slice %273 {offsets = [2, 2], sizes = [16, 16], strides = [1, 1]} : vector<18x18xf32> to vector<16x16xf32>
    %316 = vector.broadcast %314 : f32 to vector<16x16xf32>
    %317 = arith.mulf %316, %315 : vector<16x16xf32>
    %318 = arith.addf %313, %317 : vector<16x16xf32>
    %cst_45 = arith.constant 0.000000e+00 : f32
    %319 = vector.broadcast %cst_45 : f32 to vector<18x18xf32>
    %c3 = arith.constant 3 : index
    %320 = memref.load %arg3[%c3] : memref<90xf32, #tpu.memory_space<smem>>
    %321 = vector.extract_strided_slice %4 {offsets = [0, 0], sizes = [18, 18], strides = [1, 1]} : vector<20x20xf32> to vector<18x18xf32>
    %322 = vector.broadcast %320 : f32 to vector<18x18xf32>
    %323 = arith.mulf %322, %321 : vector<18x18xf32>
    %324 = arith.addf %319, %323 : vector<18x18xf32>
    %c13 = arith.constant 13 : index
    %325 = memref.load %arg3[%c13] : memref<90xf32, #tpu.memory_space<smem>>
    %326 = vector.extract_strided_slice %4 {offsets = [0, 1], sizes = [18, 18], strides = [1, 1]} : vector<20x20xf32> to vector<18x18xf32>
    %327 = vector.broadcast %325 : f32 to vector<18x18xf32>
    %328 = arith.mulf %327, %326 : vector<18x18xf32>
    %329 = arith.addf %324, %328 : vector<18x18xf32>
    %c23 = arith.constant 23 : index
    %330 = memref.load %arg3[%c23] : memref<90xf32, #tpu.memory_space<smem>>
    %331 = vector.extract_strided_slice %4 {offsets = [0, 2], sizes = [18, 18], strides = [1, 1]} : vector<20x20xf32> to vector<18x18xf32>
    %332 = vector.broadcast %330 : f32 to vector<18x18xf32>
    %333 = arith.mulf %332, %331 : vector<18x18xf32>
    %334 = arith.addf %329, %333 : vector<18x18xf32>
    %c33 = arith.constant 33 : index
    %335 = memref.load %arg3[%c33] : memref<90xf32, #tpu.memory_space<smem>>
    %336 = vector.extract_strided_slice %4 {offsets = [1, 0], sizes = [18, 18], strides = [1, 1]} : vector<20x20xf32> to vector<18x18xf32>
    %337 = vector.broadcast %335 : f32 to vector<18x18xf32>
    %338 = arith.mulf %337, %336 : vector<18x18xf32>
    %339 = arith.addf %334, %338 : vector<18x18xf32>
    %c43 = arith.constant 43 : index
    %340 = memref.load %arg3[%c43] : memref<90xf32, #tpu.memory_space<smem>>
    %341 = vector.extract_strided_slice %4 {offsets = [1, 1], sizes = [18, 18], strides = [1, 1]} : vector<20x20xf32> to vector<18x18xf32>
    %342 = vector.broadcast %340 : f32 to vector<18x18xf32>
    %343 = arith.mulf %342, %341 : vector<18x18xf32>
    %344 = arith.addf %339, %343 : vector<18x18xf32>
    %c53 = arith.constant 53 : index
    %345 = memref.load %arg3[%c53] : memref<90xf32, #tpu.memory_space<smem>>
    %346 = vector.extract_strided_slice %4 {offsets = [1, 2], sizes = [18, 18], strides = [1, 1]} : vector<20x20xf32> to vector<18x18xf32>
    %347 = vector.broadcast %345 : f32 to vector<18x18xf32>
    %348 = arith.mulf %347, %346 : vector<18x18xf32>
    %349 = arith.addf %344, %348 : vector<18x18xf32>
    %c63 = arith.constant 63 : index
    %350 = memref.load %arg3[%c63] : memref<90xf32, #tpu.memory_space<smem>>
    %351 = vector.extract_strided_slice %4 {offsets = [2, 0], sizes = [18, 18], strides = [1, 1]} : vector<20x20xf32> to vector<18x18xf32>
    %352 = vector.broadcast %350 : f32 to vector<18x18xf32>
    %353 = arith.mulf %352, %351 : vector<18x18xf32>
    %354 = arith.addf %349, %353 : vector<18x18xf32>
    %c73 = arith.constant 73 : index
    %355 = memref.load %arg3[%c73] : memref<90xf32, #tpu.memory_space<smem>>
    %356 = vector.extract_strided_slice %4 {offsets = [2, 1], sizes = [18, 18], strides = [1, 1]} : vector<20x20xf32> to vector<18x18xf32>
    %357 = vector.broadcast %355 : f32 to vector<18x18xf32>
    %358 = arith.mulf %357, %356 : vector<18x18xf32>
    %359 = arith.addf %354, %358 : vector<18x18xf32>
    %c83 = arith.constant 83 : index
    %360 = memref.load %arg3[%c83] : memref<90xf32, #tpu.memory_space<smem>>
    %361 = vector.extract_strided_slice %4 {offsets = [2, 2], sizes = [18, 18], strides = [1, 1]} : vector<20x20xf32> to vector<18x18xf32>
    %362 = vector.broadcast %360 : f32 to vector<18x18xf32>
    %363 = arith.mulf %362, %361 : vector<18x18xf32>
    %364 = arith.addf %359, %363 : vector<18x18xf32>
    %c3_46 = arith.constant 3 : index
    %365 = memref.load %arg4[%c3_46] : memref<10xf32, #tpu.memory_space<smem>>
    %366 = vector.broadcast %365 : f32 to vector<18x18xf32>
    %367 = arith.addf %364, %366 : vector<18x18xf32>
    %cst_47 = arith.constant 0.000000e+00 : f32
    %368 = vector.broadcast %cst_47 : f32 to vector<18x18xf32>
    %369 = arith.maximumf %367, %368 : vector<18x18xf32>
    %cst_48 = arith.constant 0.000000e+00 : f32
    %370 = vector.broadcast %cst_48 : f32 to vector<18x18xf32>
    %371 = arith.select %23, %369, %370 : vector<18x18xi1>, vector<18x18xf32>
    %c3_49 = arith.constant 3 : index
    %372 = memref.load %arg5[%c3_49] : memref<90xf32, #tpu.memory_space<smem>>
    %373 = vector.extract_strided_slice %371 {offsets = [0, 0], sizes = [16, 16], strides = [1, 1]} : vector<18x18xf32> to vector<16x16xf32>
    %374 = vector.broadcast %372 : f32 to vector<16x16xf32>
    %375 = arith.mulf %374, %373 : vector<16x16xf32>
    %376 = arith.addf %318, %375 : vector<16x16xf32>
    %c13_50 = arith.constant 13 : index
    %377 = memref.load %arg5[%c13_50] : memref<90xf32, #tpu.memory_space<smem>>
    %378 = vector.extract_strided_slice %371 {offsets = [0, 1], sizes = [16, 16], strides = [1, 1]} : vector<18x18xf32> to vector<16x16xf32>
    %379 = vector.broadcast %377 : f32 to vector<16x16xf32>
    %380 = arith.mulf %379, %378 : vector<16x16xf32>
    %381 = arith.addf %376, %380 : vector<16x16xf32>
    %c23_51 = arith.constant 23 : index
    %382 = memref.load %arg5[%c23_51] : memref<90xf32, #tpu.memory_space<smem>>
    %383 = vector.extract_strided_slice %371 {offsets = [0, 2], sizes = [16, 16], strides = [1, 1]} : vector<18x18xf32> to vector<16x16xf32>
    %384 = vector.broadcast %382 : f32 to vector<16x16xf32>
    %385 = arith.mulf %384, %383 : vector<16x16xf32>
    %386 = arith.addf %381, %385 : vector<16x16xf32>
    %c33_52 = arith.constant 33 : index
    %387 = memref.load %arg5[%c33_52] : memref<90xf32, #tpu.memory_space<smem>>
    %388 = vector.extract_strided_slice %371 {offsets = [1, 0], sizes = [16, 16], strides = [1, 1]} : vector<18x18xf32> to vector<16x16xf32>
    %389 = vector.broadcast %387 : f32 to vector<16x16xf32>
    %390 = arith.mulf %389, %388 : vector<16x16xf32>
    %391 = arith.addf %386, %390 : vector<16x16xf32>
    %c43_53 = arith.constant 43 : index
    %392 = memref.load %arg5[%c43_53] : memref<90xf32, #tpu.memory_space<smem>>
    %393 = vector.extract_strided_slice %371 {offsets = [1, 1], sizes = [16, 16], strides = [1, 1]} : vector<18x18xf32> to vector<16x16xf32>
    %394 = vector.broadcast %392 : f32 to vector<16x16xf32>
    %395 = arith.mulf %394, %393 : vector<16x16xf32>
    %396 = arith.addf %391, %395 : vector<16x16xf32>
    %c53_54 = arith.constant 53 : index
    %397 = memref.load %arg5[%c53_54] : memref<90xf32, #tpu.memory_space<smem>>
    %398 = vector.extract_strided_slice %371 {offsets = [1, 2], sizes = [16, 16], strides = [1, 1]} : vector<18x18xf32> to vector<16x16xf32>
    %399 = vector.broadcast %397 : f32 to vector<16x16xf32>
    %400 = arith.mulf %399, %398 : vector<16x16xf32>
    %401 = arith.addf %396, %400 : vector<16x16xf32>
    %c63_55 = arith.constant 63 : index
    %402 = memref.load %arg5[%c63_55] : memref<90xf32, #tpu.memory_space<smem>>
    %403 = vector.extract_strided_slice %371 {offsets = [2, 0], sizes = [16, 16], strides = [1, 1]} : vector<18x18xf32> to vector<16x16xf32>
    %404 = vector.broadcast %402 : f32 to vector<16x16xf32>
    %405 = arith.mulf %404, %403 : vector<16x16xf32>
    %406 = arith.addf %401, %405 : vector<16x16xf32>
    %c73_56 = arith.constant 73 : index
    %407 = memref.load %arg5[%c73_56] : memref<90xf32, #tpu.memory_space<smem>>
    %408 = vector.extract_strided_slice %371 {offsets = [2, 1], sizes = [16, 16], strides = [1, 1]} : vector<18x18xf32> to vector<16x16xf32>
    %409 = vector.broadcast %407 : f32 to vector<16x16xf32>
    %410 = arith.mulf %409, %408 : vector<16x16xf32>
    %411 = arith.addf %406, %410 : vector<16x16xf32>
    %c83_57 = arith.constant 83 : index
    %412 = memref.load %arg5[%c83_57] : memref<90xf32, #tpu.memory_space<smem>>
    %413 = vector.extract_strided_slice %371 {offsets = [2, 2], sizes = [16, 16], strides = [1, 1]} : vector<18x18xf32> to vector<16x16xf32>
    %414 = vector.broadcast %412 : f32 to vector<16x16xf32>
    %415 = arith.mulf %414, %413 : vector<16x16xf32>
    %416 = arith.addf %411, %415 : vector<16x16xf32>
    %cst_58 = arith.constant 0.000000e+00 : f32
    %417 = vector.broadcast %cst_58 : f32 to vector<18x18xf32>
    %c4 = arith.constant 4 : index
    %418 = memref.load %arg3[%c4] : memref<90xf32, #tpu.memory_space<smem>>
    %419 = vector.extract_strided_slice %4 {offsets = [0, 0], sizes = [18, 18], strides = [1, 1]} : vector<20x20xf32> to vector<18x18xf32>
    %420 = vector.broadcast %418 : f32 to vector<18x18xf32>
    %421 = arith.mulf %420, %419 : vector<18x18xf32>
    %422 = arith.addf %417, %421 : vector<18x18xf32>
    %c14 = arith.constant 14 : index
    %423 = memref.load %arg3[%c14] : memref<90xf32, #tpu.memory_space<smem>>
    %424 = vector.extract_strided_slice %4 {offsets = [0, 1], sizes = [18, 18], strides = [1, 1]} : vector<20x20xf32> to vector<18x18xf32>
    %425 = vector.broadcast %423 : f32 to vector<18x18xf32>
    %426 = arith.mulf %425, %424 : vector<18x18xf32>
    %427 = arith.addf %422, %426 : vector<18x18xf32>
    %c24 = arith.constant 24 : index
    %428 = memref.load %arg3[%c24] : memref<90xf32, #tpu.memory_space<smem>>
    %429 = vector.extract_strided_slice %4 {offsets = [0, 2], sizes = [18, 18], strides = [1, 1]} : vector<20x20xf32> to vector<18x18xf32>
    %430 = vector.broadcast %428 : f32 to vector<18x18xf32>
    %431 = arith.mulf %430, %429 : vector<18x18xf32>
    %432 = arith.addf %427, %431 : vector<18x18xf32>
    %c34 = arith.constant 34 : index
    %433 = memref.load %arg3[%c34] : memref<90xf32, #tpu.memory_space<smem>>
    %434 = vector.extract_strided_slice %4 {offsets = [1, 0], sizes = [18, 18], strides = [1, 1]} : vector<20x20xf32> to vector<18x18xf32>
    %435 = vector.broadcast %433 : f32 to vector<18x18xf32>
    %436 = arith.mulf %435, %434 : vector<18x18xf32>
    %437 = arith.addf %432, %436 : vector<18x18xf32>
    %c44 = arith.constant 44 : index
    %438 = memref.load %arg3[%c44] : memref<90xf32, #tpu.memory_space<smem>>
    %439 = vector.extract_strided_slice %4 {offsets = [1, 1], sizes = [18, 18], strides = [1, 1]} : vector<20x20xf32> to vector<18x18xf32>
    %440 = vector.broadcast %438 : f32 to vector<18x18xf32>
    %441 = arith.mulf %440, %439 : vector<18x18xf32>
    %442 = arith.addf %437, %441 : vector<18x18xf32>
    %c54 = arith.constant 54 : index
    %443 = memref.load %arg3[%c54] : memref<90xf32, #tpu.memory_space<smem>>
    %444 = vector.extract_strided_slice %4 {offsets = [1, 2], sizes = [18, 18], strides = [1, 1]} : vector<20x20xf32> to vector<18x18xf32>
    %445 = vector.broadcast %443 : f32 to vector<18x18xf32>
    %446 = arith.mulf %445, %444 : vector<18x18xf32>
    %447 = arith.addf %442, %446 : vector<18x18xf32>
    %c64 = arith.constant 64 : index
    %448 = memref.load %arg3[%c64] : memref<90xf32, #tpu.memory_space<smem>>
    %449 = vector.extract_strided_slice %4 {offsets = [2, 0], sizes = [18, 18], strides = [1, 1]} : vector<20x20xf32> to vector<18x18xf32>
    %450 = vector.broadcast %448 : f32 to vector<18x18xf32>
    %451 = arith.mulf %450, %449 : vector<18x18xf32>
    %452 = arith.addf %447, %451 : vector<18x18xf32>
    %c74 = arith.constant 74 : index
    %453 = memref.load %arg3[%c74] : memref<90xf32, #tpu.memory_space<smem>>
    %454 = vector.extract_strided_slice %4 {offsets = [2, 1], sizes = [18, 18], strides = [1, 1]} : vector<20x20xf32> to vector<18x18xf32>
    %455 = vector.broadcast %453 : f32 to vector<18x18xf32>
    %456 = arith.mulf %455, %454 : vector<18x18xf32>
    %457 = arith.addf %452, %456 : vector<18x18xf32>
    %c84 = arith.constant 84 : index
    %458 = memref.load %arg3[%c84] : memref<90xf32, #tpu.memory_space<smem>>
    %459 = vector.extract_strided_slice %4 {offsets = [2, 2], sizes = [18, 18], strides = [1, 1]} : vector<20x20xf32> to vector<18x18xf32>
    %460 = vector.broadcast %458 : f32 to vector<18x18xf32>
    %461 = arith.mulf %460, %459 : vector<18x18xf32>
    %462 = arith.addf %457, %461 : vector<18x18xf32>
    %c4_59 = arith.constant 4 : index
    %463 = memref.load %arg4[%c4_59] : memref<10xf32, #tpu.memory_space<smem>>
    %464 = vector.broadcast %463 : f32 to vector<18x18xf32>
    %465 = arith.addf %462, %464 : vector<18x18xf32>
    %cst_60 = arith.constant 0.000000e+00 : f32
    %466 = vector.broadcast %cst_60 : f32 to vector<18x18xf32>
    %467 = arith.maximumf %465, %466 : vector<18x18xf32>
    %cst_61 = arith.constant 0.000000e+00 : f32
    %468 = vector.broadcast %cst_61 : f32 to vector<18x18xf32>
    %469 = arith.select %23, %467, %468 : vector<18x18xi1>, vector<18x18xf32>
    %c4_62 = arith.constant 4 : index
    %470 = memref.load %arg5[%c4_62] : memref<90xf32, #tpu.memory_space<smem>>
    %471 = vector.extract_strided_slice %469 {offsets = [0, 0], sizes = [16, 16], strides = [1, 1]} : vector<18x18xf32> to vector<16x16xf32>
    %472 = vector.broadcast %470 : f32 to vector<16x16xf32>
    %473 = arith.mulf %472, %471 : vector<16x16xf32>
    %474 = arith.addf %416, %473 : vector<16x16xf32>
    %c14_63 = arith.constant 14 : index
    %475 = memref.load %arg5[%c14_63] : memref<90xf32, #tpu.memory_space<smem>>
    %476 = vector.extract_strided_slice %469 {offsets = [0, 1], sizes = [16, 16], strides = [1, 1]} : vector<18x18xf32> to vector<16x16xf32>
    %477 = vector.broadcast %475 : f32 to vector<16x16xf32>
    %478 = arith.mulf %477, %476 : vector<16x16xf32>
    %479 = arith.addf %474, %478 : vector<16x16xf32>
    %c24_64 = arith.constant 24 : index
    %480 = memref.load %arg5[%c24_64] : memref<90xf32, #tpu.memory_space<smem>>
    %481 = vector.extract_strided_slice %469 {offsets = [0, 2], sizes = [16, 16], strides = [1, 1]} : vector<18x18xf32> to vector<16x16xf32>
    %482 = vector.broadcast %480 : f32 to vector<16x16xf32>
    %483 = arith.mulf %482, %481 : vector<16x16xf32>
    %484 = arith.addf %479, %483 : vector<16x16xf32>
    %c34_65 = arith.constant 34 : index
    %485 = memref.load %arg5[%c34_65] : memref<90xf32, #tpu.memory_space<smem>>
    %486 = vector.extract_strided_slice %469 {offsets = [1, 0], sizes = [16, 16], strides = [1, 1]} : vector<18x18xf32> to vector<16x16xf32>
    %487 = vector.broadcast %485 : f32 to vector<16x16xf32>
    %488 = arith.mulf %487, %486 : vector<16x16xf32>
    %489 = arith.addf %484, %488 : vector<16x16xf32>
    %c44_66 = arith.constant 44 : index
    %490 = memref.load %arg5[%c44_66] : memref<90xf32, #tpu.memory_space<smem>>
    %491 = vector.extract_strided_slice %469 {offsets = [1, 1], sizes = [16, 16], strides = [1, 1]} : vector<18x18xf32> to vector<16x16xf32>
    %492 = vector.broadcast %490 : f32 to vector<16x16xf32>
    %493 = arith.mulf %492, %491 : vector<16x16xf32>
    %494 = arith.addf %489, %493 : vector<16x16xf32>
    %c54_67 = arith.constant 54 : index
    %495 = memref.load %arg5[%c54_67] : memref<90xf32, #tpu.memory_space<smem>>
    %496 = vector.extract_strided_slice %469 {offsets = [1, 2], sizes = [16, 16], strides = [1, 1]} : vector<18x18xf32> to vector<16x16xf32>
    %497 = vector.broadcast %495 : f32 to vector<16x16xf32>
    %498 = arith.mulf %497, %496 : vector<16x16xf32>
    %499 = arith.addf %494, %498 : vector<16x16xf32>
    %c64_68 = arith.constant 64 : index
    %500 = memref.load %arg5[%c64_68] : memref<90xf32, #tpu.memory_space<smem>>
    %501 = vector.extract_strided_slice %469 {offsets = [2, 0], sizes = [16, 16], strides = [1, 1]} : vector<18x18xf32> to vector<16x16xf32>
    %502 = vector.broadcast %500 : f32 to vector<16x16xf32>
    %503 = arith.mulf %502, %501 : vector<16x16xf32>
    %504 = arith.addf %499, %503 : vector<16x16xf32>
    %c74_69 = arith.constant 74 : index
    %505 = memref.load %arg5[%c74_69] : memref<90xf32, #tpu.memory_space<smem>>
    %506 = vector.extract_strided_slice %469 {offsets = [2, 1], sizes = [16, 16], strides = [1, 1]} : vector<18x18xf32> to vector<16x16xf32>
    %507 = vector.broadcast %505 : f32 to vector<16x16xf32>
    %508 = arith.mulf %507, %506 : vector<16x16xf32>
    %509 = arith.addf %504, %508 : vector<16x16xf32>
    %c84_70 = arith.constant 84 : index
    %510 = memref.load %arg5[%c84_70] : memref<90xf32, #tpu.memory_space<smem>>
    %511 = vector.extract_strided_slice %469 {offsets = [2, 2], sizes = [16, 16], strides = [1, 1]} : vector<18x18xf32> to vector<16x16xf32>
    %512 = vector.broadcast %510 : f32 to vector<16x16xf32>
    %513 = arith.mulf %512, %511 : vector<16x16xf32>
    %514 = arith.addf %509, %513 : vector<16x16xf32>
    %cst_71 = arith.constant 0.000000e+00 : f32
    %515 = vector.broadcast %cst_71 : f32 to vector<18x18xf32>
    %c5 = arith.constant 5 : index
    %516 = memref.load %arg3[%c5] : memref<90xf32, #tpu.memory_space<smem>>
    %517 = vector.extract_strided_slice %4 {offsets = [0, 0], sizes = [18, 18], strides = [1, 1]} : vector<20x20xf32> to vector<18x18xf32>
    %518 = vector.broadcast %516 : f32 to vector<18x18xf32>
    %519 = arith.mulf %518, %517 : vector<18x18xf32>
    %520 = arith.addf %515, %519 : vector<18x18xf32>
    %c15 = arith.constant 15 : index
    %521 = memref.load %arg3[%c15] : memref<90xf32, #tpu.memory_space<smem>>
    %522 = vector.extract_strided_slice %4 {offsets = [0, 1], sizes = [18, 18], strides = [1, 1]} : vector<20x20xf32> to vector<18x18xf32>
    %523 = vector.broadcast %521 : f32 to vector<18x18xf32>
    %524 = arith.mulf %523, %522 : vector<18x18xf32>
    %525 = arith.addf %520, %524 : vector<18x18xf32>
    %c25 = arith.constant 25 : index
    %526 = memref.load %arg3[%c25] : memref<90xf32, #tpu.memory_space<smem>>
    %527 = vector.extract_strided_slice %4 {offsets = [0, 2], sizes = [18, 18], strides = [1, 1]} : vector<20x20xf32> to vector<18x18xf32>
    %528 = vector.broadcast %526 : f32 to vector<18x18xf32>
    %529 = arith.mulf %528, %527 : vector<18x18xf32>
    %530 = arith.addf %525, %529 : vector<18x18xf32>
    %c35 = arith.constant 35 : index
    %531 = memref.load %arg3[%c35] : memref<90xf32, #tpu.memory_space<smem>>
    %532 = vector.extract_strided_slice %4 {offsets = [1, 0], sizes = [18, 18], strides = [1, 1]} : vector<20x20xf32> to vector<18x18xf32>
    %533 = vector.broadcast %531 : f32 to vector<18x18xf32>
    %534 = arith.mulf %533, %532 : vector<18x18xf32>
    %535 = arith.addf %530, %534 : vector<18x18xf32>
    %c45 = arith.constant 45 : index
    %536 = memref.load %arg3[%c45] : memref<90xf32, #tpu.memory_space<smem>>
    %537 = vector.extract_strided_slice %4 {offsets = [1, 1], sizes = [18, 18], strides = [1, 1]} : vector<20x20xf32> to vector<18x18xf32>
    %538 = vector.broadcast %536 : f32 to vector<18x18xf32>
    %539 = arith.mulf %538, %537 : vector<18x18xf32>
    %540 = arith.addf %535, %539 : vector<18x18xf32>
    %c55 = arith.constant 55 : index
    %541 = memref.load %arg3[%c55] : memref<90xf32, #tpu.memory_space<smem>>
    %542 = vector.extract_strided_slice %4 {offsets = [1, 2], sizes = [18, 18], strides = [1, 1]} : vector<20x20xf32> to vector<18x18xf32>
    %543 = vector.broadcast %541 : f32 to vector<18x18xf32>
    %544 = arith.mulf %543, %542 : vector<18x18xf32>
    %545 = arith.addf %540, %544 : vector<18x18xf32>
    %c65 = arith.constant 65 : index
    %546 = memref.load %arg3[%c65] : memref<90xf32, #tpu.memory_space<smem>>
    %547 = vector.extract_strided_slice %4 {offsets = [2, 0], sizes = [18, 18], strides = [1, 1]} : vector<20x20xf32> to vector<18x18xf32>
    %548 = vector.broadcast %546 : f32 to vector<18x18xf32>
    %549 = arith.mulf %548, %547 : vector<18x18xf32>
    %550 = arith.addf %545, %549 : vector<18x18xf32>
    %c75 = arith.constant 75 : index
    %551 = memref.load %arg3[%c75] : memref<90xf32, #tpu.memory_space<smem>>
    %552 = vector.extract_strided_slice %4 {offsets = [2, 1], sizes = [18, 18], strides = [1, 1]} : vector<20x20xf32> to vector<18x18xf32>
    %553 = vector.broadcast %551 : f32 to vector<18x18xf32>
    %554 = arith.mulf %553, %552 : vector<18x18xf32>
    %555 = arith.addf %550, %554 : vector<18x18xf32>
    %c85 = arith.constant 85 : index
    %556 = memref.load %arg3[%c85] : memref<90xf32, #tpu.memory_space<smem>>
    %557 = vector.extract_strided_slice %4 {offsets = [2, 2], sizes = [18, 18], strides = [1, 1]} : vector<20x20xf32> to vector<18x18xf32>
    %558 = vector.broadcast %556 : f32 to vector<18x18xf32>
    %559 = arith.mulf %558, %557 : vector<18x18xf32>
    %560 = arith.addf %555, %559 : vector<18x18xf32>
    %c5_72 = arith.constant 5 : index
    %561 = memref.load %arg4[%c5_72] : memref<10xf32, #tpu.memory_space<smem>>
    %562 = vector.broadcast %561 : f32 to vector<18x18xf32>
    %563 = arith.addf %560, %562 : vector<18x18xf32>
    %cst_73 = arith.constant 0.000000e+00 : f32
    %564 = vector.broadcast %cst_73 : f32 to vector<18x18xf32>
    %565 = arith.maximumf %563, %564 : vector<18x18xf32>
    %cst_74 = arith.constant 0.000000e+00 : f32
    %566 = vector.broadcast %cst_74 : f32 to vector<18x18xf32>
    %567 = arith.select %23, %565, %566 : vector<18x18xi1>, vector<18x18xf32>
    %c5_75 = arith.constant 5 : index
    %568 = memref.load %arg5[%c5_75] : memref<90xf32, #tpu.memory_space<smem>>
    %569 = vector.extract_strided_slice %567 {offsets = [0, 0], sizes = [16, 16], strides = [1, 1]} : vector<18x18xf32> to vector<16x16xf32>
    %570 = vector.broadcast %568 : f32 to vector<16x16xf32>
    %571 = arith.mulf %570, %569 : vector<16x16xf32>
    %572 = arith.addf %514, %571 : vector<16x16xf32>
    %c15_76 = arith.constant 15 : index
    %573 = memref.load %arg5[%c15_76] : memref<90xf32, #tpu.memory_space<smem>>
    %574 = vector.extract_strided_slice %567 {offsets = [0, 1], sizes = [16, 16], strides = [1, 1]} : vector<18x18xf32> to vector<16x16xf32>
    %575 = vector.broadcast %573 : f32 to vector<16x16xf32>
    %576 = arith.mulf %575, %574 : vector<16x16xf32>
    %577 = arith.addf %572, %576 : vector<16x16xf32>
    %c25_77 = arith.constant 25 : index
    %578 = memref.load %arg5[%c25_77] : memref<90xf32, #tpu.memory_space<smem>>
    %579 = vector.extract_strided_slice %567 {offsets = [0, 2], sizes = [16, 16], strides = [1, 1]} : vector<18x18xf32> to vector<16x16xf32>
    %580 = vector.broadcast %578 : f32 to vector<16x16xf32>
    %581 = arith.mulf %580, %579 : vector<16x16xf32>
    %582 = arith.addf %577, %581 : vector<16x16xf32>
    %c35_78 = arith.constant 35 : index
    %583 = memref.load %arg5[%c35_78] : memref<90xf32, #tpu.memory_space<smem>>
    %584 = vector.extract_strided_slice %567 {offsets = [1, 0], sizes = [16, 16], strides = [1, 1]} : vector<18x18xf32> to vector<16x16xf32>
    %585 = vector.broadcast %583 : f32 to vector<16x16xf32>
    %586 = arith.mulf %585, %584 : vector<16x16xf32>
    %587 = arith.addf %582, %586 : vector<16x16xf32>
    %c45_79 = arith.constant 45 : index
    %588 = memref.load %arg5[%c45_79] : memref<90xf32, #tpu.memory_space<smem>>
    %589 = vector.extract_strided_slice %567 {offsets = [1, 1], sizes = [16, 16], strides = [1, 1]} : vector<18x18xf32> to vector<16x16xf32>
    %590 = vector.broadcast %588 : f32 to vector<16x16xf32>
    %591 = arith.mulf %590, %589 : vector<16x16xf32>
    %592 = arith.addf %587, %591 : vector<16x16xf32>
    %c55_80 = arith.constant 55 : index
    %593 = memref.load %arg5[%c55_80] : memref<90xf32, #tpu.memory_space<smem>>
    %594 = vector.extract_strided_slice %567 {offsets = [1, 2], sizes = [16, 16], strides = [1, 1]} : vector<18x18xf32> to vector<16x16xf32>
    %595 = vector.broadcast %593 : f32 to vector<16x16xf32>
    %596 = arith.mulf %595, %594 : vector<16x16xf32>
    %597 = arith.addf %592, %596 : vector<16x16xf32>
    %c65_81 = arith.constant 65 : index
    %598 = memref.load %arg5[%c65_81] : memref<90xf32, #tpu.memory_space<smem>>
    %599 = vector.extract_strided_slice %567 {offsets = [2, 0], sizes = [16, 16], strides = [1, 1]} : vector<18x18xf32> to vector<16x16xf32>
    %600 = vector.broadcast %598 : f32 to vector<16x16xf32>
    %601 = arith.mulf %600, %599 : vector<16x16xf32>
    %602 = arith.addf %597, %601 : vector<16x16xf32>
    %c75_82 = arith.constant 75 : index
    %603 = memref.load %arg5[%c75_82] : memref<90xf32, #tpu.memory_space<smem>>
    %604 = vector.extract_strided_slice %567 {offsets = [2, 1], sizes = [16, 16], strides = [1, 1]} : vector<18x18xf32> to vector<16x16xf32>
    %605 = vector.broadcast %603 : f32 to vector<16x16xf32>
    %606 = arith.mulf %605, %604 : vector<16x16xf32>
    %607 = arith.addf %602, %606 : vector<16x16xf32>
    %c85_83 = arith.constant 85 : index
    %608 = memref.load %arg5[%c85_83] : memref<90xf32, #tpu.memory_space<smem>>
    %609 = vector.extract_strided_slice %567 {offsets = [2, 2], sizes = [16, 16], strides = [1, 1]} : vector<18x18xf32> to vector<16x16xf32>
    %610 = vector.broadcast %608 : f32 to vector<16x16xf32>
    %611 = arith.mulf %610, %609 : vector<16x16xf32>
    %612 = arith.addf %607, %611 : vector<16x16xf32>
    %cst_84 = arith.constant 0.000000e+00 : f32
    %613 = vector.broadcast %cst_84 : f32 to vector<18x18xf32>
    %c6 = arith.constant 6 : index
    %614 = memref.load %arg3[%c6] : memref<90xf32, #tpu.memory_space<smem>>
    %615 = vector.extract_strided_slice %4 {offsets = [0, 0], sizes = [18, 18], strides = [1, 1]} : vector<20x20xf32> to vector<18x18xf32>
    %616 = vector.broadcast %614 : f32 to vector<18x18xf32>
    %617 = arith.mulf %616, %615 : vector<18x18xf32>
    %618 = arith.addf %613, %617 : vector<18x18xf32>
    %c16 = arith.constant 16 : index
    %619 = memref.load %arg3[%c16] : memref<90xf32, #tpu.memory_space<smem>>
    %620 = vector.extract_strided_slice %4 {offsets = [0, 1], sizes = [18, 18], strides = [1, 1]} : vector<20x20xf32> to vector<18x18xf32>
    %621 = vector.broadcast %619 : f32 to vector<18x18xf32>
    %622 = arith.mulf %621, %620 : vector<18x18xf32>
    %623 = arith.addf %618, %622 : vector<18x18xf32>
    %c26 = arith.constant 26 : index
    %624 = memref.load %arg3[%c26] : memref<90xf32, #tpu.memory_space<smem>>
    %625 = vector.extract_strided_slice %4 {offsets = [0, 2], sizes = [18, 18], strides = [1, 1]} : vector<20x20xf32> to vector<18x18xf32>
    %626 = vector.broadcast %624 : f32 to vector<18x18xf32>
    %627 = arith.mulf %626, %625 : vector<18x18xf32>
    %628 = arith.addf %623, %627 : vector<18x18xf32>
    %c36 = arith.constant 36 : index
    %629 = memref.load %arg3[%c36] : memref<90xf32, #tpu.memory_space<smem>>
    %630 = vector.extract_strided_slice %4 {offsets = [1, 0], sizes = [18, 18], strides = [1, 1]} : vector<20x20xf32> to vector<18x18xf32>
    %631 = vector.broadcast %629 : f32 to vector<18x18xf32>
    %632 = arith.mulf %631, %630 : vector<18x18xf32>
    %633 = arith.addf %628, %632 : vector<18x18xf32>
    %c46 = arith.constant 46 : index
    %634 = memref.load %arg3[%c46] : memref<90xf32, #tpu.memory_space<smem>>
    %635 = vector.extract_strided_slice %4 {offsets = [1, 1], sizes = [18, 18], strides = [1, 1]} : vector<20x20xf32> to vector<18x18xf32>
    %636 = vector.broadcast %634 : f32 to vector<18x18xf32>
    %637 = arith.mulf %636, %635 : vector<18x18xf32>
    %638 = arith.addf %633, %637 : vector<18x18xf32>
    %c56 = arith.constant 56 : index
    %639 = memref.load %arg3[%c56] : memref<90xf32, #tpu.memory_space<smem>>
    %640 = vector.extract_strided_slice %4 {offsets = [1, 2], sizes = [18, 18], strides = [1, 1]} : vector<20x20xf32> to vector<18x18xf32>
    %641 = vector.broadcast %639 : f32 to vector<18x18xf32>
    %642 = arith.mulf %641, %640 : vector<18x18xf32>
    %643 = arith.addf %638, %642 : vector<18x18xf32>
    %c66 = arith.constant 66 : index
    %644 = memref.load %arg3[%c66] : memref<90xf32, #tpu.memory_space<smem>>
    %645 = vector.extract_strided_slice %4 {offsets = [2, 0], sizes = [18, 18], strides = [1, 1]} : vector<20x20xf32> to vector<18x18xf32>
    %646 = vector.broadcast %644 : f32 to vector<18x18xf32>
    %647 = arith.mulf %646, %645 : vector<18x18xf32>
    %648 = arith.addf %643, %647 : vector<18x18xf32>
    %c76 = arith.constant 76 : index
    %649 = memref.load %arg3[%c76] : memref<90xf32, #tpu.memory_space<smem>>
    %650 = vector.extract_strided_slice %4 {offsets = [2, 1], sizes = [18, 18], strides = [1, 1]} : vector<20x20xf32> to vector<18x18xf32>
    %651 = vector.broadcast %649 : f32 to vector<18x18xf32>
    %652 = arith.mulf %651, %650 : vector<18x18xf32>
    %653 = arith.addf %648, %652 : vector<18x18xf32>
    %c86 = arith.constant 86 : index
    %654 = memref.load %arg3[%c86] : memref<90xf32, #tpu.memory_space<smem>>
    %655 = vector.extract_strided_slice %4 {offsets = [2, 2], sizes = [18, 18], strides = [1, 1]} : vector<20x20xf32> to vector<18x18xf32>
    %656 = vector.broadcast %654 : f32 to vector<18x18xf32>
    %657 = arith.mulf %656, %655 : vector<18x18xf32>
    %658 = arith.addf %653, %657 : vector<18x18xf32>
    %c6_85 = arith.constant 6 : index
    %659 = memref.load %arg4[%c6_85] : memref<10xf32, #tpu.memory_space<smem>>
    %660 = vector.broadcast %659 : f32 to vector<18x18xf32>
    %661 = arith.addf %658, %660 : vector<18x18xf32>
    %cst_86 = arith.constant 0.000000e+00 : f32
    %662 = vector.broadcast %cst_86 : f32 to vector<18x18xf32>
    %663 = arith.maximumf %661, %662 : vector<18x18xf32>
    %cst_87 = arith.constant 0.000000e+00 : f32
    %664 = vector.broadcast %cst_87 : f32 to vector<18x18xf32>
    %665 = arith.select %23, %663, %664 : vector<18x18xi1>, vector<18x18xf32>
    %c6_88 = arith.constant 6 : index
    %666 = memref.load %arg5[%c6_88] : memref<90xf32, #tpu.memory_space<smem>>
    %667 = vector.extract_strided_slice %665 {offsets = [0, 0], sizes = [16, 16], strides = [1, 1]} : vector<18x18xf32> to vector<16x16xf32>
    %668 = vector.broadcast %666 : f32 to vector<16x16xf32>
    %669 = arith.mulf %668, %667 : vector<16x16xf32>
    %670 = arith.addf %612, %669 : vector<16x16xf32>
    %c16_89 = arith.constant 16 : index
    %671 = memref.load %arg5[%c16_89] : memref<90xf32, #tpu.memory_space<smem>>
    %672 = vector.extract_strided_slice %665 {offsets = [0, 1], sizes = [16, 16], strides = [1, 1]} : vector<18x18xf32> to vector<16x16xf32>
    %673 = vector.broadcast %671 : f32 to vector<16x16xf32>
    %674 = arith.mulf %673, %672 : vector<16x16xf32>
    %675 = arith.addf %670, %674 : vector<16x16xf32>
    %c26_90 = arith.constant 26 : index
    %676 = memref.load %arg5[%c26_90] : memref<90xf32, #tpu.memory_space<smem>>
    %677 = vector.extract_strided_slice %665 {offsets = [0, 2], sizes = [16, 16], strides = [1, 1]} : vector<18x18xf32> to vector<16x16xf32>
    %678 = vector.broadcast %676 : f32 to vector<16x16xf32>
    %679 = arith.mulf %678, %677 : vector<16x16xf32>
    %680 = arith.addf %675, %679 : vector<16x16xf32>
    %c36_91 = arith.constant 36 : index
    %681 = memref.load %arg5[%c36_91] : memref<90xf32, #tpu.memory_space<smem>>
    %682 = vector.extract_strided_slice %665 {offsets = [1, 0], sizes = [16, 16], strides = [1, 1]} : vector<18x18xf32> to vector<16x16xf32>
    %683 = vector.broadcast %681 : f32 to vector<16x16xf32>
    %684 = arith.mulf %683, %682 : vector<16x16xf32>
    %685 = arith.addf %680, %684 : vector<16x16xf32>
    %c46_92 = arith.constant 46 : index
    %686 = memref.load %arg5[%c46_92] : memref<90xf32, #tpu.memory_space<smem>>
    %687 = vector.extract_strided_slice %665 {offsets = [1, 1], sizes = [16, 16], strides = [1, 1]} : vector<18x18xf32> to vector<16x16xf32>
    %688 = vector.broadcast %686 : f32 to vector<16x16xf32>
    %689 = arith.mulf %688, %687 : vector<16x16xf32>
    %690 = arith.addf %685, %689 : vector<16x16xf32>
    %c56_93 = arith.constant 56 : index
    %691 = memref.load %arg5[%c56_93] : memref<90xf32, #tpu.memory_space<smem>>
    %692 = vector.extract_strided_slice %665 {offsets = [1, 2], sizes = [16, 16], strides = [1, 1]} : vector<18x18xf32> to vector<16x16xf32>
    %693 = vector.broadcast %691 : f32 to vector<16x16xf32>
    %694 = arith.mulf %693, %692 : vector<16x16xf32>
    %695 = arith.addf %690, %694 : vector<16x16xf32>
    %c66_94 = arith.constant 66 : index
    %696 = memref.load %arg5[%c66_94] : memref<90xf32, #tpu.memory_space<smem>>
    %697 = vector.extract_strided_slice %665 {offsets = [2, 0], sizes = [16, 16], strides = [1, 1]} : vector<18x18xf32> to vector<16x16xf32>
    %698 = vector.broadcast %696 : f32 to vector<16x16xf32>
    %699 = arith.mulf %698, %697 : vector<16x16xf32>
    %700 = arith.addf %695, %699 : vector<16x16xf32>
    %c76_95 = arith.constant 76 : index
    %701 = memref.load %arg5[%c76_95] : memref<90xf32, #tpu.memory_space<smem>>
    %702 = vector.extract_strided_slice %665 {offsets = [2, 1], sizes = [16, 16], strides = [1, 1]} : vector<18x18xf32> to vector<16x16xf32>
    %703 = vector.broadcast %701 : f32 to vector<16x16xf32>
    %704 = arith.mulf %703, %702 : vector<16x16xf32>
    %705 = arith.addf %700, %704 : vector<16x16xf32>
    %c86_96 = arith.constant 86 : index
    %706 = memref.load %arg5[%c86_96] : memref<90xf32, #tpu.memory_space<smem>>
    %707 = vector.extract_strided_slice %665 {offsets = [2, 2], sizes = [16, 16], strides = [1, 1]} : vector<18x18xf32> to vector<16x16xf32>
    %708 = vector.broadcast %706 : f32 to vector<16x16xf32>
    %709 = arith.mulf %708, %707 : vector<16x16xf32>
    %710 = arith.addf %705, %709 : vector<16x16xf32>
    %cst_97 = arith.constant 0.000000e+00 : f32
    %711 = vector.broadcast %cst_97 : f32 to vector<18x18xf32>
    %c7 = arith.constant 7 : index
    %712 = memref.load %arg3[%c7] : memref<90xf32, #tpu.memory_space<smem>>
    %713 = vector.extract_strided_slice %4 {offsets = [0, 0], sizes = [18, 18], strides = [1, 1]} : vector<20x20xf32> to vector<18x18xf32>
    %714 = vector.broadcast %712 : f32 to vector<18x18xf32>
    %715 = arith.mulf %714, %713 : vector<18x18xf32>
    %716 = arith.addf %711, %715 : vector<18x18xf32>
    %c17 = arith.constant 17 : index
    %717 = memref.load %arg3[%c17] : memref<90xf32, #tpu.memory_space<smem>>
    %718 = vector.extract_strided_slice %4 {offsets = [0, 1], sizes = [18, 18], strides = [1, 1]} : vector<20x20xf32> to vector<18x18xf32>
    %719 = vector.broadcast %717 : f32 to vector<18x18xf32>
    %720 = arith.mulf %719, %718 : vector<18x18xf32>
    %721 = arith.addf %716, %720 : vector<18x18xf32>
    %c27 = arith.constant 27 : index
    %722 = memref.load %arg3[%c27] : memref<90xf32, #tpu.memory_space<smem>>
    %723 = vector.extract_strided_slice %4 {offsets = [0, 2], sizes = [18, 18], strides = [1, 1]} : vector<20x20xf32> to vector<18x18xf32>
    %724 = vector.broadcast %722 : f32 to vector<18x18xf32>
    %725 = arith.mulf %724, %723 : vector<18x18xf32>
    %726 = arith.addf %721, %725 : vector<18x18xf32>
    %c37 = arith.constant 37 : index
    %727 = memref.load %arg3[%c37] : memref<90xf32, #tpu.memory_space<smem>>
    %728 = vector.extract_strided_slice %4 {offsets = [1, 0], sizes = [18, 18], strides = [1, 1]} : vector<20x20xf32> to vector<18x18xf32>
    %729 = vector.broadcast %727 : f32 to vector<18x18xf32>
    %730 = arith.mulf %729, %728 : vector<18x18xf32>
    %731 = arith.addf %726, %730 : vector<18x18xf32>
    %c47 = arith.constant 47 : index
    %732 = memref.load %arg3[%c47] : memref<90xf32, #tpu.memory_space<smem>>
    %733 = vector.extract_strided_slice %4 {offsets = [1, 1], sizes = [18, 18], strides = [1, 1]} : vector<20x20xf32> to vector<18x18xf32>
    %734 = vector.broadcast %732 : f32 to vector<18x18xf32>
    %735 = arith.mulf %734, %733 : vector<18x18xf32>
    %736 = arith.addf %731, %735 : vector<18x18xf32>
    %c57 = arith.constant 57 : index
    %737 = memref.load %arg3[%c57] : memref<90xf32, #tpu.memory_space<smem>>
    %738 = vector.extract_strided_slice %4 {offsets = [1, 2], sizes = [18, 18], strides = [1, 1]} : vector<20x20xf32> to vector<18x18xf32>
    %739 = vector.broadcast %737 : f32 to vector<18x18xf32>
    %740 = arith.mulf %739, %738 : vector<18x18xf32>
    %741 = arith.addf %736, %740 : vector<18x18xf32>
    %c67 = arith.constant 67 : index
    %742 = memref.load %arg3[%c67] : memref<90xf32, #tpu.memory_space<smem>>
    %743 = vector.extract_strided_slice %4 {offsets = [2, 0], sizes = [18, 18], strides = [1, 1]} : vector<20x20xf32> to vector<18x18xf32>
    %744 = vector.broadcast %742 : f32 to vector<18x18xf32>
    %745 = arith.mulf %744, %743 : vector<18x18xf32>
    %746 = arith.addf %741, %745 : vector<18x18xf32>
    %c77 = arith.constant 77 : index
    %747 = memref.load %arg3[%c77] : memref<90xf32, #tpu.memory_space<smem>>
    %748 = vector.extract_strided_slice %4 {offsets = [2, 1], sizes = [18, 18], strides = [1, 1]} : vector<20x20xf32> to vector<18x18xf32>
    %749 = vector.broadcast %747 : f32 to vector<18x18xf32>
    %750 = arith.mulf %749, %748 : vector<18x18xf32>
    %751 = arith.addf %746, %750 : vector<18x18xf32>
    %c87 = arith.constant 87 : index
    %752 = memref.load %arg3[%c87] : memref<90xf32, #tpu.memory_space<smem>>
    %753 = vector.extract_strided_slice %4 {offsets = [2, 2], sizes = [18, 18], strides = [1, 1]} : vector<20x20xf32> to vector<18x18xf32>
    %754 = vector.broadcast %752 : f32 to vector<18x18xf32>
    %755 = arith.mulf %754, %753 : vector<18x18xf32>
    %756 = arith.addf %751, %755 : vector<18x18xf32>
    %c7_98 = arith.constant 7 : index
    %757 = memref.load %arg4[%c7_98] : memref<10xf32, #tpu.memory_space<smem>>
    %758 = vector.broadcast %757 : f32 to vector<18x18xf32>
    %759 = arith.addf %756, %758 : vector<18x18xf32>
    %cst_99 = arith.constant 0.000000e+00 : f32
    %760 = vector.broadcast %cst_99 : f32 to vector<18x18xf32>
    %761 = arith.maximumf %759, %760 : vector<18x18xf32>
    %cst_100 = arith.constant 0.000000e+00 : f32
    %762 = vector.broadcast %cst_100 : f32 to vector<18x18xf32>
    %763 = arith.select %23, %761, %762 : vector<18x18xi1>, vector<18x18xf32>
    %c7_101 = arith.constant 7 : index
    %764 = memref.load %arg5[%c7_101] : memref<90xf32, #tpu.memory_space<smem>>
    %765 = vector.extract_strided_slice %763 {offsets = [0, 0], sizes = [16, 16], strides = [1, 1]} : vector<18x18xf32> to vector<16x16xf32>
    %766 = vector.broadcast %764 : f32 to vector<16x16xf32>
    %767 = arith.mulf %766, %765 : vector<16x16xf32>
    %768 = arith.addf %710, %767 : vector<16x16xf32>
    %c17_102 = arith.constant 17 : index
    %769 = memref.load %arg5[%c17_102] : memref<90xf32, #tpu.memory_space<smem>>
    %770 = vector.extract_strided_slice %763 {offsets = [0, 1], sizes = [16, 16], strides = [1, 1]} : vector<18x18xf32> to vector<16x16xf32>
    %771 = vector.broadcast %769 : f32 to vector<16x16xf32>
    %772 = arith.mulf %771, %770 : vector<16x16xf32>
    %773 = arith.addf %768, %772 : vector<16x16xf32>
    %c27_103 = arith.constant 27 : index
    %774 = memref.load %arg5[%c27_103] : memref<90xf32, #tpu.memory_space<smem>>
    %775 = vector.extract_strided_slice %763 {offsets = [0, 2], sizes = [16, 16], strides = [1, 1]} : vector<18x18xf32> to vector<16x16xf32>
    %776 = vector.broadcast %774 : f32 to vector<16x16xf32>
    %777 = arith.mulf %776, %775 : vector<16x16xf32>
    %778 = arith.addf %773, %777 : vector<16x16xf32>
    %c37_104 = arith.constant 37 : index
    %779 = memref.load %arg5[%c37_104] : memref<90xf32, #tpu.memory_space<smem>>
    %780 = vector.extract_strided_slice %763 {offsets = [1, 0], sizes = [16, 16], strides = [1, 1]} : vector<18x18xf32> to vector<16x16xf32>
    %781 = vector.broadcast %779 : f32 to vector<16x16xf32>
    %782 = arith.mulf %781, %780 : vector<16x16xf32>
    %783 = arith.addf %778, %782 : vector<16x16xf32>
    %c47_105 = arith.constant 47 : index
    %784 = memref.load %arg5[%c47_105] : memref<90xf32, #tpu.memory_space<smem>>
    %785 = vector.extract_strided_slice %763 {offsets = [1, 1], sizes = [16, 16], strides = [1, 1]} : vector<18x18xf32> to vector<16x16xf32>
    %786 = vector.broadcast %784 : f32 to vector<16x16xf32>
    %787 = arith.mulf %786, %785 : vector<16x16xf32>
    %788 = arith.addf %783, %787 : vector<16x16xf32>
    %c57_106 = arith.constant 57 : index
    %789 = memref.load %arg5[%c57_106] : memref<90xf32, #tpu.memory_space<smem>>
    %790 = vector.extract_strided_slice %763 {offsets = [1, 2], sizes = [16, 16], strides = [1, 1]} : vector<18x18xf32> to vector<16x16xf32>
    %791 = vector.broadcast %789 : f32 to vector<16x16xf32>
    %792 = arith.mulf %791, %790 : vector<16x16xf32>
    %793 = arith.addf %788, %792 : vector<16x16xf32>
    %c67_107 = arith.constant 67 : index
    %794 = memref.load %arg5[%c67_107] : memref<90xf32, #tpu.memory_space<smem>>
    %795 = vector.extract_strided_slice %763 {offsets = [2, 0], sizes = [16, 16], strides = [1, 1]} : vector<18x18xf32> to vector<16x16xf32>
    %796 = vector.broadcast %794 : f32 to vector<16x16xf32>
    %797 = arith.mulf %796, %795 : vector<16x16xf32>
    %798 = arith.addf %793, %797 : vector<16x16xf32>
    %c77_108 = arith.constant 77 : index
    %799 = memref.load %arg5[%c77_108] : memref<90xf32, #tpu.memory_space<smem>>
    %800 = vector.extract_strided_slice %763 {offsets = [2, 1], sizes = [16, 16], strides = [1, 1]} : vector<18x18xf32> to vector<16x16xf32>
    %801 = vector.broadcast %799 : f32 to vector<16x16xf32>
    %802 = arith.mulf %801, %800 : vector<16x16xf32>
    %803 = arith.addf %798, %802 : vector<16x16xf32>
    %c87_109 = arith.constant 87 : index
    %804 = memref.load %arg5[%c87_109] : memref<90xf32, #tpu.memory_space<smem>>
    %805 = vector.extract_strided_slice %763 {offsets = [2, 2], sizes = [16, 16], strides = [1, 1]} : vector<18x18xf32> to vector<16x16xf32>
    %806 = vector.broadcast %804 : f32 to vector<16x16xf32>
    %807 = arith.mulf %806, %805 : vector<16x16xf32>
    %808 = arith.addf %803, %807 : vector<16x16xf32>
    %cst_110 = arith.constant 0.000000e+00 : f32
    %809 = vector.broadcast %cst_110 : f32 to vector<18x18xf32>
    %c8 = arith.constant 8 : index
    %810 = memref.load %arg3[%c8] : memref<90xf32, #tpu.memory_space<smem>>
    %811 = vector.extract_strided_slice %4 {offsets = [0, 0], sizes = [18, 18], strides = [1, 1]} : vector<20x20xf32> to vector<18x18xf32>
    %812 = vector.broadcast %810 : f32 to vector<18x18xf32>
    %813 = arith.mulf %812, %811 : vector<18x18xf32>
    %814 = arith.addf %809, %813 : vector<18x18xf32>
    %c18 = arith.constant 18 : index
    %815 = memref.load %arg3[%c18] : memref<90xf32, #tpu.memory_space<smem>>
    %816 = vector.extract_strided_slice %4 {offsets = [0, 1], sizes = [18, 18], strides = [1, 1]} : vector<20x20xf32> to vector<18x18xf32>
    %817 = vector.broadcast %815 : f32 to vector<18x18xf32>
    %818 = arith.mulf %817, %816 : vector<18x18xf32>
    %819 = arith.addf %814, %818 : vector<18x18xf32>
    %c28 = arith.constant 28 : index
    %820 = memref.load %arg3[%c28] : memref<90xf32, #tpu.memory_space<smem>>
    %821 = vector.extract_strided_slice %4 {offsets = [0, 2], sizes = [18, 18], strides = [1, 1]} : vector<20x20xf32> to vector<18x18xf32>
    %822 = vector.broadcast %820 : f32 to vector<18x18xf32>
    %823 = arith.mulf %822, %821 : vector<18x18xf32>
    %824 = arith.addf %819, %823 : vector<18x18xf32>
    %c38 = arith.constant 38 : index
    %825 = memref.load %arg3[%c38] : memref<90xf32, #tpu.memory_space<smem>>
    %826 = vector.extract_strided_slice %4 {offsets = [1, 0], sizes = [18, 18], strides = [1, 1]} : vector<20x20xf32> to vector<18x18xf32>
    %827 = vector.broadcast %825 : f32 to vector<18x18xf32>
    %828 = arith.mulf %827, %826 : vector<18x18xf32>
    %829 = arith.addf %824, %828 : vector<18x18xf32>
    %c48 = arith.constant 48 : index
    %830 = memref.load %arg3[%c48] : memref<90xf32, #tpu.memory_space<smem>>
    %831 = vector.extract_strided_slice %4 {offsets = [1, 1], sizes = [18, 18], strides = [1, 1]} : vector<20x20xf32> to vector<18x18xf32>
    %832 = vector.broadcast %830 : f32 to vector<18x18xf32>
    %833 = arith.mulf %832, %831 : vector<18x18xf32>
    %834 = arith.addf %829, %833 : vector<18x18xf32>
    %c58 = arith.constant 58 : index
    %835 = memref.load %arg3[%c58] : memref<90xf32, #tpu.memory_space<smem>>
    %836 = vector.extract_strided_slice %4 {offsets = [1, 2], sizes = [18, 18], strides = [1, 1]} : vector<20x20xf32> to vector<18x18xf32>
    %837 = vector.broadcast %835 : f32 to vector<18x18xf32>
    %838 = arith.mulf %837, %836 : vector<18x18xf32>
    %839 = arith.addf %834, %838 : vector<18x18xf32>
    %c68 = arith.constant 68 : index
    %840 = memref.load %arg3[%c68] : memref<90xf32, #tpu.memory_space<smem>>
    %841 = vector.extract_strided_slice %4 {offsets = [2, 0], sizes = [18, 18], strides = [1, 1]} : vector<20x20xf32> to vector<18x18xf32>
    %842 = vector.broadcast %840 : f32 to vector<18x18xf32>
    %843 = arith.mulf %842, %841 : vector<18x18xf32>
    %844 = arith.addf %839, %843 : vector<18x18xf32>
    %c78 = arith.constant 78 : index
    %845 = memref.load %arg3[%c78] : memref<90xf32, #tpu.memory_space<smem>>
    %846 = vector.extract_strided_slice %4 {offsets = [2, 1], sizes = [18, 18], strides = [1, 1]} : vector<20x20xf32> to vector<18x18xf32>
    %847 = vector.broadcast %845 : f32 to vector<18x18xf32>
    %848 = arith.mulf %847, %846 : vector<18x18xf32>
    %849 = arith.addf %844, %848 : vector<18x18xf32>
    %c88 = arith.constant 88 : index
    %850 = memref.load %arg3[%c88] : memref<90xf32, #tpu.memory_space<smem>>
    %851 = vector.extract_strided_slice %4 {offsets = [2, 2], sizes = [18, 18], strides = [1, 1]} : vector<20x20xf32> to vector<18x18xf32>
    %852 = vector.broadcast %850 : f32 to vector<18x18xf32>
    %853 = arith.mulf %852, %851 : vector<18x18xf32>
    %854 = arith.addf %849, %853 : vector<18x18xf32>
    %c8_111 = arith.constant 8 : index
    %855 = memref.load %arg4[%c8_111] : memref<10xf32, #tpu.memory_space<smem>>
    %856 = vector.broadcast %855 : f32 to vector<18x18xf32>
    %857 = arith.addf %854, %856 : vector<18x18xf32>
    %cst_112 = arith.constant 0.000000e+00 : f32
    %858 = vector.broadcast %cst_112 : f32 to vector<18x18xf32>
    %859 = arith.maximumf %857, %858 : vector<18x18xf32>
    %cst_113 = arith.constant 0.000000e+00 : f32
    %860 = vector.broadcast %cst_113 : f32 to vector<18x18xf32>
    %861 = arith.select %23, %859, %860 : vector<18x18xi1>, vector<18x18xf32>
    %c8_114 = arith.constant 8 : index
    %862 = memref.load %arg5[%c8_114] : memref<90xf32, #tpu.memory_space<smem>>
    %863 = vector.extract_strided_slice %861 {offsets = [0, 0], sizes = [16, 16], strides = [1, 1]} : vector<18x18xf32> to vector<16x16xf32>
    %864 = vector.broadcast %862 : f32 to vector<16x16xf32>
    %865 = arith.mulf %864, %863 : vector<16x16xf32>
    %866 = arith.addf %808, %865 : vector<16x16xf32>
    %c18_115 = arith.constant 18 : index
    %867 = memref.load %arg5[%c18_115] : memref<90xf32, #tpu.memory_space<smem>>
    %868 = vector.extract_strided_slice %861 {offsets = [0, 1], sizes = [16, 16], strides = [1, 1]} : vector<18x18xf32> to vector<16x16xf32>
    %869 = vector.broadcast %867 : f32 to vector<16x16xf32>
    %870 = arith.mulf %869, %868 : vector<16x16xf32>
    %871 = arith.addf %866, %870 : vector<16x16xf32>
    %c28_116 = arith.constant 28 : index
    %872 = memref.load %arg5[%c28_116] : memref<90xf32, #tpu.memory_space<smem>>
    %873 = vector.extract_strided_slice %861 {offsets = [0, 2], sizes = [16, 16], strides = [1, 1]} : vector<18x18xf32> to vector<16x16xf32>
    %874 = vector.broadcast %872 : f32 to vector<16x16xf32>
    %875 = arith.mulf %874, %873 : vector<16x16xf32>
    %876 = arith.addf %871, %875 : vector<16x16xf32>
    %c38_117 = arith.constant 38 : index
    %877 = memref.load %arg5[%c38_117] : memref<90xf32, #tpu.memory_space<smem>>
    %878 = vector.extract_strided_slice %861 {offsets = [1, 0], sizes = [16, 16], strides = [1, 1]} : vector<18x18xf32> to vector<16x16xf32>
    %879 = vector.broadcast %877 : f32 to vector<16x16xf32>
    %880 = arith.mulf %879, %878 : vector<16x16xf32>
    %881 = arith.addf %876, %880 : vector<16x16xf32>
    %c48_118 = arith.constant 48 : index
    %882 = memref.load %arg5[%c48_118] : memref<90xf32, #tpu.memory_space<smem>>
    %883 = vector.extract_strided_slice %861 {offsets = [1, 1], sizes = [16, 16], strides = [1, 1]} : vector<18x18xf32> to vector<16x16xf32>
    %884 = vector.broadcast %882 : f32 to vector<16x16xf32>
    %885 = arith.mulf %884, %883 : vector<16x16xf32>
    %886 = arith.addf %881, %885 : vector<16x16xf32>
    %c58_119 = arith.constant 58 : index
    %887 = memref.load %arg5[%c58_119] : memref<90xf32, #tpu.memory_space<smem>>
    %888 = vector.extract_strided_slice %861 {offsets = [1, 2], sizes = [16, 16], strides = [1, 1]} : vector<18x18xf32> to vector<16x16xf32>
    %889 = vector.broadcast %887 : f32 to vector<16x16xf32>
    %890 = arith.mulf %889, %888 : vector<16x16xf32>
    %891 = arith.addf %886, %890 : vector<16x16xf32>
    %c68_120 = arith.constant 68 : index
    %892 = memref.load %arg5[%c68_120] : memref<90xf32, #tpu.memory_space<smem>>
    %893 = vector.extract_strided_slice %861 {offsets = [2, 0], sizes = [16, 16], strides = [1, 1]} : vector<18x18xf32> to vector<16x16xf32>
    %894 = vector.broadcast %892 : f32 to vector<16x16xf32>
    %895 = arith.mulf %894, %893 : vector<16x16xf32>
    %896 = arith.addf %891, %895 : vector<16x16xf32>
    %c78_121 = arith.constant 78 : index
    %897 = memref.load %arg5[%c78_121] : memref<90xf32, #tpu.memory_space<smem>>
    %898 = vector.extract_strided_slice %861 {offsets = [2, 1], sizes = [16, 16], strides = [1, 1]} : vector<18x18xf32> to vector<16x16xf32>
    %899 = vector.broadcast %897 : f32 to vector<16x16xf32>
    %900 = arith.mulf %899, %898 : vector<16x16xf32>
    %901 = arith.addf %896, %900 : vector<16x16xf32>
    %c88_122 = arith.constant 88 : index
    %902 = memref.load %arg5[%c88_122] : memref<90xf32, #tpu.memory_space<smem>>
    %903 = vector.extract_strided_slice %861 {offsets = [2, 2], sizes = [16, 16], strides = [1, 1]} : vector<18x18xf32> to vector<16x16xf32>
    %904 = vector.broadcast %902 : f32 to vector<16x16xf32>
    %905 = arith.mulf %904, %903 : vector<16x16xf32>
    %906 = arith.addf %901, %905 : vector<16x16xf32>
    %cst_123 = arith.constant 0.000000e+00 : f32
    %907 = vector.broadcast %cst_123 : f32 to vector<18x18xf32>
    %c9 = arith.constant 9 : index
    %908 = memref.load %arg3[%c9] : memref<90xf32, #tpu.memory_space<smem>>
    %909 = vector.extract_strided_slice %4 {offsets = [0, 0], sizes = [18, 18], strides = [1, 1]} : vector<20x20xf32> to vector<18x18xf32>
    %910 = vector.broadcast %908 : f32 to vector<18x18xf32>
    %911 = arith.mulf %910, %909 : vector<18x18xf32>
    %912 = arith.addf %907, %911 : vector<18x18xf32>
    %c19 = arith.constant 19 : index
    %913 = memref.load %arg3[%c19] : memref<90xf32, #tpu.memory_space<smem>>
    %914 = vector.extract_strided_slice %4 {offsets = [0, 1], sizes = [18, 18], strides = [1, 1]} : vector<20x20xf32> to vector<18x18xf32>
    %915 = vector.broadcast %913 : f32 to vector<18x18xf32>
    %916 = arith.mulf %915, %914 : vector<18x18xf32>
    %917 = arith.addf %912, %916 : vector<18x18xf32>
    %c29 = arith.constant 29 : index
    %918 = memref.load %arg3[%c29] : memref<90xf32, #tpu.memory_space<smem>>
    %919 = vector.extract_strided_slice %4 {offsets = [0, 2], sizes = [18, 18], strides = [1, 1]} : vector<20x20xf32> to vector<18x18xf32>
    %920 = vector.broadcast %918 : f32 to vector<18x18xf32>
    %921 = arith.mulf %920, %919 : vector<18x18xf32>
    %922 = arith.addf %917, %921 : vector<18x18xf32>
    %c39 = arith.constant 39 : index
    %923 = memref.load %arg3[%c39] : memref<90xf32, #tpu.memory_space<smem>>
    %924 = vector.extract_strided_slice %4 {offsets = [1, 0], sizes = [18, 18], strides = [1, 1]} : vector<20x20xf32> to vector<18x18xf32>
    %925 = vector.broadcast %923 : f32 to vector<18x18xf32>
    %926 = arith.mulf %925, %924 : vector<18x18xf32>
    %927 = arith.addf %922, %926 : vector<18x18xf32>
    %c49 = arith.constant 49 : index
    %928 = memref.load %arg3[%c49] : memref<90xf32, #tpu.memory_space<smem>>
    %929 = vector.extract_strided_slice %4 {offsets = [1, 1], sizes = [18, 18], strides = [1, 1]} : vector<20x20xf32> to vector<18x18xf32>
    %930 = vector.broadcast %928 : f32 to vector<18x18xf32>
    %931 = arith.mulf %930, %929 : vector<18x18xf32>
    %932 = arith.addf %927, %931 : vector<18x18xf32>
    %c59 = arith.constant 59 : index
    %933 = memref.load %arg3[%c59] : memref<90xf32, #tpu.memory_space<smem>>
    %934 = vector.extract_strided_slice %4 {offsets = [1, 2], sizes = [18, 18], strides = [1, 1]} : vector<20x20xf32> to vector<18x18xf32>
    %935 = vector.broadcast %933 : f32 to vector<18x18xf32>
    %936 = arith.mulf %935, %934 : vector<18x18xf32>
    %937 = arith.addf %932, %936 : vector<18x18xf32>
    %c69 = arith.constant 69 : index
    %938 = memref.load %arg3[%c69] : memref<90xf32, #tpu.memory_space<smem>>
    %939 = vector.extract_strided_slice %4 {offsets = [2, 0], sizes = [18, 18], strides = [1, 1]} : vector<20x20xf32> to vector<18x18xf32>
    %940 = vector.broadcast %938 : f32 to vector<18x18xf32>
    %941 = arith.mulf %940, %939 : vector<18x18xf32>
    %942 = arith.addf %937, %941 : vector<18x18xf32>
    %c79 = arith.constant 79 : index
    %943 = memref.load %arg3[%c79] : memref<90xf32, #tpu.memory_space<smem>>
    %944 = vector.extract_strided_slice %4 {offsets = [2, 1], sizes = [18, 18], strides = [1, 1]} : vector<20x20xf32> to vector<18x18xf32>
    %945 = vector.broadcast %943 : f32 to vector<18x18xf32>
    %946 = arith.mulf %945, %944 : vector<18x18xf32>
    %947 = arith.addf %942, %946 : vector<18x18xf32>
    %c89 = arith.constant 89 : index
    %948 = memref.load %arg3[%c89] : memref<90xf32, #tpu.memory_space<smem>>
    %949 = vector.extract_strided_slice %4 {offsets = [2, 2], sizes = [18, 18], strides = [1, 1]} : vector<20x20xf32> to vector<18x18xf32>
    %950 = vector.broadcast %948 : f32 to vector<18x18xf32>
    %951 = arith.mulf %950, %949 : vector<18x18xf32>
    %952 = arith.addf %947, %951 : vector<18x18xf32>
    %c9_124 = arith.constant 9 : index
    %953 = memref.load %arg4[%c9_124] : memref<10xf32, #tpu.memory_space<smem>>
    %954 = vector.broadcast %953 : f32 to vector<18x18xf32>
    %955 = arith.addf %952, %954 : vector<18x18xf32>
    %cst_125 = arith.constant 0.000000e+00 : f32
    %956 = vector.broadcast %cst_125 : f32 to vector<18x18xf32>
    %957 = arith.maximumf %955, %956 : vector<18x18xf32>
    %cst_126 = arith.constant 0.000000e+00 : f32
    %958 = vector.broadcast %cst_126 : f32 to vector<18x18xf32>
    %959 = arith.select %23, %957, %958 : vector<18x18xi1>, vector<18x18xf32>
    %c9_127 = arith.constant 9 : index
    %960 = memref.load %arg5[%c9_127] : memref<90xf32, #tpu.memory_space<smem>>
    %961 = vector.extract_strided_slice %959 {offsets = [0, 0], sizes = [16, 16], strides = [1, 1]} : vector<18x18xf32> to vector<16x16xf32>
    %962 = vector.broadcast %960 : f32 to vector<16x16xf32>
    %963 = arith.mulf %962, %961 : vector<16x16xf32>
    %964 = arith.addf %906, %963 : vector<16x16xf32>
    %c19_128 = arith.constant 19 : index
    %965 = memref.load %arg5[%c19_128] : memref<90xf32, #tpu.memory_space<smem>>
    %966 = vector.extract_strided_slice %959 {offsets = [0, 1], sizes = [16, 16], strides = [1, 1]} : vector<18x18xf32> to vector<16x16xf32>
    %967 = vector.broadcast %965 : f32 to vector<16x16xf32>
    %968 = arith.mulf %967, %966 : vector<16x16xf32>
    %969 = arith.addf %964, %968 : vector<16x16xf32>
    %c29_129 = arith.constant 29 : index
    %970 = memref.load %arg5[%c29_129] : memref<90xf32, #tpu.memory_space<smem>>
    %971 = vector.extract_strided_slice %959 {offsets = [0, 2], sizes = [16, 16], strides = [1, 1]} : vector<18x18xf32> to vector<16x16xf32>
    %972 = vector.broadcast %970 : f32 to vector<16x16xf32>
    %973 = arith.mulf %972, %971 : vector<16x16xf32>
    %974 = arith.addf %969, %973 : vector<16x16xf32>
    %c39_130 = arith.constant 39 : index
    %975 = memref.load %arg5[%c39_130] : memref<90xf32, #tpu.memory_space<smem>>
    %976 = vector.extract_strided_slice %959 {offsets = [1, 0], sizes = [16, 16], strides = [1, 1]} : vector<18x18xf32> to vector<16x16xf32>
    %977 = vector.broadcast %975 : f32 to vector<16x16xf32>
    %978 = arith.mulf %977, %976 : vector<16x16xf32>
    %979 = arith.addf %974, %978 : vector<16x16xf32>
    %c49_131 = arith.constant 49 : index
    %980 = memref.load %arg5[%c49_131] : memref<90xf32, #tpu.memory_space<smem>>
    %981 = vector.extract_strided_slice %959 {offsets = [1, 1], sizes = [16, 16], strides = [1, 1]} : vector<18x18xf32> to vector<16x16xf32>
    %982 = vector.broadcast %980 : f32 to vector<16x16xf32>
    %983 = arith.mulf %982, %981 : vector<16x16xf32>
    %984 = arith.addf %979, %983 : vector<16x16xf32>
    %c59_132 = arith.constant 59 : index
    %985 = memref.load %arg5[%c59_132] : memref<90xf32, #tpu.memory_space<smem>>
    %986 = vector.extract_strided_slice %959 {offsets = [1, 2], sizes = [16, 16], strides = [1, 1]} : vector<18x18xf32> to vector<16x16xf32>
    %987 = vector.broadcast %985 : f32 to vector<16x16xf32>
    %988 = arith.mulf %987, %986 : vector<16x16xf32>
    %989 = arith.addf %984, %988 : vector<16x16xf32>
    %c69_133 = arith.constant 69 : index
    %990 = memref.load %arg5[%c69_133] : memref<90xf32, #tpu.memory_space<smem>>
    %991 = vector.extract_strided_slice %959 {offsets = [2, 0], sizes = [16, 16], strides = [1, 1]} : vector<18x18xf32> to vector<16x16xf32>
    %992 = vector.broadcast %990 : f32 to vector<16x16xf32>
    %993 = arith.mulf %992, %991 : vector<16x16xf32>
    %994 = arith.addf %989, %993 : vector<16x16xf32>
    %c79_134 = arith.constant 79 : index
    %995 = memref.load %arg5[%c79_134] : memref<90xf32, #tpu.memory_space<smem>>
    %996 = vector.extract_strided_slice %959 {offsets = [2, 1], sizes = [16, 16], strides = [1, 1]} : vector<18x18xf32> to vector<16x16xf32>
    %997 = vector.broadcast %995 : f32 to vector<16x16xf32>
    %998 = arith.mulf %997, %996 : vector<16x16xf32>
    %999 = arith.addf %994, %998 : vector<16x16xf32>
    %c89_135 = arith.constant 89 : index
    %1000 = memref.load %arg5[%c89_135] : memref<90xf32, #tpu.memory_space<smem>>
    %1001 = vector.extract_strided_slice %959 {offsets = [2, 2], sizes = [16, 16], strides = [1, 1]} : vector<18x18xf32> to vector<16x16xf32>
    %1002 = vector.broadcast %1000 : f32 to vector<16x16xf32>
    %1003 = arith.mulf %1002, %1001 : vector<16x16xf32>
    %1004 = arith.addf %999, %1003 : vector<16x16xf32>
    %c0_136 = arith.constant 0 : index
    %1005 = memref.load %arg6[%c0_136] : memref<1xf32, #tpu.memory_space<smem>>
    %1006 = vector.broadcast %1005 : f32 to vector<16x16xf32>
    %1007 = arith.addf %1004, %1006 : vector<16x16xf32>
    %1008 = arith.negf %1007 : vector<16x16xf32>
    %1009 = math.exp %1008 : vector<16x16xf32>
    %cst_137 = arith.constant 1.000000e+00 : f32
    %1010 = vector.broadcast %cst_137 : f32 to vector<16x16xf32>
    %1011 = arith.addf %1010, %1009 : vector<16x16xf32>
    %1012 = arith.divf %1010, %1011 : vector<16x16xf32>
    %c0_138 = arith.constant 0 : index
    %c0_139 = arith.constant 0 : index
    %c0_140 = arith.constant 0 : index
    %1013 = vector.load %arg7[%c0_138, %c0_139, %c0_140] : memref<1x16x16xf32, #tpu.memory_space<vmem>>, vector<1x16x16xf32>
    %1014 = vector.shape_cast %1013 : vector<1x16x16xf32> to vector<16x16xf32>
    %1015 = vector.shape_cast %1012 : vector<16x16xf32> to vector<1x16x16xf32>
    tpu.vector_store %arg7[%c0_138, %c0_139, %c0_140], %1015 {strides = array<i32>} : memref<1x16x16xf32, #tpu.memory_space<vmem>>, vector<1x16x16xf32>,
    return
  }
  func.func @transform_0(%arg0: i32, %arg1: i32) -> (i32, i32, i32) {
    %c0_i32 = arith.constant 0 : i32
    %c0_i32_0 = arith.constant 0 : i32
    %c0_i32_1 = arith.constant 0 : i32
    return %arg0, %c0_i32, %c0_i32_0 : i32, i32, i32
  }
  func.func @transform_1(%arg0: i32, %arg1: i32) -> i32 {
    %c0_i32 = arith.constant 0 : i32
    %c0_i32_0 = arith.constant 0 : i32
    return %c0_i32 : i32
  }
  func.func @transform_2(%arg0: i32, %arg1: i32) -> i32 {
    %c0_i32 = arith.constant 0 : i32
    %c0_i32_0 = arith.constant 0 : i32
    return %c0_i32 : i32
  }
  func.func @transform_3(%arg0: i32, %arg1: i32) -> i32 {
    %c0_i32 = arith.constant 0 : i32
    %c0_i32_0 = arith.constant 0 : i32
    return %c0_i32 : i32
  }
  func.func @transform_4(%arg0: i32, %arg1: i32) -> i32 {
    %c0_i32 = arith.constant 0 : i32
    %c0_i32_0 = arith.constant 0 : i32
    return %c0_i32 : i32
  }
  func.func @transform_5(%arg0: i32, %arg1: i32) -> (i32, i32, i32) {
    %c0_i32 = arith.constant 0 : i32
    %c0_i32_0 = arith.constant 0 : i32
    return %arg0, %arg1, %c0_i32 : i32, i32, i32
  }
}

</mosaic_0001>

<llo_original>
// kernel: tpu_custom_call.1
$region0: #{tpu_custom_call.1}
  #allocation0 [shape = 'u32[]', space=smem, size = 0x4, offset = 0x4, fixed_abs, tag = 'smem constant byte address 0x4 - core index']
  #allocation1 [shape = 'u32[72,128]{1,0:T(1,128)}', space=vmem, size = 0x9000, scoped, tag = 'internal scratch']
  #allocation2 [shape = 'f32[1]{0:T(128)S(6)}', space=smem, size = 0x200, scoped, tag = 'scoped memory for tpu_custom_call.1']
  %s0 = inlined_call_operand.vmem [shape: f32[2,20,20], index: 0, kind: input, shape index: {}]
  %s1 = inlined_call_operand.vmem [shape: f32[90], index: 1, kind: input, shape index: {}]
  %s2 = inlined_call_operand.vmem [shape: f32[10], index: 2, kind: input, shape index: {}]
  %s3 = inlined_call_operand.vmem [shape: f32[90], index: 3, kind: input, shape index: {}]
  %s4 = inlined_call_operand.<no memory space> [shape: f32[1], index: 4, kind: input, shape index: {}]
  %s5 = inlined_call_operand.hbm [shape: f32[2,16,16], index: 5, kind: output, shape index: {}]
  %s6 = sld [smem:[#allocation0]]
  $region65: #{tpu_custom_call.1} parent=0
    _
  %s8 = ssub.s32 1, %s6
  %s9 = scalar_select 0, %s8, %s6
  %10 = sst [smem:[#allocation2]] %s4
  $region1: #{tpu_custom_call.1} parent=0
    #allocation3 [shape = 'u8[512]{0}', space=smem, size = 0x200, scoped, tag = 'input window, operand 1, single buffered']
    #allocation4 [shape = 's32[2]{0}', space=sflag, size = 0x8, scoped, tag = 'scoped memory for tpu_custom_call.1']
    #allocation5 [shape = 's32[2]{0}', space=sflag, size = 0x8, scoped, tag = 'scoped memory for tpu_custom_call.1']
    #allocation6 [shape = 'u8[512]{0}', space=smem, size = 0x200, scoped, tag = 'input window, operand 2, single buffered']
    #allocation7 [shape = 's32[1]{0}', space=sflag, size = 0x4, scoped, tag = 'scoped memory for tpu_custom_call.1']
    #allocation8 [shape = 'u8[512]{0}', space=smem, size = 0x200, scoped, tag = 'input window, operand 3, single buffered']
    #allocation9 [shape = 'u8[16384]{0}', space=vmem, size = 0x4000, scoped, tag = 'output window, operand 0']
    %11 = vsyncpa [#allocation5], 0
    %12 = vsyncpa [#allocation7], 0
    %13 = vsyncpa [#allocation4], 0
    %s14 = scalar_lea.sflag [#allocation4], 1
    %15 = vsyncpa %s14, 0
    loop: start=0, step=1, limit=4
    $region2: #{tpu_custom_call.1} parent=1 // loop_pre_header
      _
    $region3: #{tpu_custom_call.1} parent=1 // loop_header
      %s17 = sphi 0, %s21
      %p18 = scmp.ge.s32.totalorder %s17, 4
      %s24 = sphi 0, %s36
      %s25 = sphi 0, %s32
      %s26 = sphi 0, %s24
      %s27 = sphi 0, %s25
      %s28 = sphi 0, %s26
      %s29 = sphi 0, %s27
      %s39 = sphi 0, %s41
      %s42 = sphi 0, %s39
      %s43 = sphi 0, %s42
      %s59 = sphi 0, %s43
      %s63 = sphi 0, %s63
      %s65 = sphi 0, %s63
      %s66 = sphi 0, %s65
      %s80 = sphi 0, %s66
      %s84 = sphi 0, %s84
      %s86 = sphi 0, %s84
      %s87 = sphi 0, %s86
      %s101 = sphi 0, %s87
      %s105 = sphi 0, %s105
      %s107 = sphi 0, %s105
      %s108 = sphi 0, %s107
      %s122 = sphi 0, %s108
      %s126 = sphi 0, %s126
      %s128 = sphi 0, %s126
      %s129 = sphi 0, %s128
      %s143 = sphi 0, %s129
      %s151 = sphi 0, %s153
      %s154 = sphi 0, %s151
      %s155 = sphi 0, %s154
      %s171 = sphi 0, %s155
    $region4: #{tpu_custom_call.1} parent=1 // loop_header_branch
      %20 = sbr.rel (%p18) target = $region8
    $region5: #{tpu_custom_call.1} parent=1 // loop_body
      %s22 = ssub.s32 %s17, 1
      %s23 = ssub.s32 %s17, 2
      %s30 = sadd.s32 1, %s25
      %p31 = scmp.ge.s32.totalorder %s30, 1
      %s32 = scalar_select %p31, 0, %s30
      %s33 = sadd.s32 1, %s24
      %s34 = scalar_select %p31, %s33, %s24
      %p35 = scmp.ge.s32.totalorder %s34, 2
      %s36 = scalar_select %p35, 0, %s34
      %s37 = ssub.s32 %s24, %s36
      %p38 = scmp.eq.s32.totalorder %s37, 0
      %s40 = sadd.s32 %s39, 1
      %s41 = scalar_select %p38, %s39, %s40
      %p44 = pneg %p38
      %p45 = scmp.eq.s32.totalorder %s17, 1
      %p46 = por %p44, %p45
      %p47 = scmp.ne.s32.totalorder %s39, %s42
      %p48 = scmp.eq.s32.totalorder %s17, 0
      %p49 = por %p47, %p48
      %p50 = scmp.ne.s32.totalorder %s39, %s42
      %p51 = scmp.eq.s32.totalorder %s22, 1
      %p52 = por %p50, %p51
      %p53 = scmp.ne.s32.totalorder %s42, %s43
      %p54 = scmp.eq.s32.totalorder %s22, 0
      %p55 = por %p53, %p54
      %p56 = scmp.ne.s32.totalorder %s42, %s43
      %p57 = scmp.eq.s32.totalorder %s23, 1
      %p58 = por %p56, %p57
      %p60 = scmp.ne.s32.totalorder %s43, %s59
      %p61 = scmp.eq.s32.totalorder %s23, 0
      %p62 = por %p60, %p61
      %s64 = sadd.s32 %s63, 1
      %p67 = scmp.eq.s32.totalorder %s17, 1
      %p68 = scmp.ne.s32.totalorder %s63, %s65
      %p69 = scmp.eq.s32.totalorder %s17, 0
      %p70 = por %p68, %p69
      %p71 = scmp.ne.s32.totalorder %s63, %s65
      %p72 = scmp.eq.s32.totalorder %s22, 1
      %p73 = por %p71, %p72
      %p74 = scmp.ne.s32.totalorder %s65, %s66
      %p75 = scmp.eq.s32.totalorder %s22, 0
      %p76 = por %p74, %p75
      %p77 = scmp.ne.s32.totalorder %s65, %s66
      %p78 = scmp.eq.s32.totalorder %s23, 1
      %p79 = por %p77, %p78
      %p81 = scmp.ne.s32.totalorder %s66, %s80
      %p82 = scmp.eq.s32.totalorder %s23, 0
      %p83 = por %p81, %p82
      %s85 = sadd.s32 %s84, 1
      %p88 = scmp.eq.s32.totalorder %s17, 1
      %p89 = scmp.ne.s32.totalorder %s84, %s86
      %p90 = scmp.eq.s32.totalorder %s17, 0
      %p91 = por %p89, %p90
      %p92 = scmp.ne.s32.totalorder %s84, %s86
      %p93 = scmp.eq.s32.totalorder %s22, 1
      %p94 = por %p92, %p93
      %p95 = scmp.ne.s32.totalorder %s86, %s87
      %p96 = scmp.eq.s32.totalorder %s22, 0
      %p97 = por %p95, %p96
      %p98 = scmp.ne.s32.totalorder %s86, %s87
      %p99 = scmp.eq.s32.totalorder %s23, 1
      %p100 = por %p98, %p99
      %p102 = scmp.ne.s32.totalorder %s87, %s101
      %p103 = scmp.eq.s32.totalorder %s23, 0
      %p104 = por %p102, %p103
      %s106 = sadd.s32 %s105, 1
      %p109 = scmp.eq.s32.totalorder %s17, 1
      %p110 = scmp.ne.s32.totalorder %s105, %s107
      %p111 = scmp.eq.s32.totalorder %s17, 0
      %p112 = por %p110, %p111
      %p113 = scmp.ne.s32.totalorder %s105, %s107
      %p114 = scmp.eq.s32.totalorder %s22, 1
      %p115 = por %p113, %p114
      %p116 = scmp.ne.s32.totalorder %s107, %s108
      %p117 = scmp.eq.s32.totalorder %s22, 0
      %p118 = por %p116, %p117
      %p119 = scmp.ne.s32.totalorder %s107, %s108
      %p120 = scmp.eq.s32.totalorder %s23, 1
      %p121 = por %p119, %p120
      %p123 = scmp.ne.s32.totalorder %s108, %s122
      %p124 = scmp.eq.s32.totalorder %s23, 0
      %p125 = por %p123, %p124
      %s127 = sadd.s32 %s126, 1
      %p130 = scmp.eq.s32.totalorder %s17, 1
      %p131 = scmp.ne.s32.totalorder %s126, %s128
      %p132 = scmp.eq.s32.totalorder %s17, 0
      %p133 = por %p131, %p132
      %p134 = scmp.ne.s32.totalorder %s126, %s128
      %p135 = scmp.eq.s32.totalorder %s22, 1
      %p136 = por %p134, %p135
      %p137 = scmp.ne.s32.totalorder %s128, %s129
      %p138 = scmp.eq.s32.totalorder %s22, 0
      %p139 = por %p137, %p138
      %p140 = scmp.ne.s32.totalorder %s128, %s129
      %p141 = scmp.eq.s32.totalorder %s23, 1
      %p142 = por %p140, %p141
      %p144 = scmp.ne.s32.totalorder %s129, %s143
      %p145 = scmp.eq.s32.totalorder %s23, 0
      %p146 = por %p144, %p145
      %s147 = ssub.s32 %s24, %s36
      %s148 = ssub.s32 %s25, %s32
      %s149 = sor.u32 %s147, %s148
      %p150 = scmp.eq.s32.totalorder %s149, 0
      %s152 = sadd.s32 %s151, 1
      %s153 = scalar_select %p150, %s151, %s152
      %p156 = pneg %p150
      %p157 = scmp.eq.s32.totalorder %s17, 1
      %p158 = por %p156, %p157
      %p159 = scmp.ne.s32.totalorder %s151, %s154
      %p160 = scmp.eq.s32.totalorder %s17, 0
      %p161 = por %p159, %p160
      %p162 = scmp.ne.s32.totalorder %s151, %s154
      %p163 = scmp.eq.s32.totalorder %s22, 1
      %p164 = por %p162, %p163
      %p165 = scmp.ne.s32.totalorder %s154, %s155
      %p166 = scmp.eq.s32.totalorder %s22, 0
      %p167 = por %p165, %p166
      %p168 = scmp.ne.s32.totalorder %s154, %s155
      %p169 = scmp.eq.s32.totalorder %s23, 1
      %p170 = por %p168, %p169
      %p172 = scmp.ne.s32.totalorder %s155, %s171
      %p173 = scmp.eq.s32.totalorder %s23, 0
      %p174 = por %p172, %p173
      %p175 = scmp.le.s32.totalorder 1, %s17
      %p176 = scmp.lt.s32.totalorder %s17, 3
      %p177 = pnand %p175, %p176
      %p178 = pneg %p177
      // Predicated region
      $region9: #{tpu_custom_call.1} parent=5 // pred_check
        _
      $region10: #{tpu_custom_call.1} parent=5 // pred_check_branch
        %180 = sbr.rel (%p177) target = $region12
      $region11: #{tpu_custom_call.1} parent=5 // pred_region
        %s181 = ssub.s32 %s17, 1
        // Predicated region
        $region13: #{tpu_custom_call.1} parent=11 // pred_check
          %p182 = pneg %p76
        $region14: #{tpu_custom_call.1} parent=11 // pred_check_branch
          %184 = sbr.rel (%p182) target = $region16
        $region15: #{tpu_custom_call.1} parent=11 // pred_region
          %186 = vsyncadd [#allocation5], 0
          %s188 = sshll.u32 %s1, 4
          %s189 = int_to_ptr.vmem [resolvable:$true] %s188
          %191 = dma.vmem_to_smem %s189, 16, [#allocation3], [#allocation5]
        $region16: #{tpu_custom_call.1} parent=11 // pred_fallthru
          _
        // Predicated region
        $region17: #{tpu_custom_call.1} parent=11 // pred_check
          %p192 = pneg %p97
        $region18: #{tpu_custom_call.1} parent=11 // pred_check_branch
          %194 = sbr.rel (%p192) target = $region20
        $region19: #{tpu_custom_call.1} parent=11 // pred_region
          %196 = vsyncadd [#allocation7], 0
          %s198 = sshll.u32 %s2, 4
          %s199 = int_to_ptr.vmem [resolvable:$true] %s198
          %201 = dma.vmem_to_smem %s199, 16, [#allocation6], [#allocation7]
        $region20: #{tpu_custom_call.1} parent=11 // pred_fallthru
          _
        // Predicated region
        $region21: #{tpu_custom_call.1} parent=11 // pred_check
          %p202 = pneg %p118
        $region22: #{tpu_custom_call.1} parent=11 // pred_check_branch
          %204 = sbr.rel (%p202) target = $region24
        $region23: #{tpu_custom_call.1} parent=11 // pred_region
          %206 = vsyncadd [#allocation7], 0
          %s208 = sshll.u32 %s3, 4
          %s209 = int_to_ptr.vmem [resolvable:$true] %s208
          %211 = dma.vmem_to_smem %s209, 16, [#allocation8], [#allocation7]
        $region24: #{tpu_custom_call.1} parent=11 // pred_fallthru
          _
        // Predicated region
        $region25: #{tpu_custom_call.1} parent=11 // pred_check
          %p212 = pneg %p139
        $region26: #{tpu_custom_call.1} parent=11 // pred_check_branch
          %214 = sbr.rel (%p212) target = $region28
        $region27: #{tpu_custom_call.1} parent=11 // pred_region
          _
        $region28: #{tpu_custom_call.1} parent=11 // pred_fallthru
          _
      $region12: #{tpu_custom_call.1} parent=5 // pred_fallthru
        _
      %p215 = scmp.lt.s32.totalorder %s17, 2
      // Predicated region
      $region29: #{tpu_custom_call.1} parent=5 // pred_check
        %p216 = pneg %p215
      $region30: #{tpu_custom_call.1} parent=5 // pred_check_branch
        %218 = sbr.rel (%p216) target = $region32
      $region31: #{tpu_custom_call.1} parent=5 // pred_region
        // Predicated region
        $region33: #{tpu_custom_call.1} parent=31 // pred_check
          %p219 = pneg %p49
        $region34: #{tpu_custom_call.1} parent=31 // pred_check_branch
          %221 = sbr.rel (%p219) target = $region36
        $region35: #{tpu_custom_call.1} parent=31 // pred_region
          %p222 = scmp.lt.s32.totalorder %s24, 1
          %s223 = scalar_select %p222, %s24, 1
          %s224 = smul.addr %s223, 3
          %s225 = smul.addr %s224, 8
          %s226 = scalar_lea.vmem %s0, %s225
        $region36: #{tpu_custom_call.1} parent=31 // pred_fallthru
          _
      $region32: #{tpu_custom_call.1} parent=5 // pred_fallthru
        _
      %p227 = scmp.le.s32.totalorder 1, %s17
      %p228 = scmp.lt.s32.totalorder %s17, 3
      %p229 = pnand %p227, %p228
      %p230 = pneg %p229
      // Predicated region
      $region37: #{tpu_custom_call.1} parent=5 // pred_check
        _
      $region38: #{tpu_custom_call.1} parent=5 // pred_check_branch
        %232 = sbr.rel (%p229) target = $region40
      $region39: #{tpu_custom_call.1} parent=5 // pred_region
        %s233 = ssub.s32 %s17, 1
        // Predicated region
        $region41: #{tpu_custom_call.1} parent=39 // pred_check
          %p234 = pneg %p76
        $region42: #{tpu_custom_call.1} parent=39 // pred_check_branch
          %236 = sbr.rel (%p234) target = $region44
        $region43: #{tpu_custom_call.1} parent=39 // pred_region
          %238 = dma.done [#allocation5], 16
        $region44: #{tpu_custom_call.1} parent=39 // pred_fallthru
          _
        // Predicated region
        $region45: #{tpu_custom_call.1} parent=39 // pred_check
          %p239 = pneg %p97
        $region46: #{tpu_custom_call.1} parent=39 // pred_check_branch
          %241 = sbr.rel (%p239) target = $region48
        $region47: #{tpu_custom_call.1} parent=39 // pred_region
          %243 = dma.done [#allocation7], 16
        $region48: #{tpu_custom_call.1} parent=39 // pred_fallthru
          _
        // Predicated region
        $region49: #{tpu_custom_call.1} parent=39 // pred_check
          %p244 = pneg %p118
        $region50: #{tpu_custom_call.1} parent=39 // pred_check_branch
          %246 = sbr.rel (%p244) target = $region52
        $region51: #{tpu_custom_call.1} parent=39 // pred_region
          %248 = dma.done [#allocation7], 16
        $region52: #{tpu_custom_call.1} parent=39 // pred_fallthru
          _
        %249 = sfence
        %p250 = scmp.lt.s32.totalorder %s26, 1
        %s251 = scalar_select %p250, %s26, 1
        %s252 = smul.addr %s251, 3
        %s253 = smul.addr %s252, 8
        %s254 = scalar_lea.vmem %s0, %s253
        %p255 = pneg %p55
        %p256 = pneg %p52
        %p257 = pneg %p76
        %p258 = pneg %p73
        %p259 = pneg %p97
        %p260 = pneg %p94
        %p261 = pneg %p118
        %p262 = pneg %p115
        %p263 = pneg %p139
        %p264 = pneg %p136
        %p265 = pneg %p167
        %p266 = pneg %p164
        %s267 = sand.u32 %s154, 1
        %s268 = scalar_lea.sflag [#allocation4], %s267
        %s269 = sand.u32 %s154, 1
        %s270 = smul.addr %s269, 16
        %s271 = scalar_lea.vmem [#allocation9], %s270
        %p272 = scmp.lt.s32.totalorder %s26, 1
        %s273 = scalar_select %p272, %s26, 1
        %s274 = smul.addr %s273, 3
        %s275 = smul.addr %s274, 8
        %s276 = scalar_lea.vmem %s0, %s275
        %s277 = smul.u32 2, %s27
        %s278 = smul.u32 %s27, 16
        %s279 = scalar_lea.vmem %s276, %s278
        %v280 = vld [vmem:[%s279] sm:$0xff]
        %v281 = vld [vmem:[%s279 + $0x8] sm:$0xff]
        %v282 = vld [vmem:[%s279 + $0x10] sm:$0xf]
        %s283 = ssub.s32 %s278, 1
        %v284 = vlaneseq
        %v285 = vshrl.u32 %v284, 7
        %v286 = vadd.s32 %v285, 8
        %v287 = vadd.s32 %v285, 16
        %v288 = vstv %s283
        %v289 = vadd.s32 %v288, %v285
        %v290 = vadd.s32 %v288, %v286
        %v291 = vadd.s32 %v288, %v287
        %v292 = vlaneseq
        %v293 = vand.u32 %v292, 127
        %v294 = vadd.s32 %v293, 4294967295
        %vm295 = vcmp.ge.s32.totalorder %v289, 0
        %vm296 = vcmp.ge.s32.totalorder %v290, 0
        %vm297 = vcmp.ge.s32.totalorder %v291, 0
        %vm298 = vcmp.lt.s32.totalorder %v289, 16
        %vm299 = vcmp.lt.s32.totalorder %v290, 16
        %vm300 = vcmp.lt.s32.totalorder %v291, 16
        %vm301 = vmand %vm295, %vm298
        %vm302 = vmand %vm296, %vm299
        %vm303 = vmand %vm297, %vm300
        %vm304 = vcmp.ge.s32.totalorder %v294, 0
        %vm305 = vmand %vm301, %vm304
        %vm306 = vmand %vm302, %vm304
        %vm307 = vmand %vm303, %vm304
        %vm308 = vcmp.lt.s32.totalorder %v294, 16
        %vm309 = vmand %vm305, %vm308
        %vm310 = vmand %vm306, %vm308
        %vm311 = vmand %vm307, %vm308
        %s312 = sld [smem:[#allocation3]]
        %v313 = vstv %s312
        %v314 = vmul.f32 %v313, %v280
        %v315 = vmul.f32 %v313, %v281
        %v316 = vmul.f32 %v313, %v282
        %v317 = vadd.f32 %v314, 0.0
        %v318 = vadd.f32 %v315, 0.0
        %v319 = vadd.f32 %v316, 0.0
        %s320 = sld [smem:[#allocation3 + $0xa]]
        %v321 = vstv %s320
        %v322 = vmul.f32 %v321, %v280
        %v323 = vmul.f32 %v321, %v281
        %v324 = vmul.f32 %v321, %v282
        %328 = vrot.lane.b32.xlu0 %v322, 127
        %v329 = vpop.permute.xlu0 %328
        %330 = vrot.lane.b32.xlu0 %v323, 127
        %v331 = vpop.permute.xlu0 %330
        %332 = vrot.lane.b32.xlu0 %v324, 127
        %v333 = vpop.permute.xlu0 %332
        %v337 = vadd.f32 %v317, %v329
        %v338 = vadd.f32 %v318, %v331
        %v339 = vadd.f32 %v319, %v333
        %s340 = sld [smem:[#allocation3 + $0x14]]
        %v341 = vstv %s340
        %v342 = vmul.f32 %v341, %v280
        %v343 = vmul.f32 %v341, %v281
        %v344 = vmul.f32 %v341, %v282
        %348 = vrot.lane.b32.xlu0 %v342, 126
        %v349 = vpop.permute.xlu0 %348
        %350 = vrot.lane.b32.xlu0 %v343, 126
        %v351 = vpop.permute.xlu0 %350
        %352 = vrot.lane.b32.xlu0 %v344, 126
        %v353 = vpop.permute.xlu0 %352
        %v357 = vadd.f32 %v337, %v349
        %v358 = vadd.f32 %v338, %v351
        %v359 = vadd.f32 %v339, %v353
        %s360 = sld [smem:[#allocation3 + $0x1e]]
        %v361 = vstv %s360
        %v362 = vmul.f32 %v361, %v280
        %v363 = vmul.f32 %v361, %v281
        %v364 = vmul.f32 %v361, %v282
        %vm368 = vcmask 1046528
        %v369 = vrot.slane %v362, 1
        %v370 = vrot.slane %v363, 1
        %v371 = vsel %vm368, %v369, %v370
        %v372 = vrot.slane %v364, 1
        %v373 = vsel %vm368, %v370, %v372
        %v377 = vadd.f32 %v357, %v371
        %v378 = vadd.f32 %v358, %v373
        %v379 = vadd.f32 %v359, %v372
        %s380 = sld [smem:[#allocation3 + $0x28]]
        %v381 = vstv %s380
        %v382 = vmul.f32 %v381, %v280
        %v383 = vmul.f32 %v381, %v281
        %v384 = vmul.f32 %v381, %v282
        %v388 = vrot.slane %v382, 1
        %v389 = vrot.slane %v383, 1
        %v390 = vsel %vm368, %v388, %v389
        %v391 = vrot.slane %v384, 1
        %v392 = vsel %vm368, %v389, %v391
        %393 = vrot.lane.b32.xlu0 %v390, 127
        %v394 = vpop.permute.xlu0 %393
        %395 = vrot.lane.b32.xlu0 %v392, 127
        %v396 = vpop.permute.xlu0 %395
        %397 = vrot.lane.b32.xlu0 %v391, 127
        %v398 = vpop.permute.xlu0 %397
        %v402 = vadd.f32 %v377, %v394
        %v403 = vadd.f32 %v378, %v396
        %v404 = vadd.f32 %v379, %v398
        %s405 = sld [smem:[#allocation3 + $0x32]]
        %v406 = vstv %s405
        %v407 = vmul.f32 %v406, %v280
        %v408 = vmul.f32 %v406, %v281
        %v409 = vmul.f32 %v406, %v282
        %v413 = vrot.slane %v407, 1
        %v414 = vrot.slane %v408, 1
        %v415 = vsel %vm368, %v413, %v414
        %v416 = vrot.slane %v409, 1
        %v417 = vsel %vm368, %v414, %v416
        %418 = vrot.lane.b32.xlu0 %v415, 126
        %v419 = vpop.permute.xlu0 %418
        %420 = vrot.lane.b32.xlu0 %v417, 126
        %v421 = vpop.permute.xlu0 %420
        %422 = vrot.lane.b32.xlu0 %v416, 126
        %v423 = vpop.permute.xlu0 %422
        %v427 = vadd.f32 %v402, %v419
        %v428 = vadd.f32 %v403, %v421
        %v429 = vadd.f32 %v404, %v423
        %s430 = sld [smem:[#allocation3 + $0x3c]]
        %v431 = vstv %s430
        %v432 = vmul.f32 %v431, %v280
        %v433 = vmul.f32 %v431, %v281
        %v434 = vmul.f32 %v431, %v282
        %vm438 = vcmask 1045504
        %v439 = vrot.slane %v432, 2
        %v440 = vrot.slane %v433, 2
        %v441 = vsel %vm438, %v439, %v440
        %v442 = vrot.slane %v434, 2
        %v443 = vsel %vm438, %v440, %v442
        %v447 = vadd.f32 %v427, %v441
        %v448 = vadd.f32 %v428, %v443
        %v449 = vadd.f32 %v429, %v442
        %s450 = sld [smem:[#allocation3 + $0x46]]
        %v451 = vstv %s450
        %v452 = vmul.f32 %v451, %v280
        %v453 = vmul.f32 %v451, %v281
        %v454 = vmul.f32 %v451, %v282
        %v458 = vrot.slane %v452, 2
        %v459 = vrot.slane %v453, 2
        %v460 = vsel %vm438, %v458, %v459
        %v461 = vrot.slane %v454, 2
        %v462 = vsel %vm438, %v459, %v461
        %463 = vrot.lane.b32.xlu0 %v460, 127
        %v464 = vpop.permute.xlu0 %463
        %465 = vrot.lane.b32.xlu0 %v462, 127
        %v466 = vpop.permute.xlu0 %465
        %467 = vrot.lane.b32.xlu0 %v461, 127
        %v468 = vpop.permute.xlu0 %467
        %v472 = vadd.f32 %v447, %v464
        %v473 = vadd.f32 %v448, %v466
        %v474 = vadd.f32 %v449, %v468
        %s475 = sld [smem:[#allocation3 + $0x50]]
        %v476 = vstv %s475
        %v477 = vmul.f32 %v476, %v280
        %v478 = vmul.f32 %v476, %v281
        %v479 = vmul.f32 %v476, %v282
        %v483 = vrot.slane %v477, 2
        %v484 = vrot.slane %v478, 2
        %v485 = vsel %vm438, %v483, %v484
        %v486 = vrot.slane %v479, 2
        %v487 = vsel %vm438, %v484, %v486
        %488 = vrot.lane.b32.xlu0 %v485, 126
        %v489 = vpop.permute.xlu0 %488
        %490 = vrot.lane.b32.xlu0 %v487, 126
        %v491 = vpop.permute.xlu0 %490
        %492 = vrot.lane.b32.xlu0 %v486, 126
        %v493 = vpop.permute.xlu0 %492
        %v497 = vadd.f32 %v472, %v489
        %v498 = vadd.f32 %v473, %v491
        %v499 = vadd.f32 %v474, %v493
        %s500 = sld [smem:[#allocation6]]
        %v501 = vstv %s500
        %v502 = vadd.f32 %v497, %v501
        %v503 = vadd.f32 %v498, %v501
        %v504 = vadd.f32 %v499, %v501
        %v505 = vmax.f32 %v502, 0.0
        %v506 = vmax.f32 %v503, 0.0
        %v507 = vmax.f32 %v504, 0.0
        %v508 = vsel %vm309, %v505, 0.0
        %v509 = vsel %vm310, %v506, 0.0
        %v510 = vsel %vm311, %v507, 0.0
        %s511 = sld [smem:[#allocation8]]
        %v512 = vstv %s511
        %v513 = vmul.f32 %v512, %v508
        %v514 = vmul.f32 %v512, %v509
        %v515 = vadd.f32 %v513, 0.0
        %v516 = vadd.f32 %v514, 0.0
        %s517 = sld [smem:[#allocation8 + $0xa]]
        %v518 = vstv %s517
        %v519 = vmul.f32 %v518, %v508
        %v520 = vmul.f32 %v518, %v509
        %523 = vrot.lane.b32.xlu0 %v519, 127
        %v524 = vpop.permute.xlu0 %523
        %525 = vrot.lane.b32.xlu0 %v520, 127
        %v526 = vpop.permute.xlu0 %525
        %v529 = vadd.f32 %v515, %v524
        %v530 = vadd.f32 %v516, %v526
        %s531 = sld [smem:[#allocation8 + $0x14]]
        %v532 = vstv %s531
        %v533 = vmul.f32 %v532, %v508
        %v534 = vmul.f32 %v532, %v509
        %537 = vrot.lane.b32.xlu0 %v533, 126
        %v538 = vpop.permute.xlu0 %537
        %539 = vrot.lane.b32.xlu0 %v534, 126
        %v540 = vpop.permute.xlu0 %539
        %v543 = vadd.f32 %v529, %v538
        %v544 = vadd.f32 %v530, %v540
        %s545 = sld [smem:[#allocation8 + $0x1e]]
        %v546 = vstv %s545
        %v547 = vmul.f32 %v546, %v508
        %v548 = vmul.f32 %v546, %v509
        %v549 = vmul.f32 %v546, %v510
        %v553 = vrot.slane %v547, 1
        %v554 = vrot.slane %v548, 1
        %v555 = vsel %vm368, %v553, %v554
        %v556 = vrot.slane %v549, 1
        %v557 = vsel %vm368, %v554, %v556
        %v560 = vadd.f32 %v543, %v555
        %v561 = vadd.f32 %v544, %v557
        %s562 = sld [smem:[#allocation8 + $0x28]]
        %v563 = vstv %s562
        %v564 = vmul.f32 %v563, %v508
        %v565 = vmul.f32 %v563, %v509
        %v566 = vmul.f32 %v563, %v510
        %v570 = vrot.slane %v564, 1
        %v571 = vrot.slane %v565, 1
        %v572 = vsel %vm368, %v570, %v571
        %v573 = vrot.slane %v566, 1
        %v574 = vsel %vm368, %v571, %v573
        %575 = vrot.lane.b32.xlu0 %v572, 127
        %v576 = vpop.permute.xlu0 %575
        %577 = vrot.lane.b32.xlu0 %v574, 127
        %v578 = vpop.permute.xlu0 %577
        %v581 = vadd.f32 %v560, %v576
        %v582 = vadd.f32 %v561, %v578
        %s583 = sld [smem:[#allocation8 + $0x32]]
        %v584 = vstv %s583
        %v585 = vmul.f32 %v584, %v508
        %v586 = vmul.f32 %v584, %v509
        %v587 = vmul.f32 %v584, %v510
        %v591 = vrot.slane %v585, 1
        %v592 = vrot.slane %v586, 1
        %v593 = vsel %vm368, %v591, %v592
        %v594 = vrot.slane %v587, 1
        %v595 = vsel %vm368, %v592, %v594
        %596 = vrot.lane.b32.xlu0 %v593, 126
        %v597 = vpop.permute.xlu0 %596
        %598 = vrot.lane.b32.xlu0 %v595, 126
        %v599 = vpop.permute.xlu0 %598
        %v602 = vadd.f32 %v581, %v597
        %v603 = vadd.f32 %v582, %v599
        %s604 = sld [smem:[#allocation8 + $0x3c]]
        %v605 = vstv %s604
        %v606 = vmul.f32 %v605, %v508
        %v607 = vmul.f32 %v605, %v509
        %v608 = vmul.f32 %v605, %v510
        %v612 = vrot.slane %v606, 2
        %v613 = vrot.slane %v607, 2
        %v614 = vsel %vm438, %v612, %v613
        %v615 = vrot.slane %v608, 2
        %v616 = vsel %vm438, %v613, %v615
        %v619 = vadd.f32 %v602, %v614
        %v620 = vadd.f32 %v603, %v616
        %s621 = sld [smem:[#allocation8 + $0x46]]
        %v622 = vstv %s621
        %v623 = vmul.f32 %v622, %v508
        %v624 = vmul.f32 %v622, %v509
        %v625 = vmul.f32 %v622, %v510
        %v629 = vrot.slane %v623, 2
        %v630 = vrot.slane %v624, 2
        %v631 = vsel %vm438, %v629, %v630
        %v632 = vrot.slane %v625, 2
        %v633 = vsel %vm438, %v630, %v632
        %634 = vrot.lane.b32.xlu0 %v631, 127
        %v635 = vpop.permute.xlu0 %634
        %636 = vrot.lane.b32.xlu0 %v633, 127
        %v637 = vpop.permute.xlu0 %636
        %v640 = vadd.f32 %v619, %v635
        %v641 = vadd.f32 %v620, %v637
        %s642 = sld [smem:[#allocation8 + $0x50]]
        %v643 = vstv %s642
        %v644 = vmul.f32 %v643, %v508
        %v645 = vmul.f32 %v643, %v509
        %v646 = vmul.f32 %v643, %v510
        %v650 = vrot.slane %v644, 2
        %v651 = vrot.slane %v645, 2
        %v652 = vsel %vm438, %v650, %v651
        %v653 = vrot.slane %v646, 2
        %v654 = vsel %vm438, %v651, %v653
        %655 = vrot.lane.b32.xlu0 %v652, 126
        %v656 = vpop.permute.xlu0 %655
        %657 = vrot.lane.b32.xlu0 %v654, 126
        %v658 = vpop.permute.xlu0 %657
        %v661 = vadd.f32 %v640, %v656
        %v662 = vadd.f32 %v641, %v658
        %s663 = sld [smem:[#allocation3 + $0x1]]
        %v664 = vstv %s663
        %v665 = vmul.f32 %v664, %v280
        %v666 = vmul.f32 %v664, %v281
        %v667 = vmul.f32 %v664, %v282
        %v668 = vadd.f32 %v665, 0.0
        %v669 = vadd.f32 %v666, 0.0
        %v670 = vadd.f32 %v667, 0.0
        %s671 = sld [smem:[#allocation3 + $0xb]]
        %v672 = vstv %s671
        %v673 = vmul.f32 %v672, %v280
        %v674 = vmul.f32 %v672, %v281
        %v675 = vmul.f32 %v672, %v282
        %679 = vrot.lane.b32.xlu0 %v673, 127
        %v680 = vpop.permute.xlu0 %679
        %681 = vrot.lane.b32.xlu0 %v674, 127
        %v682 = vpop.permute.xlu0 %681
        %683 = vrot.lane.b32.xlu0 %v675, 127
        %v684 = vpop.permute.xlu0 %683
        %v688 = vadd.f32 %v668, %v680
        %v689 = vadd.f32 %v669, %v682
        %v690 = vadd.f32 %v670, %v684
        %s691 = sld [smem:[#allocation3 + $0x15]]
        %v692 = vstv %s691
        %v693 = vmul.f32 %v692, %v280
        %v694 = vmul.f32 %v692, %v281
        %v695 = vmul.f32 %v692, %v282
        %699 = vrot.lane.b32.xlu0 %v693, 126
        %v700 = vpop.permute.xlu0 %699
        %701 = vrot.lane.b32.xlu0 %v694, 126
        %v702 = vpop.permute.xlu0 %701
        %703 = vrot.lane.b32.xlu0 %v695, 126
        %v704 = vpop.permute.xlu0 %703
        %v708 = vadd.f32 %v688, %v700
        %v709 = vadd.f32 %v689, %v702
        %v710 = vadd.f32 %v690, %v704
        %s711 = sld [smem:[#allocation3 + $0x1f]]
        %v712 = vstv %s711
        %v713 = vmul.f32 %v712, %v280
        %v714 = vmul.f32 %v712, %v281
        %v715 = vmul.f32 %v712, %v282
        %v719 = vrot.slane %v713, 1
        %v720 = vrot.slane %v714, 1
        %v721 = vsel %vm368, %v719, %v720
        %v722 = vrot.slane %v715, 1
        %v723 = vsel %vm368, %v720, %v722
        %v727 = vadd.f32 %v708, %v721
        %v728 = vadd.f32 %v709, %v723
        %v729 = vadd.f32 %v710, %v722
        %s730 = sld [smem:[#allocation3 + $0x29]]
        %v731 = vstv %s730
        %v732 = vmul.f32 %v731, %v280
        %v733 = vmul.f32 %v731, %v281
        %v734 = vmul.f32 %v731, %v282
        %v738 = vrot.slane %v732, 1
        %v739 = vrot.slane %v733, 1
        %v740 = vsel %vm368, %v738, %v739
        %v741 = vrot.slane %v734, 1
        %v742 = vsel %vm368, %v739, %v741
        %743 = vrot.lane.b32.xlu0 %v740, 127
        %v744 = vpop.permute.xlu0 %743
        %745 = vrot.lane.b32.xlu0 %v742, 127
        %v746 = vpop.permute.xlu0 %745
        %747 = vrot.lane.b32.xlu0 %v741, 127
        %v748 = vpop.permute.xlu0 %747
        %v752 = vadd.f32 %v727, %v744
        %v753 = vadd.f32 %v728, %v746
        %v754 = vadd.f32 %v729, %v748
        %s755 = sld [smem:[#allocation3 + $0x33]]
        %v756 = vstv %s755
        %v757 = vmul.f32 %v756, %v280
        %v758 = vmul.f32 %v756, %v281
        %v759 = vmul.f32 %v756, %v282
        %v763 = vrot.slane %v757, 1
        %v764 = vrot.slane %v758, 1
        %v765 = vsel %vm368, %v763, %v764
        %v766 = vrot.slane %v759, 1
        %v767 = vsel %vm368, %v764, %v766
        %768 = vrot.lane.b32.xlu0 %v765, 126
        %v769 = vpop.permute.xlu0 %768
        %770 = vrot.lane.b32.xlu0 %v767, 126
        %v771 = vpop.permute.xlu0 %770
        %772 = vrot.lane.b32.xlu0 %v766, 126
        %v773 = vpop.permute.xlu0 %772
        %v777 = vadd.f32 %v752, %v769
        %v778 = vadd.f32 %v753, %v771
        %v779 = vadd.f32 %v754, %v773
        %s780 = sld [smem:[#allocation3 + $0x3d]]
        %v781 = vstv %s780
        %v782 = vmul.f32 %v781, %v280
        %v783 = vmul.f32 %v781, %v281
        %v784 = vmul.f32 %v781, %v282
        %v788 = vrot.slane %v782, 2
        %v789 = vrot.slane %v783, 2
        %v790 = vsel %vm438, %v788, %v789
        %v791 = vrot.slane %v784, 2
        %v792 = vsel %vm438, %v789, %v791
        %v796 = vadd.f32 %v777, %v790
        %v797 = vadd.f32 %v778, %v792
        %v798 = vadd.f32 %v779, %v791
        %s799 = sld [smem:[#allocation3 + $0x47]]
        %v800 = vstv %s799
        %v801 = vmul.f32 %v800, %v280
        %v802 = vmul.f32 %v800, %v281
        %v803 = vmul.f32 %v800, %v282
        %v807 = vrot.slane %v801, 2
        %v808 = vrot.slane %v802, 2
        %v809 = vsel %vm438, %v807, %v808
        %v810 = vrot.slane %v803, 2
        %v811 = vsel %vm438, %v808, %v810
        %812 = vrot.lane.b32.xlu0 %v809, 127
        %v813 = vpop.permute.xlu0 %812
        %814 = vrot.lane.b32.xlu0 %v811, 127
        %v815 = vpop.permute.xlu0 %814
        %816 = vrot.lane.b32.xlu0 %v810, 127
        %v817 = vpop.permute.xlu0 %816
        %v821 = vadd.f32 %v796, %v813
        %v822 = vadd.f32 %v797, %v815
        %v823 = vadd.f32 %v798, %v817
        %s824 = sld [smem:[#allocation3 + $0x51]]
        %v825 = vstv %s824
        %v826 = vmul.f32 %v825, %v280
        %v827 = vmul.f32 %v825, %v281
        %v828 = vmul.f32 %v825, %v282
        %v832 = vrot.slane %v826, 2
        %v833 = vrot.slane %v827, 2
        %v834 = vsel %vm438, %v832, %v833
        %v835 = vrot.slane %v828, 2
        %v836 = vsel %vm438, %v833, %v835
        %837 = vrot.lane.b32.xlu0 %v834, 126
        %v838 = vpop.permute.xlu0 %837
        %839 = vrot.lane.b32.xlu0 %v836, 126
        %v840 = vpop.permute.xlu0 %839
        %841 = vrot.lane.b32.xlu0 %v835, 126
        %v842 = vpop.permute.xlu0 %841
        %v846 = vadd.f32 %v821, %v838
        %v847 = vadd.f32 %v822, %v840
        %v848 = vadd.f32 %v823, %v842
        %s849 = sld [smem:[#allocation6 + $0x1]]
        %v850 = vstv %s849
        %v851 = vadd.f32 %v846, %v850
        %v852 = vadd.f32 %v847, %v850
        %v853 = vadd.f32 %v848, %v850
        %v854 = vmax.f32 %v851, 0.0
        %v855 = vmax.f32 %v852, 0.0
        %v856 = vmax.f32 %v853, 0.0
        %v857 = vsel %vm309, %v854, 0.0
        %v858 = vsel %vm310, %v855, 0.0
        %v859 = vsel %vm311, %v856, 0.0
        %s860 = sld [smem:[#allocation8 + $0x1]]
        %v861 = vstv %s860
        %v862 = vmul.f32 %v861, %v857
        %v863 = vmul.f32 %v861, %v858
        %v864 = vadd.f32 %v661, %v862
        %v865 = vadd.f32 %v662, %v863
        %s866 = sld [smem:[#allocation8 + $0xb]]
        %v867 = vstv %s866
        %v868 = vmul.f32 %v867, %v857
        %v869 = vmul.f32 %v867, %v858
        %872 = vrot.lane.b32.xlu0 %v868, 127
        %v873 = vpop.permute.xlu0 %872
        %874 = vrot.lane.b32.xlu0 %v869, 127
        %v875 = vpop.permute.xlu0 %874
        %v878 = vadd.f32 %v864, %v873
        %v879 = vadd.f32 %v865, %v875
        %s880 = sld [smem:[#allocation8 + $0x15]]
        %v881 = vstv %s880
        %v882 = vmul.f32 %v881, %v857
        %v883 = vmul.f32 %v881, %v858
        %886 = vrot.lane.b32.xlu0 %v882, 126
        %v887 = vpop.permute.xlu0 %886
        %888 = vrot.lane.b32.xlu0 %v883, 126
        %v889 = vpop.permute.xlu0 %888
        %v892 = vadd.f32 %v878, %v887
        %v893 = vadd.f32 %v879, %v889
        %s894 = sld [smem:[#allocation8 + $0x1f]]
        %v895 = vstv %s894
        %v896 = vmul.f32 %v895, %v857
        %v897 = vmul.f32 %v895, %v858
        %v898 = vmul.f32 %v895, %v859
        %v902 = vrot.slane %v896, 1
        %v903 = vrot.slane %v897, 1
        %v904 = vsel %vm368, %v902, %v903
        %v905 = vrot.slane %v898, 1
        %v906 = vsel %vm368, %v903, %v905
        %v909 = vadd.f32 %v892, %v904
        %v910 = vadd.f32 %v893, %v906
        %s911 = sld [smem:[#allocation8 + $0x29]]
        %v912 = vstv %s911
        %v913 = vmul.f32 %v912, %v857
        %v914 = vmul.f32 %v912, %v858
        %v915 = vmul.f32 %v912, %v859
        %v919 = vrot.slane %v913, 1
        %v920 = vrot.slane %v914, 1
        %v921 = vsel %vm368, %v919, %v920
        %v922 = vrot.slane %v915, 1
        %v923 = vsel %vm368, %v920, %v922
        %924 = vrot.lane.b32.xlu0 %v921, 127
        %v925 = vpop.permute.xlu0 %924
        %926 = vrot.lane.b32.xlu0 %v923, 127
        %v927 = vpop.permute.xlu0 %926
        %v930 = vadd.f32 %v909, %v925
        %v931 = vadd.f32 %v910, %v927
        %s932 = sld [smem:[#allocation8 + $0x33]]
        %v933 = vstv %s932
        %v934 = vmul.f32 %v933, %v857
        %v935 = vmul.f32 %v933, %v858
        %v936 = vmul.f32 %v933, %v859
        %v940 = vrot.slane %v934, 1
        %v941 = vrot.slane %v935, 1
        %v942 = vsel %vm368, %v940, %v941
        %v943 = vrot.slane %v936, 1
        %v944 = vsel %vm368, %v941, %v943
        %945 = vrot.lane.b32.xlu0 %v942, 126
        %v946 = vpop.permute.xlu0 %945
        %947 = vrot.lane.b32.xlu0 %v944, 126
        %v948 = vpop.permute.xlu0 %947
        %v951 = vadd.f32 %v930, %v946
        %v952 = vadd.f32 %v931, %v948
        %s953 = sld [smem:[#allocation8 + $0x3d]]
        %v954 = vstv %s953
        %v955 = vmul.f32 %v954, %v857
        %v956 = vmul.f32 %v954, %v858
        %v957 = vmul.f32 %v954, %v859
        %v961 = vrot.slane %v955, 2
        %v962 = vrot.slane %v956, 2
        %v963 = vsel %vm438, %v961, %v962
        %v964 = vrot.slane %v957, 2
        %v965 = vsel %vm438, %v962, %v964
        %v968 = vadd.f32 %v951, %v963
        %v969 = vadd.f32 %v952, %v965
        %s970 = sld [smem:[#allocation8 + $0x47]]
        %v971 = vstv %s970
        %v972 = vmul.f32 %v971, %v857
        %v973 = vmul.f32 %v971, %v858
        %v974 = vmul.f32 %v971, %v859
        %v978 = vrot.slane %v972, 2
        %v979 = vrot.slane %v973, 2
        %v980 = vsel %vm438, %v978, %v979
        %v981 = vrot.slane %v974, 2
        %v982 = vsel %vm438, %v979, %v981
        %983 = vrot.lane.b32.xlu0 %v980, 127
        %v984 = vpop.permute.xlu0 %983
        %985 = vrot.lane.b32.xlu0 %v982, 127
        %v986 = vpop.permute.xlu0 %985
        %v989 = vadd.f32 %v968, %v984
        %v990 = vadd.f32 %v969, %v986
        %s991 = sld [smem:[#allocation8 + $0x51]]
        %v992 = vstv %s991
        %v993 = vmul.f32 %v992, %v857
        %v994 = vmul.f32 %v992, %v858
        %v995 = vmul.f32 %v992, %v859
        %v999 = vrot.slane %v993, 2
        %v1000 = vrot.slane %v994, 2
        %v1001 = vsel %vm438, %v999, %v1000
        %v1002 = vrot.slane %v995, 2
        %v1003 = vsel %vm438, %v1000, %v1002
        %1004 = vrot.lane.b32.xlu0 %v1001, 126
        %v1005 = vpop.permute.xlu0 %1004
        %1006 = vrot.lane.b32.xlu0 %v1003, 126
        %v1007 = vpop.permute.xlu0 %1006
        %v1010 = vadd.f32 %v989, %v1005
        %v1011 = vadd.f32 %v990, %v1007
        %s1012 = sld [smem:[#allocation3 + $0x2]]
        %v1013 = vstv %s1012
        %v1014 = vmul.f32 %v1013, %v280
        %v1015 = vmul.f32 %v1013, %v281
        %v1016 = vmul.f32 %v1013, %v282
        %v1017 = vadd.f32 %v1014, 0.0
        %v1018 = vadd.f32 %v1015, 0.0
        %v1019 = vadd.f32 %v1016, 0.0
        %s1020 = sld [smem:[#allocation3 + $0xc]]
        %v1021 = vstv %s1020
        %v1022 = vmul.f32 %v1021, %v280
        %v1023 = vmul.f32 %v1021, %v281
        %v1024 = vmul.f32 %v1021, %v282
        %1028 = vrot.lane.b32.xlu0 %v1022, 127
        %v1029 = vpop.permute.xlu0 %1028
        %1030 = vrot.lane.b32.xlu0 %v1023, 127
        %v1031 = vpop.permute.xlu0 %1030
        %1032 = vrot.lane.b32.xlu0 %v1024, 127
        %v1033 = vpop.permute.xlu0 %1032
        %v1037 = vadd.f32 %v1017, %v1029
        %v1038 = vadd.f32 %v1018, %v1031
        %v1039 = vadd.f32 %v1019, %v1033
        %s1040 = sld [smem:[#allocation3 + $0x16]]
        %v1041 = vstv %s1040
        %v1042 = vmul.f32 %v1041, %v280
        %v1043 = vmul.f32 %v1041, %v281
        %v1044 = vmul.f32 %v1041, %v282
        %1048 = vrot.lane.b32.xlu0 %v1042, 126
        %v1049 = vpop.permute.xlu0 %1048
        %1050 = vrot.lane.b32.xlu0 %v1043, 126
        %v1051 = vpop.permute.xlu0 %1050
        %1052 = vrot.lane.b32.xlu0 %v1044, 126
        %v1053 = vpop.permute.xlu0 %1052
        %v1057 = vadd.f32 %v1037, %v1049
        %v1058 = vadd.f32 %v1038, %v1051
        %v1059 = vadd.f32 %v1039, %v1053
        %s1060 = sld [smem:[#allocation3 + $0x20]]
        %v1061 = vstv %s1060
        %v1062 = vmul.f32 %v1061, %v280
        %v1063 = vmul.f32 %v1061, %v281
        %v1064 = vmul.f32 %v1061, %v282
        %v1068 = vrot.slane %v1062, 1
        %v1069 = vrot.slane %v1063, 1
        %v1070 = vsel %vm368, %v1068, %v1069
        %v1071 = vrot.slane %v1064, 1
        %v1072 = vsel %vm368, %v1069, %v1071
        %v1076 = vadd.f32 %v1057, %v1070
        %v1077 = vadd.f32 %v1058, %v1072
        %v1078 = vadd.f32 %v1059, %v1071
        %s1079 = sld [smem:[#allocation3 + $0x2a]]
        %v1080 = vstv %s1079
        %v1081 = vmul.f32 %v1080, %v280
        %v1082 = vmul.f32 %v1080, %v281
        %v1083 = vmul.f32 %v1080, %v282
        %v1087 = vrot.slane %v1081, 1
        %v1088 = vrot.slane %v1082, 1
        %v1089 = vsel %vm368, %v1087, %v1088
        %v1090 = vrot.slane %v1083, 1
        %v1091 = vsel %vm368, %v1088, %v1090
        %1092 = vrot.lane.b32.xlu0 %v1089, 127
        %v1093 = vpop.permute.xlu0 %1092
        %1094 = vrot.lane.b32.xlu0 %v1091, 127
        %v1095 = vpop.permute.xlu0 %1094
        %1096 = vrot.lane.b32.xlu0 %v1090, 127
        %v1097 = vpop.permute.xlu0 %1096
        %v1101 = vadd.f32 %v1076, %v1093
        %v1102 = vadd.f32 %v1077, %v1095
        %v1103 = vadd.f32 %v1078, %v1097
        %s1104 = sld [smem:[#allocation3 + $0x34]]
        %v1105 = vstv %s1104
        %v1106 = vmul.f32 %v1105, %v280
        %v1107 = vmul.f32 %v1105, %v281
        %v1108 = vmul.f32 %v1105, %v282
        %v1112 = vrot.slane %v1106, 1
        %v1113 = vrot.slane %v1107, 1
        %v1114 = vsel %vm368, %v1112, %v1113
        %v1115 = vrot.slane %v1108, 1
        %v1116 = vsel %vm368, %v1113, %v1115
        %1117 = vrot.lane.b32.xlu0 %v1114, 126
        %v1118 = vpop.permute.xlu0 %1117
        %1119 = vrot.lane.b32.xlu0 %v1116, 126
        %v1120 = vpop.permute.xlu0 %1119
        %1121 = vrot.lane.b32.xlu0 %v1115, 126
        %v1122 = vpop.permute.xlu0 %1121
        %v1126 = vadd.f32 %v1101, %v1118
        %v1127 = vadd.f32 %v1102, %v1120
        %v1128 = vadd.f32 %v1103, %v1122
        %s1129 = sld [smem:[#allocation3 + $0x3e]]
        %v1130 = vstv %s1129
        %v1131 = vmul.f32 %v1130, %v280
        %v1132 = vmul.f32 %v1130, %v281
        %v1133 = vmul.f32 %v1130, %v282
        %v1137 = vrot.slane %v1131, 2
        %v1138 = vrot.slane %v1132, 2
        %v1139 = vsel %vm438, %v1137, %v1138
        %v1140 = vrot.slane %v1133, 2
        %v1141 = vsel %vm438, %v1138, %v1140
        %v1145 = vadd.f32 %v1126, %v1139
        %v1146 = vadd.f32 %v1127, %v1141
        %v1147 = vadd.f32 %v1128, %v1140
        %s1148 = sld [smem:[#allocation3 + $0x48]]
        %v1149 = vstv %s1148
        %v1150 = vmul.f32 %v1149, %v280
        %v1151 = vmul.f32 %v1149, %v281
        %v1152 = vmul.f32 %v1149, %v282
        %v1156 = vrot.slane %v1150, 2
        %v1157 = vrot.slane %v1151, 2
        %v1158 = vsel %vm438, %v1156, %v1157
        %v1159 = vrot.slane %v1152, 2
        %v1160 = vsel %vm438, %v1157, %v1159
        %1161 = vrot.lane.b32.xlu0 %v1158, 127
        %v1162 = vpop.permute.xlu0 %1161
        %1163 = vrot.lane.b32.xlu0 %v1160, 127
        %v1164 = vpop.permute.xlu0 %1163
        %1165 = vrot.lane.b32.xlu0 %v1159, 127
        %v1166 = vpop.permute.xlu0 %1165
        %v1170 = vadd.f32 %v1145, %v1162
        %v1171 = vadd.f32 %v1146, %v1164
        %v1172 = vadd.f32 %v1147, %v1166
        %s1173 = sld [smem:[#allocation3 + $0x52]]
        %v1174 = vstv %s1173
        %v1175 = vmul.f32 %v1174, %v280
        %v1176 = vmul.f32 %v1174, %v281
        %v1177 = vmul.f32 %v1174, %v282
        %v1181 = vrot.slane %v1175, 2
        %v1182 = vrot.slane %v1176, 2
        %v1183 = vsel %vm438, %v1181, %v1182
        %v1184 = vrot.slane %v1177, 2
        %v1185 = vsel %vm438, %v1182, %v1184
        %1186 = vrot.lane.b32.xlu0 %v1183, 126
        %v1187 = vpop.permute.xlu0 %1186
        %1188 = vrot.lane.b32.xlu0 %v1185, 126
        %v1189 = vpop.permute.xlu0 %1188
        %1190 = vrot.lane.b32.xlu0 %v1184, 126
        %v1191 = vpop.permute.xlu0 %1190
        %v1195 = vadd.f32 %v1170, %v1187
        %v1196 = vadd.f32 %v1171, %v1189
        %v1197 = vadd.f32 %v1172, %v1191
        %s1198 = sld [smem:[#allocation6 + $0x2]]
        %v1199 = vstv %s1198
        %v1200 = vadd.f32 %v1195, %v1199
        %v1201 = vadd.f32 %v1196, %v1199
        %v1202 = vadd.f32 %v1197, %v1199
        %v1203 = vmax.f32 %v1200, 0.0
        %v1204 = vmax.f32 %v1201, 0.0
        %v1205 = vmax.f32 %v1202, 0.0
        %v1206 = vsel %vm309, %v1203, 0.0
        %v1207 = vsel %vm310, %v1204, 0.0
        %v1208 = vsel %vm311, %v1205, 0.0
        %s1209 = sld [smem:[#allocation8 + $0x2]]
        %v1210 = vstv %s1209
        %v1211 = vmul.f32 %v1210, %v1206
        %v1212 = vmul.f32 %v1210, %v1207
        %v1213 = vadd.f32 %v1010, %v1211
        %v1214 = vadd.f32 %v1011, %v1212
        %s1215 = sld [smem:[#allocation8 + $0xc]]
        %v1216 = vstv %s1215
        %v1217 = vmul.f32 %v1216, %v1206
        %v1218 = vmul.f32 %v1216, %v1207
        %1221 = vrot.lane.b32.xlu0 %v1217, 127
        %v1222 = vpop.permute.xlu0 %1221
        %1223 = vrot.lane.b32.xlu0 %v1218, 127
        %v1224 = vpop.permute.xlu0 %1223
        %v1227 = vadd.f32 %v1213, %v1222
        %v1228 = vadd.f32 %v1214, %v1224
        %s1229 = sld [smem:[#allocation8 + $0x16]]
        %v1230 = vstv %s1229
        %v1231 = vmul.f32 %v1230, %v1206
        %v1232 = vmul.f32 %v1230, %v1207
        %1235 = vrot.lane.b32.xlu0 %v1231, 126
        %v1236 = vpop.permute.xlu0 %1235
        %1237 = vrot.lane.b32.xlu0 %v1232, 126
        %v1238 = vpop.permute.xlu0 %1237
        %v1241 = vadd.f32 %v1227, %v1236
        %v1242 = vadd.f32 %v1228, %v1238
        %s1243 = sld [smem:[#allocation8 + $0x20]]
        %v1244 = vstv %s1243
        %v1245 = vmul.f32 %v1244, %v1206
        %v1246 = vmul.f32 %v1244, %v1207
        %v1247 = vmul.f32 %v1244, %v1208
        %v1251 = vrot.slane %v1245, 1
        %v1252 = vrot.slane %v1246, 1
        %v1253 = vsel %vm368, %v1251, %v1252
        %v1254 = vrot.slane %v1247, 1
        %v1255 = vsel %vm368, %v1252, %v1254
        %v1258 = vadd.f32 %v1241, %v1253
        %v1259 = vadd.f32 %v1242, %v1255
        %s1260 = sld [smem:[#allocation8 + $0x2a]]
        %v1261 = vstv %s1260
        %v1262 = vmul.f32 %v1261, %v1206
        %v1263 = vmul.f32 %v1261, %v1207
        %v1264 = vmul.f32 %v1261, %v1208
        %v1268 = vrot.slane %v1262, 1
        %v1269 = vrot.slane %v1263, 1
        %v1270 = vsel %vm368, %v1268, %v1269
        %v1271 = vrot.slane %v1264, 1
        %v1272 = vsel %vm368, %v1269, %v1271
        %1273 = vrot.lane.b32.xlu0 %v1270, 127
        %v1274 = vpop.permute.xlu0 %1273
        %1275 = vrot.lane.b32.xlu0 %v1272, 127
        %v1276 = vpop.permute.xlu0 %1275
        %v1279 = vadd.f32 %v1258, %v1274
        %v1280 = vadd.f32 %v1259, %v1276
        %s1281 = sld [smem:[#allocation8 + $0x34]]
        %v1282 = vstv %s1281
        %v1283 = vmul.f32 %v1282, %v1206
        %v1284 = vmul.f32 %v1282, %v1207
        %v1285 = vmul.f32 %v1282, %v1208
        %v1289 = vrot.slane %v1283, 1
        %v1290 = vrot.slane %v1284, 1
        %v1291 = vsel %vm368, %v1289, %v1290
        %v1292 = vrot.slane %v1285, 1
        %v1293 = vsel %vm368, %v1290, %v1292
        %1294 = vrot.lane.b32.xlu0 %v1291, 126
        %v1295 = vpop.permute.xlu0 %1294
        %1296 = vrot.lane.b32.xlu0 %v1293, 126
        %v1297 = vpop.permute.xlu0 %1296
        %v1300 = vadd.f32 %v1279, %v1295
        %v1301 = vadd.f32 %v1280, %v1297
        %s1302 = sld [smem:[#allocation8 + $0x3e]]
        %v1303 = vstv %s1302
        %v1304 = vmul.f32 %v1303, %v1206
        %v1305 = vmul.f32 %v1303, %v1207
        %v1306 = vmul.f32 %v1303, %v1208
        %v1310 = vrot.slane %v1304, 2
        %v1311 = vrot.slane %v1305, 2
        %v1312 = vsel %vm438, %v1310, %v1311
        %v1313 = vrot.slane %v1306, 2
        %v1314 = vsel %vm438, %v1311, %v1313
        %v1317 = vadd.f32 %v1300, %v1312
        %v1318 = vadd.f32 %v1301, %v1314
        %s1319 = sld [smem:[#allocation8 + $0x48]]
        %v1320 = vstv %s1319
        %v1321 = vmul.f32 %v1320, %v1206
        %v1322 = vmul.f32 %v1320, %v1207
        %v1323 = vmul.f32 %v1320, %v1208
        %v1327 = vrot.slane %v1321, 2
        %v1328 = vrot.slane %v1322, 2
        %v1329 = vsel %vm438, %v1327, %v1328
        %v1330 = vrot.slane %v1323, 2
        %v1331 = vsel %vm438, %v1328, %v1330
        %1332 = vrot.lane.b32.xlu0 %v1329, 127
        %v1333 = vpop.permute.xlu0 %1332
        %1334 = vrot.lane.b32.xlu0 %v1331, 127
        %v1335 = vpop.permute.xlu0 %1334
        %v1338 = vadd.f32 %v1317, %v1333
        %v1339 = vadd.f32 %v1318, %v1335
        %s1340 = sld [smem:[#allocation8 + $0x52]]
        %v1341 = vstv %s1340
        %v1342 = vmul.f32 %v1341, %v1206
        %v1343 = vmul.f32 %v1341, %v1207
        %v1344 = vmul.f32 %v1341, %v1208
        %v1348 = vrot.slane %v1342, 2
        %v1349 = vrot.slane %v1343, 2
        %v1350 = vsel %vm438, %v1348, %v1349
        %v1351 = vrot.slane %v1344, 2
        %v1352 = vsel %vm438, %v1349, %v1351
        %1353 = vrot.lane.b32.xlu0 %v1350, 126
        %v1354 = vpop.permute.xlu0 %1353
        %1355 = vrot.lane.b32.xlu0 %v1352, 126
        %v1356 = vpop.permute.xlu0 %1355
        %v1359 = vadd.f32 %v1338, %v1354
        %v1360 = vadd.f32 %v1339, %v1356
        %s1361 = sld [smem:[#allocation3 + $0x3]]
        %v1362 = vstv %s1361
        %v1363 = vmul.f32 %v1362, %v280
        %v1364 = vmul.f32 %v1362, %v281
        %v1365 = vmul.f32 %v1362, %v282
        %v1366 = vadd.f32 %v1363, 0.0
        %v1367 = vadd.f32 %v1364, 0.0
        %v1368 = vadd.f32 %v1365, 0.0
        %s1369 = sld [smem:[#allocation3 + $0xd]]
        %v1370 = vstv %s1369
        %v1371 = vmul.f32 %v1370, %v280
        %v1372 = vmul.f32 %v1370, %v281
        %v1373 = vmul.f32 %v1370, %v282
        %1377 = vrot.lane.b32.xlu0 %v1371, 127
        %v1378 = vpop.permute.xlu0 %1377
        %1379 = vrot.lane.b32.xlu0 %v1372, 127
        %v1380 = vpop.permute.xlu0 %1379
        %1381 = vrot.lane.b32.xlu0 %v1373, 127
        %v1382 = vpop.permute.xlu0 %1381
        %v1386 = vadd.f32 %v1366, %v1378
        %v1387 = vadd.f32 %v1367, %v1380
        %v1388 = vadd.f32 %v1368, %v1382
        %s1389 = sld [smem:[#allocation3 + $0x17]]
        %v1390 = vstv %s1389
        %v1391 = vmul.f32 %v1390, %v280
        %v1392 = vmul.f32 %v1390, %v281
        %v1393 = vmul.f32 %v1390, %v282
        %1397 = vrot.lane.b32.xlu0 %v1391, 126
        %v1398 = vpop.permute.xlu0 %1397
        %1399 = vrot.lane.b32.xlu0 %v1392, 126
        %v1400 = vpop.permute.xlu0 %1399
        %1401 = vrot.lane.b32.xlu0 %v1393, 126
        %v1402 = vpop.permute.xlu0 %1401
        %v1406 = vadd.f32 %v1386, %v1398
        %v1407 = vadd.f32 %v1387, %v1400
        %v1408 = vadd.f32 %v1388, %v1402
        %s1409 = sld [smem:[#allocation3 + $0x21]]
        %v1410 = vstv %s1409
        %v1411 = vmul.f32 %v1410, %v280
        %v1412 = vmul.f32 %v1410, %v281
        %v1413 = vmul.f32 %v1410, %v282
        %v1417 = vrot.slane %v1411, 1
        %v1418 = vrot.slane %v1412, 1
        %v1419 = vsel %vm368, %v1417, %v1418
        %v1420 = vrot.slane %v1413, 1
        %v1421 = vsel %vm368, %v1418, %v1420
        %v1425 = vadd.f32 %v1406, %v1419
        %v1426 = vadd.f32 %v1407, %v1421
        %v1427 = vadd.f32 %v1408, %v1420
        %s1428 = sld [smem:[#allocation3 + $0x2b]]
        %v1429 = vstv %s1428
        %v1430 = vmul.f32 %v1429, %v280
        %v1431 = vmul.f32 %v1429, %v281
        %v1432 = vmul.f32 %v1429, %v282
        %v1436 = vrot.slane %v1430, 1
        %v1437 = vrot.slane %v1431, 1
        %v1438 = vsel %vm368, %v1436, %v1437
        %v1439 = vrot.slane %v1432, 1
        %v1440 = vsel %vm368, %v1437, %v1439
        %1441 = vrot.lane.b32.xlu0 %v1438, 127
        %v1442 = vpop.permute.xlu0 %1441
        %1443 = vrot.lane.b32.xlu0 %v1440, 127
        %v1444 = vpop.permute.xlu0 %1443
        %1445 = vrot.lane.b32.xlu0 %v1439, 127
        %v1446 = vpop.permute.xlu0 %1445
        %v1450 = vadd.f32 %v1425, %v1442
        %v1451 = vadd.f32 %v1426, %v1444
        %v1452 = vadd.f32 %v1427, %v1446
        %s1453 = sld [smem:[#allocation3 + $0x35]]
        %v1454 = vstv %s1453
        %v1455 = vmul.f32 %v1454, %v280
        %v1456 = vmul.f32 %v1454, %v281
        %v1457 = vmul.f32 %v1454, %v282
        %v1461 = vrot.slane %v1455, 1
        %v1462 = vrot.slane %v1456, 1
        %v1463 = vsel %vm368, %v1461, %v1462
        %v1464 = vrot.slane %v1457, 1
        %v1465 = vsel %vm368, %v1462, %v1464
        %1466 = vrot.lane.b32.xlu0 %v1463, 126
        %v1467 = vpop.permute.xlu0 %1466
        %1468 = vrot.lane.b32.xlu0 %v1465, 126
        %v1469 = vpop.permute.xlu0 %1468
        %1470 = vrot.lane.b32.xlu0 %v1464, 126
        %v1471 = vpop.permute.xlu0 %1470
        %v1475 = vadd.f32 %v1450, %v1467
        %v1476 = vadd.f32 %v1451, %v1469
        %v1477 = vadd.f32 %v1452, %v1471
        %s1478 = sld [smem:[#allocation3 + $0x3f]]
        %v1479 = vstv %s1478
        %v1480 = vmul.f32 %v1479, %v280
        %v1481 = vmul.f32 %v1479, %v281
        %v1482 = vmul.f32 %v1479, %v282
        %v1486 = vrot.slane %v1480, 2
        %v1487 = vrot.slane %v1481, 2
        %v1488 = vsel %vm438, %v1486, %v1487
        %v1489 = vrot.slane %v1482, 2
        %v1490 = vsel %vm438, %v1487, %v1489
        %v1494 = vadd.f32 %v1475, %v1488
        %v1495 = vadd.f32 %v1476, %v1490
        %v1496 = vadd.f32 %v1477, %v1489
        %s1497 = sld [smem:[#allocation3 + $0x49]]
        %v1498 = vstv %s1497
        %v1499 = vmul.f32 %v1498, %v280
        %v1500 = vmul.f32 %v1498, %v281
        %v1501 = vmul.f32 %v1498, %v282
        %v1505 = vrot.slane %v1499, 2
        %v1506 = vrot.slane %v1500, 2
        %v1507 = vsel %vm438, %v1505, %v1506
        %v1508 = vrot.slane %v1501, 2
        %v1509 = vsel %vm438, %v1506, %v1508
        %1510 = vrot.lane.b32.xlu0 %v1507, 127
        %v1511 = vpop.permute.xlu0 %1510
        %1512 = vrot.lane.b32.xlu0 %v1509, 127
        %v1513 = vpop.permute.xlu0 %1512
        %1514 = vrot.lane.b32.xlu0 %v1508, 127
        %v1515 = vpop.permute.xlu0 %1514
        %v1519 = vadd.f32 %v1494, %v1511
        %v1520 = vadd.f32 %v1495, %v1513
        %v1521 = vadd.f32 %v1496, %v1515
        %s1522 = sld [smem:[#allocation3 + $0x53]]
        %v1523 = vstv %s1522
        %v1524 = vmul.f32 %v1523, %v280
        %v1525 = vmul.f32 %v1523, %v281
        %v1526 = vmul.f32 %v1523, %v282
        %v1530 = vrot.slane %v1524, 2
        %v1531 = vrot.slane %v1525, 2
        %v1532 = vsel %vm438, %v1530, %v1531
        %v1533 = vrot.slane %v1526, 2
        %v1534 = vsel %vm438, %v1531, %v1533
        %1535 = vrot.lane.b32.xlu0 %v1532, 126
        %v1536 = vpop.permute.xlu0 %1535
        %1537 = vrot.lane.b32.xlu0 %v1534, 126
        %v1538 = vpop.permute.xlu0 %1537
        %1539 = vrot.lane.b32.xlu0 %v1533, 126
        %v1540 = vpop.permute.xlu0 %1539
        %v1544 = vadd.f32 %v1519, %v1536
        %v1545 = vadd.f32 %v1520, %v1538
        %v1546 = vadd.f32 %v1521, %v1540
        %s1547 = sld [smem:[#allocation6 + $0x3]]
        %v1548 = vstv %s1547
        %v1549 = vadd.f32 %v1544, %v1548
        %v1550 = vadd.f32 %v1545, %v1548
        %v1551 = vadd.f32 %v1546, %v1548
        %v1552 = vmax.f32 %v1549, 0.0
        %v1553 = vmax.f32 %v1550, 0.0
        %v1554 = vmax.f32 %v1551, 0.0
        %v1555 = vsel %vm309, %v1552, 0.0
        %v1556 = vsel %vm310, %v1553, 0.0
        %v1557 = vsel %vm311, %v1554, 0.0
        %s1558 = sld [smem:[#allocation8 + $0x3]]
        %v1559 = vstv %s1558
        %v1560 = vmul.f32 %v1559, %v1555
        %v1561 = vmul.f32 %v1559, %v1556
        %v1562 = vadd.f32 %v1359, %v1560
        %v1563 = vadd.f32 %v1360, %v1561
        %s1564 = sld [smem:[#allocation8 + $0xd]]
        %v1565 = vstv %s1564
        %v1566 = vmul.f32 %v1565, %v1555
        %v1567 = vmul.f32 %v1565, %v1556
        %1570 = vrot.lane.b32.xlu0 %v1566, 127
        %v1571 = vpop.permute.xlu0 %1570
        %1572 = vrot.lane.b32.xlu0 %v1567, 127
        %v1573 = vpop.permute.xlu0 %1572
        %v1576 = vadd.f32 %v1562, %v1571
        %v1577 = vadd.f32 %v1563, %v1573
        %s1578 = sld [smem:[#allocation8 + $0x17]]
        %v1579 = vstv %s1578
        %v1580 = vmul.f32 %v1579, %v1555
        %v1581 = vmul.f32 %v1579, %v1556
        %1584 = vrot.lane.b32.xlu0 %v1580, 126
        %v1585 = vpop.permute.xlu0 %1584
        %1586 = vrot.lane.b32.xlu0 %v1581, 126
        %v1587 = vpop.permute.xlu0 %1586
        %v1590 = vadd.f32 %v1576, %v1585
        %v1591 = vadd.f32 %v1577, %v1587
        %s1592 = sld [smem:[#allocation8 + $0x21]]
        %v1593 = vstv %s1592
        %v1594 = vmul.f32 %v1593, %v1555
        %v1595 = vmul.f32 %v1593, %v1556
        %v1596 = vmul.f32 %v1593, %v1557
        %v1600 = vrot.slane %v1594, 1
        %v1601 = vrot.slane %v1595, 1
        %v1602 = vsel %vm368, %v1600, %v1601
        %v1603 = vrot.slane %v1596, 1
        %v1604 = vsel %vm368, %v1601, %v1603
        %v1607 = vadd.f32 %v1590, %v1602
        %v1608 = vadd.f32 %v1591, %v1604
        %s1609 = sld [smem:[#allocation8 + $0x2b]]
        %v1610 = vstv %s1609
        %v1611 = vmul.f32 %v1610, %v1555
        %v1612 = vmul.f32 %v1610, %v1556
        %v1613 = vmul.f32 %v1610, %v1557
        %v1617 = vrot.slane %v1611, 1
        %v1618 = vrot.slane %v1612, 1
        %v1619 = vsel %vm368, %v1617, %v1618
        %v1620 = vrot.slane %v1613, 1
        %v1621 = vsel %vm368, %v1618, %v1620
        %1622 = vrot.lane.b32.xlu0 %v1619, 127
        %v1623 = vpop.permute.xlu0 %1622
        %1624 = vrot.lane.b32.xlu0 %v1621, 127
        %v1625 = vpop.permute.xlu0 %1624
        %v1628 = vadd.f32 %v1607, %v1623
        %v1629 = vadd.f32 %v1608, %v1625
        %s1630 = sld [smem:[#allocation8 + $0x35]]
        %v1631 = vstv %s1630
        %v1632 = vmul.f32 %v1631, %v1555
        %v1633 = vmul.f32 %v1631, %v1556
        %v1634 = vmul.f32 %v1631, %v1557
        %v1638 = vrot.slane %v1632, 1
        %v1639 = vrot.slane %v1633, 1
        %v1640 = vsel %vm368, %v1638, %v1639
        %v1641 = vrot.slane %v1634, 1
        %v1642 = vsel %vm368, %v1639, %v1641
        %1643 = vrot.lane.b32.xlu0 %v1640, 126
        %v1644 = vpop.permute.xlu0 %1643
        %1645 = vrot.lane.b32.xlu0 %v1642, 126
        %v1646 = vpop.permute.xlu0 %1645
        %v1649 = vadd.f32 %v1628, %v1644
        %v1650 = vadd.f32 %v1629, %v1646
        %s1651 = sld [smem:[#allocation8 + $0x3f]]
        %v1652 = vstv %s1651
        %v1653 = vmul.f32 %v1652, %v1555
        %v1654 = vmul.f32 %v1652, %v1556
        %v1655 = vmul.f32 %v1652, %v1557
        %v1659 = vrot.slane %v1653, 2
        %v1660 = vrot.slane %v1654, 2
        %v1661 = vsel %vm438, %v1659, %v1660
        %v1662 = vrot.slane %v1655, 2
        %v1663 = vsel %vm438, %v1660, %v1662
        %v1666 = vadd.f32 %v1649, %v1661
        %v1667 = vadd.f32 %v1650, %v1663
        %s1668 = sld [smem:[#allocation8 + $0x49]]
        %v1669 = vstv %s1668
        %v1670 = vmul.f32 %v1669, %v1555
        %v1671 = vmul.f32 %v1669, %v1556
        %v1672 = vmul.f32 %v1669, %v1557
        %v1676 = vrot.slane %v1670, 2
        %v1677 = vrot.slane %v1671, 2
        %v1678 = vsel %vm438, %v1676, %v1677
        %v1679 = vrot.slane %v1672, 2
        %v1680 = vsel %vm438, %v1677, %v1679
        %1681 = vrot.lane.b32.xlu0 %v1678, 127
        %v1682 = vpop.permute.xlu0 %1681
        %1683 = vrot.lane.b32.xlu0 %v1680, 127
        %v1684 = vpop.permute.xlu0 %1683
        %v1687 = vadd.f32 %v1666, %v1682
        %v1688 = vadd.f32 %v1667, %v1684
        %s1689 = sld [smem:[#allocation8 + $0x53]]
        %v1690 = vstv %s1689
        %v1691 = vmul.f32 %v1690, %v1555
        %v1692 = vmul.f32 %v1690, %v1556
        %v1693 = vmul.f32 %v1690, %v1557
        %v1697 = vrot.slane %v1691, 2
        %v1698 = vrot.slane %v1692, 2
        %v1699 = vsel %vm438, %v1697, %v1698
        %v1700 = vrot.slane %v1693, 2
        %v1701 = vsel %vm438, %v1698, %v1700
        %1702 = vrot.lane.b32.xlu0 %v1699, 126
        %v1703 = vpop.permute.xlu0 %1702
        %1704 = vrot.lane.b32.xlu0 %v1701, 126
        %v1705 = vpop.permute.xlu0 %1704
        %v1708 = vadd.f32 %v1687, %v1703
        %v1709 = vadd.f32 %v1688, %v1705
        %s1710 = sld [smem:[#allocation3 + $0x4]]
        %v1711 = vstv %s1710
        %v1712 = vmul.f32 %v1711, %v280
        %v1713 = vmul.f32 %v1711, %v281
        %v1714 = vmul.f32 %v1711, %v282
        %v1715 = vadd.f32 %v1712, 0.0
        %v1716 = vadd.f32 %v1713, 0.0
        %v1717 = vadd.f32 %v1714, 0.0
        %s1718 = sld [smem:[#allocation3 + $0xe]]
        %v1719 = vstv %s1718
        %v1720 = vmul.f32 %v1719, %v280
        %v1721 = vmul.f32 %v1719, %v281
        %v1722 = vmul.f32 %v1719, %v282
        %1726 = vrot.lane.b32.xlu0 %v1720, 127
        %v1727 = vpop.permute.xlu0 %1726
        %1728 = vrot.lane.b32.xlu0 %v1721, 127
        %v1729 = vpop.permute.xlu0 %1728
        %1730 = vrot.lane.b32.xlu0 %v1722, 127
        %v1731 = vpop.permute.xlu0 %1730
        %v1735 = vadd.f32 %v1715, %v1727
        %v1736 = vadd.f32 %v1716, %v1729
        %v1737 = vadd.f32 %v1717, %v1731
        %s1738 = sld [smem:[#allocation3 + $0x18]]
        %v1739 = vstv %s1738
        %v1740 = vmul.f32 %v1739, %v280
        %v1741 = vmul.f32 %v1739, %v281
        %v1742 = vmul.f32 %v1739, %v282
        %1746 = vrot.lane.b32.xlu0 %v1740, 126
        %v1747 = vpop.permute.xlu0 %1746
        %1748 = vrot.lane.b32.xlu0 %v1741, 126
        %v1749 = vpop.permute.xlu0 %1748
        %1750 = vrot.lane.b32.xlu0 %v1742, 126
        %v1751 = vpop.permute.xlu0 %1750
        %v1755 = vadd.f32 %v1735, %v1747
        %v1756 = vadd.f32 %v1736, %v1749
        %v1757 = vadd.f32 %v1737, %v1751
        %s1758 = sld [smem:[#allocation3 + $0x22]]
        %v1759 = vstv %s1758
        %v1760 = vmul.f32 %v1759, %v280
        %v1761 = vmul.f32 %v1759, %v281
        %v1762 = vmul.f32 %v1759, %v282
        %v1766 = vrot.slane %v1760, 1
        %v1767 = vrot.slane %v1761, 1
        %v1768 = vsel %vm368, %v1766, %v1767
        %v1769 = vrot.slane %v1762, 1
        %v1770 = vsel %vm368, %v1767, %v1769
        %v1774 = vadd.f32 %v1755, %v1768
        %v1775 = vadd.f32 %v1756, %v1770
        %v1776 = vadd.f32 %v1757, %v1769
        %s1777 = sld [smem:[#allocation3 + $0x2c]]
        %v1778 = vstv %s1777
        %v1779 = vmul.f32 %v1778, %v280
        %v1780 = vmul.f32 %v1778, %v281
        %v1781 = vmul.f32 %v1778, %v282
        %v1785 = vrot.slane %v1779, 1
        %v1786 = vrot.slane %v1780, 1
        %v1787 = vsel %vm368, %v1785, %v1786
        %v1788 = vrot.slane %v1781, 1
        %v1789 = vsel %vm368, %v1786, %v1788
        %1790 = vrot.lane.b32.xlu0 %v1787, 127
        %v1791 = vpop.permute.xlu0 %1790
        %1792 = vrot.lane.b32.xlu0 %v1789, 127
        %v1793 = vpop.permute.xlu0 %1792
        %1794 = vrot.lane.b32.xlu0 %v1788, 127
        %v1795 = vpop.permute.xlu0 %1794
        %v1799 = vadd.f32 %v1774, %v1791
        %v1800 = vadd.f32 %v1775, %v1793
        %v1801 = vadd.f32 %v1776, %v1795
        %s1802 = sld [smem:[#allocation3 + $0x36]]
        %v1803 = vstv %s1802
        %v1804 = vmul.f32 %v1803, %v280
        %v1805 = vmul.f32 %v1803, %v281
        %v1806 = vmul.f32 %v1803, %v282
        %v1810 = vrot.slane %v1804, 1
        %v1811 = vrot.slane %v1805, 1
        %v1812 = vsel %vm368, %v1810, %v1811
        %v1813 = vrot.slane %v1806, 1
        %v1814 = vsel %vm368, %v1811, %v1813
        %1815 = vrot.lane.b32.xlu0 %v1812, 126
        %v1816 = vpop.permute.xlu0 %1815
        %1817 = vrot.lane.b32.xlu0 %v1814, 126
        %v1818 = vpop.permute.xlu0 %1817
        %1819 = vrot.lane.b32.xlu0 %v1813, 126
        %v1820 = vpop.permute.xlu0 %1819
        %v1824 = vadd.f32 %v1799, %v1816
        %v1825 = vadd.f32 %v1800, %v1818
        %v1826 = vadd.f32 %v1801, %v1820
        %s1827 = sld [smem:[#allocation3 + $0x40]]
        %v1828 = vstv %s1827
        %v1829 = vmul.f32 %v1828, %v280
        %v1830 = vmul.f32 %v1828, %v281
        %v1831 = vmul.f32 %v1828, %v282
        %v1835 = vrot.slane %v1829, 2
        %v1836 = vrot.slane %v1830, 2
        %v1837 = vsel %vm438, %v1835, %v1836
        %v1838 = vrot.slane %v1831, 2
        %v1839 = vsel %vm438, %v1836, %v1838
        %v1843 = vadd.f32 %v1824, %v1837
        %v1844 = vadd.f32 %v1825, %v1839
        %v1845 = vadd.f32 %v1826, %v1838
        %s1846 = sld [smem:[#allocation3 + $0x4a]]
        %v1847 = vstv %s1846
        %v1848 = vmul.f32 %v1847, %v280
        %v1849 = vmul.f32 %v1847, %v281
        %v1850 = vmul.f32 %v1847, %v282
        %v1854 = vrot.slane %v1848, 2
        %v1855 = vrot.slane %v1849, 2
        %v1856 = vsel %vm438, %v1854, %v1855
        %v1857 = vrot.slane %v1850, 2
        %v1858 = vsel %vm438, %v1855, %v1857
        %1859 = vrot.lane.b32.xlu0 %v1856, 127
        %v1860 = vpop.permute.xlu0 %1859
        %1861 = vrot.lane.b32.xlu0 %v1858, 127
        %v1862 = vpop.permute.xlu0 %1861
        %1863 = vrot.lane.b32.xlu0 %v1857, 127
        %v1864 = vpop.permute.xlu0 %1863
        %v1868 = vadd.f32 %v1843, %v1860
        %v1869 = vadd.f32 %v1844, %v1862
        %v1870 = vadd.f32 %v1845, %v1864
        %s1871 = sld [smem:[#allocation3 + $0x54]]
        %v1872 = vstv %s1871
        %v1873 = vmul.f32 %v1872, %v280
        %v1874 = vmul.f32 %v1872, %v281
        %v1875 = vmul.f32 %v1872, %v282
        %v1879 = vrot.slane %v1873, 2
        %v1880 = vrot.slane %v1874, 2
        %v1881 = vsel %vm438, %v1879, %v1880
        %v1882 = vrot.slane %v1875, 2
        %v1883 = vsel %vm438, %v1880, %v1882
        %1884 = vrot.lane.b32.xlu0 %v1881, 126
        %v1885 = vpop.permute.xlu0 %1884
        %1886 = vrot.lane.b32.xlu0 %v1883, 126
        %v1887 = vpop.permute.xlu0 %1886
        %1888 = vrot.lane.b32.xlu0 %v1882, 126
        %v1889 = vpop.permute.xlu0 %1888
        %v1893 = vadd.f32 %v1868, %v1885
        %v1894 = vadd.f32 %v1869, %v1887
        %v1895 = vadd.f32 %v1870, %v1889
        %s1896 = sld [smem:[#allocation6 + $0x4]]
        %v1897 = vstv %s1896
        %v1898 = vadd.f32 %v1893, %v1897
        %v1899 = vadd.f32 %v1894, %v1897
        %v1900 = vadd.f32 %v1895, %v1897
        %v1901 = vmax.f32 %v1898, 0.0
        %v1902 = vmax.f32 %v1899, 0.0
        %v1903 = vmax.f32 %v1900, 0.0
        %v1904 = vsel %vm309, %v1901, 0.0
        %v1905 = vsel %vm310, %v1902, 0.0
        %v1906 = vsel %vm311, %v1903, 0.0
        %s1907 = sld [smem:[#allocation8 + $0x4]]
        %v1908 = vstv %s1907
        %v1909 = vmul.f32 %v1908, %v1904
        %v1910 = vmul.f32 %v1908, %v1905
        %v1911 = vadd.f32 %v1708, %v1909
        %v1912 = vadd.f32 %v1709, %v1910
        %s1913 = sld [smem:[#allocation8 + $0xe]]
        %v1914 = vstv %s1913
        %v1915 = vmul.f32 %v1914, %v1904
        %v1916 = vmul.f32 %v1914, %v1905
        %1919 = vrot.lane.b32.xlu0 %v1915, 127
        %v1920 = vpop.permute.xlu0 %1919
        %1921 = vrot.lane.b32.xlu0 %v1916, 127
        %v1922 = vpop.permute.xlu0 %1921
        %v1925 = vadd.f32 %v1911, %v1920
        %v1926 = vadd.f32 %v1912, %v1922
        %s1927 = sld [smem:[#allocation8 + $0x18]]
        %v1928 = vstv %s1927
        %v1929 = vmul.f32 %v1928, %v1904
        %v1930 = vmul.f32 %v1928, %v1905
        %1933 = vrot.lane.b32.xlu0 %v1929, 126
        %v1934 = vpop.permute.xlu0 %1933
        %1935 = vrot.lane.b32.xlu0 %v1930, 126
        %v1936 = vpop.permute.xlu0 %1935
        %v1939 = vadd.f32 %v1925, %v1934
        %v1940 = vadd.f32 %v1926, %v1936
        %s1941 = sld [smem:[#allocation8 + $0x22]]
        %v1942 = vstv %s1941
        %v1943 = vmul.f32 %v1942, %v1904
        %v1944 = vmul.f32 %v1942, %v1905
        %v1945 = vmul.f32 %v1942, %v1906
        %v1949 = vrot.slane %v1943, 1
        %v1950 = vrot.slane %v1944, 1
        %v1951 = vsel %vm368, %v1949, %v1950
        %v1952 = vrot.slane %v1945, 1
        %v1953 = vsel %vm368, %v1950, %v1952
        %v1956 = vadd.f32 %v1939, %v1951
        %v1957 = vadd.f32 %v1940, %v1953
        %s1958 = sld [smem:[#allocation8 + $0x2c]]
        %v1959 = vstv %s1958
        %v1960 = vmul.f32 %v1959, %v1904
        %v1961 = vmul.f32 %v1959, %v1905
        %v1962 = vmul.f32 %v1959, %v1906
        %v1966 = vrot.slane %v1960, 1
        %v1967 = vrot.slane %v1961, 1
        %v1968 = vsel %vm368, %v1966, %v1967
        %v1969 = vrot.slane %v1962, 1
        %v1970 = vsel %vm368, %v1967, %v1969
        %1971 = vrot.lane.b32.xlu0 %v1968, 127
        %v1972 = vpop.permute.xlu0 %1971
        %1973 = vrot.lane.b32.xlu0 %v1970, 127
        %v1974 = vpop.permute.xlu0 %1973
        %v1977 = vadd.f32 %v1956, %v1972
        %v1978 = vadd.f32 %v1957, %v1974
        %s1979 = sld [smem:[#allocation8 + $0x36]]
        %v1980 = vstv %s1979
        %v1981 = vmul.f32 %v1980, %v1904
        %v1982 = vmul.f32 %v1980, %v1905
        %v1983 = vmul.f32 %v1980, %v1906
        %v1987 = vrot.slane %v1981, 1
        %v1988 = vrot.slane %v1982, 1
        %v1989 = vsel %vm368, %v1987, %v1988
        %v1990 = vrot.slane %v1983, 1
        %v1991 = vsel %vm368, %v1988, %v1990
        %1992 = vrot.lane.b32.xlu0 %v1989, 126
        %v1993 = vpop.permute.xlu0 %1992
        %1994 = vrot.lane.b32.xlu0 %v1991, 126
        %v1995 = vpop.permute.xlu0 %1994
        %v1998 = vadd.f32 %v1977, %v1993
        %v1999 = vadd.f32 %v1978, %v1995
        %s2000 = sld [smem:[#allocation8 + $0x40]]
        %v2001 = vstv %s2000
        %v2002 = vmul.f32 %v2001, %v1904
        %v2003 = vmul.f32 %v2001, %v1905
        %v2004 = vmul.f32 %v2001, %v1906
        %v2008 = vrot.slane %v2002, 2
        %v2009 = vrot.slane %v2003, 2
        %v2010 = vsel %vm438, %v2008, %v2009
        %v2011 = vrot.slane %v2004, 2
        %v2012 = vsel %vm438, %v2009, %v2011
        %v2015 = vadd.f32 %v1998, %v2010
        %v2016 = vadd.f32 %v1999, %v2012
        %s2017 = sld [smem:[#allocation8 + $0x4a]]
        %v2018 = vstv %s2017
        %v2019 = vmul.f32 %v2018, %v1904
        %v2020 = vmul.f32 %v2018, %v1905
        %v2021 = vmul.f32 %v2018, %v1906
        %v2025 = vrot.slane %v2019, 2
        %v2026 = vrot.slane %v2020, 2
        %v2027 = vsel %vm438, %v2025, %v2026
        %v2028 = vrot.slane %v2021, 2
        %v2029 = vsel %vm438, %v2026, %v2028
        %2030 = vrot.lane.b32.xlu0 %v2027, 127
        %v2031 = vpop.permute.xlu0 %2030
        %2032 = vrot.lane.b32.xlu0 %v2029, 127
        %v2033 = vpop.permute.xlu0 %2032
        %v2036 = vadd.f32 %v2015, %v2031
        %v2037 = vadd.f32 %v2016, %v2033
        %s2038 = sld [smem:[#allocation8 + $0x54]]
        %v2039 = vstv %s2038
        %v2040 = vmul.f32 %v2039, %v1904
        %v2041 = vmul.f32 %v2039, %v1905
        %v2042 = vmul.f32 %v2039, %v1906
        %v2046 = vrot.slane %v2040, 2
        %v2047 = vrot.slane %v2041, 2
        %v2048 = vsel %vm438, %v2046, %v2047
        %v2049 = vrot.slane %v2042, 2
        %v2050 = vsel %vm438, %v2047, %v2049
        %2051 = vrot.lane.b32.xlu0 %v2048, 126
        %v2052 = vpop.permute.xlu0 %2051
        %2053 = vrot.lane.b32.xlu0 %v2050, 126
        %v2054 = vpop.permute.xlu0 %2053
        %v2057 = vadd.f32 %v2036, %v2052
        %v2058 = vadd.f32 %v2037, %v2054
        %s2059 = sld [smem:[#allocation3 + $0x5]]
        %v2060 = vstv %s2059
        %v2061 = vmul.f32 %v2060, %v280
        %v2062 = vmul.f32 %v2060, %v281
        %v2063 = vmul.f32 %v2060, %v282
        %v2064 = vadd.f32 %v2061, 0.0
        %v2065 = vadd.f32 %v2062, 0.0
        %v2066 = vadd.f32 %v2063, 0.0
        %s2067 = sld [smem:[#allocation3 + $0xf]]
        %v2068 = vstv %s2067
        %v2069 = vmul.f32 %v2068, %v280
        %v2070 = vmul.f32 %v2068, %v281
        %v2071 = vmul.f32 %v2068, %v282
        %2075 = vrot.lane.b32.xlu0 %v2069, 127
        %v2076 = vpop.permute.xlu0 %2075
        %2077 = vrot.lane.b32.xlu0 %v2070, 127
        %v2078 = vpop.permute.xlu0 %2077
        %2079 = vrot.lane.b32.xlu0 %v2071, 127
        %v2080 = vpop.permute.xlu0 %2079
        %v2084 = vadd.f32 %v2064, %v2076
        %v2085 = vadd.f32 %v2065, %v2078
        %v2086 = vadd.f32 %v2066, %v2080
        %s2087 = sld [smem:[#allocation3 + $0x19]]
        %v2088 = vstv %s2087
        %v2089 = vmul.f32 %v2088, %v280
        %v2090 = vmul.f32 %v2088, %v281
        %v2091 = vmul.f32 %v2088, %v282
        %2095 = vrot.lane.b32.xlu0 %v2089, 126
        %v2096 = vpop.permute.xlu0 %2095
        %2097 = vrot.lane.b32.xlu0 %v2090, 126
        %v2098 = vpop.permute.xlu0 %2097
        %2099 = vrot.lane.b32.xlu0 %v2091, 126
        %v2100 = vpop.permute.xlu0 %2099
        %v2104 = vadd.f32 %v2084, %v2096
        %v2105 = vadd.f32 %v2085, %v2098
        %v2106 = vadd.f32 %v2086, %v2100
        %s2107 = sld [smem:[#allocation3 + $0x23]]
        %v2108 = vstv %s2107
        %v2109 = vmul.f32 %v2108, %v280
        %v2110 = vmul.f32 %v2108, %v281
        %v2111 = vmul.f32 %v2108, %v282
        %v2115 = vrot.slane %v2109, 1
        %v2116 = vrot.slane %v2110, 1
        %v2117 = vsel %vm368, %v2115, %v2116
        %v2118 = vrot.slane %v2111, 1
        %v2119 = vsel %vm368, %v2116, %v2118
        %v2123 = vadd.f32 %v2104, %v2117
        %v2124 = vadd.f32 %v2105, %v2119
        %v2125 = vadd.f32 %v2106, %v2118
        %s2126 = sld [smem:[#allocation3 + $0x2d]]
        %v2127 = vstv %s2126
        %v2128 = vmul.f32 %v2127, %v280
        %v2129 = vmul.f32 %v2127, %v281
        %v2130 = vmul.f32 %v2127, %v282
        %v2134 = vrot.slane %v2128, 1
        %v2135 = vrot.slane %v2129, 1
        %v2136 = vsel %vm368, %v2134, %v2135
        %v2137 = vrot.slane %v2130, 1
        %v2138 = vsel %vm368, %v2135, %v2137
        %2139 = vrot.lane.b32.xlu0 %v2136, 127
        %v2140 = vpop.permute.xlu0 %2139
        %2141 = vrot.lane.b32.xlu0 %v2138, 127
        %v2142 = vpop.permute.xlu0 %2141
        %2143 = vrot.lane.b32.xlu0 %v2137, 127
        %v2144 = vpop.permute.xlu0 %2143
        %v2148 = vadd.f32 %v2123, %v2140
        %v2149 = vadd.f32 %v2124, %v2142
        %v2150 = vadd.f32 %v2125, %v2144
        %s2151 = sld [smem:[#allocation3 + $0x37]]
        %v2152 = vstv %s2151
        %v2153 = vmul.f32 %v2152, %v280
        %v2154 = vmul.f32 %v2152, %v281
        %v2155 = vmul.f32 %v2152, %v282
        %v2159 = vrot.slane %v2153, 1
        %v2160 = vrot.slane %v2154, 1
        %v2161 = vsel %vm368, %v2159, %v2160
        %v2162 = vrot.slane %v2155, 1
        %v2163 = vsel %vm368, %v2160, %v2162
        %2164 = vrot.lane.b32.xlu0 %v2161, 126
        %v2165 = vpop.permute.xlu0 %2164
        %2166 = vrot.lane.b32.xlu0 %v2163, 126
        %v2167 = vpop.permute.xlu0 %2166
        %2168 = vrot.lane.b32.xlu0 %v2162, 126
        %v2169 = vpop.permute.xlu0 %2168
        %v2173 = vadd.f32 %v2148, %v2165
        %v2174 = vadd.f32 %v2149, %v2167
        %v2175 = vadd.f32 %v2150, %v2169
        %s2176 = sld [smem:[#allocation3 + $0x41]]
        %v2177 = vstv %s2176
        %v2178 = vmul.f32 %v2177, %v280
        %v2179 = vmul.f32 %v2177, %v281
        %v2180 = vmul.f32 %v2177, %v282
        %v2184 = vrot.slane %v2178, 2
        %v2185 = vrot.slane %v2179, 2
        %v2186 = vsel %vm438, %v2184, %v2185
        %v2187 = vrot.slane %v2180, 2
        %v2188 = vsel %vm438, %v2185, %v2187
        %v2192 = vadd.f32 %v2173, %v2186
        %v2193 = vadd.f32 %v2174, %v2188
        %v2194 = vadd.f32 %v2175, %v2187
        %s2195 = sld [smem:[#allocation3 + $0x4b]]
        %v2196 = vstv %s2195
        %v2197 = vmul.f32 %v2196, %v280
        %v2198 = vmul.f32 %v2196, %v281
        %v2199 = vmul.f32 %v2196, %v282
        %v2203 = vrot.slane %v2197, 2
        %v2204 = vrot.slane %v2198, 2
        %v2205 = vsel %vm438, %v2203, %v2204
        %v2206 = vrot.slane %v2199, 2
        %v2207 = vsel %vm438, %v2204, %v2206
        %2208 = vrot.lane.b32.xlu0 %v2205, 127
        %v2209 = vpop.permute.xlu0 %2208
        %2210 = vrot.lane.b32.xlu0 %v2207, 127
        %v2211 = vpop.permute.xlu0 %2210
        %2212 = vrot.lane.b32.xlu0 %v2206, 127
        %v2213 = vpop.permute.xlu0 %2212
        %v2217 = vadd.f32 %v2192, %v2209
        %v2218 = vadd.f32 %v2193, %v2211
        %v2219 = vadd.f32 %v2194, %v2213
        %s2220 = sld [smem:[#allocation3 + $0x55]]
        %v2221 = vstv %s2220
        %v2222 = vmul.f32 %v2221, %v280
        %v2223 = vmul.f32 %v2221, %v281
        %v2224 = vmul.f32 %v2221, %v282
        %v2228 = vrot.slane %v2222, 2
        %v2229 = vrot.slane %v2223, 2
        %v2230 = vsel %vm438, %v2228, %v2229
        %v2231 = vrot.slane %v2224, 2
        %v2232 = vsel %vm438, %v2229, %v2231
        %2233 = vrot.lane.b32.xlu0 %v2230, 126
        %v2234 = vpop.permute.xlu0 %2233
        %2235 = vrot.lane.b32.xlu0 %v2232, 126
        %v2236 = vpop.permute.xlu0 %2235
        %2237 = vrot.lane.b32.xlu0 %v2231, 126
        %v2238 = vpop.permute.xlu0 %2237
        %v2242 = vadd.f32 %v2217, %v2234
        %v2243 = vadd.f32 %v2218, %v2236
        %v2244 = vadd.f32 %v2219, %v2238
        %s2245 = sld [smem:[#allocation6 + $0x5]]
        %v2246 = vstv %s2245
        %v2247 = vadd.f32 %v2242, %v2246
        %v2248 = vadd.f32 %v2243, %v2246
        %v2249 = vadd.f32 %v2244, %v2246
        %v2250 = vmax.f32 %v2247, 0.0
        %v2251 = vmax.f32 %v2248, 0.0
        %v2252 = vmax.f32 %v2249, 0.0
        %v2253 = vsel %vm309, %v2250, 0.0
        %v2254 = vsel %vm310, %v2251, 0.0
        %v2255 = vsel %vm311, %v2252, 0.0
        %s2256 = sld [smem:[#allocation8 + $0x5]]
        %v2257 = vstv %s2256
        %v2258 = vmul.f32 %v2257, %v2253
        %v2259 = vmul.f32 %v2257, %v2254
        %v2260 = vadd.f32 %v2057, %v2258
        %v2261 = vadd.f32 %v2058, %v2259
        %s2262 = sld [smem:[#allocation8 + $0xf]]
        %v2263 = vstv %s2262
        %v2264 = vmul.f32 %v2263, %v2253
        %v2265 = vmul.f32 %v2263, %v2254
        %2268 = vrot.lane.b32.xlu0 %v2264, 127
        %v2269 = vpop.permute.xlu0 %2268
        %2270 = vrot.lane.b32.xlu0 %v2265, 127
        %v2271 = vpop.permute.xlu0 %2270
        %v2274 = vadd.f32 %v2260, %v2269
        %v2275 = vadd.f32 %v2261, %v2271
        %s2276 = sld [smem:[#allocation8 + $0x19]]
        %v2277 = vstv %s2276
        %v2278 = vmul.f32 %v2277, %v2253
        %v2279 = vmul.f32 %v2277, %v2254
        %2282 = vrot.lane.b32.xlu0 %v2278, 126
        %v2283 = vpop.permute.xlu0 %2282
        %2284 = vrot.lane.b32.xlu0 %v2279, 126
        %v2285 = vpop.permute.xlu0 %2284
        %v2288 = vadd.f32 %v2274, %v2283
        %v2289 = vadd.f32 %v2275, %v2285
        %s2290 = sld [smem:[#allocation8 + $0x23]]
        %v2291 = vstv %s2290
        %v2292 = vmul.f32 %v2291, %v2253
        %v2293 = vmul.f32 %v2291, %v2254
        %v2294 = vmul.f32 %v2291, %v2255
        %v2298 = vrot.slane %v2292, 1
        %v2299 = vrot.slane %v2293, 1
        %v2300 = vsel %vm368, %v2298, %v2299
        %v2301 = vrot.slane %v2294, 1
        %v2302 = vsel %vm368, %v2299, %v2301
        %v2305 = vadd.f32 %v2288, %v2300
        %v2306 = vadd.f32 %v2289, %v2302
        %s2307 = sld [smem:[#allocation8 + $0x2d]]
        %v2308 = vstv %s2307
        %v2309 = vmul.f32 %v2308, %v2253
        %v2310 = vmul.f32 %v2308, %v2254
        %v2311 = vmul.f32 %v2308, %v2255
        %v2315 = vrot.slane %v2309, 1
        %v2316 = vrot.slane %v2310, 1
        %v2317 = vsel %vm368, %v2315, %v2316
        %v2318 = vrot.slane %v2311, 1
        %v2319 = vsel %vm368, %v2316, %v2318
        %2320 = vrot.lane.b32.xlu0 %v2317, 127
        %v2321 = vpop.permute.xlu0 %2320
        %2322 = vrot.lane.b32.xlu0 %v2319, 127
        %v2323 = vpop.permute.xlu0 %2322
        %v2326 = vadd.f32 %v2305, %v2321
        %v2327 = vadd.f32 %v2306, %v2323
        %s2328 = sld [smem:[#allocation8 + $0x37]]
        %v2329 = vstv %s2328
        %v2330 = vmul.f32 %v2329, %v2253
        %v2331 = vmul.f32 %v2329, %v2254
        %v2332 = vmul.f32 %v2329, %v2255
        %v2336 = vrot.slane %v2330, 1
        %v2337 = vrot.slane %v2331, 1
        %v2338 = vsel %vm368, %v2336, %v2337
        %v2339 = vrot.slane %v2332, 1
        %v2340 = vsel %vm368, %v2337, %v2339
        %2341 = vrot.lane.b32.xlu0 %v2338, 126
        %v2342 = vpop.permute.xlu0 %2341
        %2343 = vrot.lane.b32.xlu0 %v2340, 126
        %v2344 = vpop.permute.xlu0 %2343
        %v2347 = vadd.f32 %v2326, %v2342
        %v2348 = vadd.f32 %v2327, %v2344
        %s2349 = sld [smem:[#allocation8 + $0x41]]
        %v2350 = vstv %s2349
        %v2351 = vmul.f32 %v2350, %v2253
        %v2352 = vmul.f32 %v2350, %v2254
        %v2353 = vmul.f32 %v2350, %v2255
        %v2357 = vrot.slane %v2351, 2
        %v2358 = vrot.slane %v2352, 2
        %v2359 = vsel %vm438, %v2357, %v2358
        %v2360 = vrot.slane %v2353, 2
        %v2361 = vsel %vm438, %v2358, %v2360
        %v2364 = vadd.f32 %v2347, %v2359
        %v2365 = vadd.f32 %v2348, %v2361
        %s2366 = sld [smem:[#allocation8 + $0x4b]]
        %v2367 = vstv %s2366
        %v2368 = vmul.f32 %v2367, %v2253
        %v2369 = vmul.f32 %v2367, %v2254
        %v2370 = vmul.f32 %v2367, %v2255
        %v2374 = vrot.slane %v2368, 2
        %v2375 = vrot.slane %v2369, 2
        %v2376 = vsel %vm438, %v2374, %v2375
        %v2377 = vrot.slane %v2370, 2
        %v2378 = vsel %vm438, %v2375, %v2377
        %2379 = vrot.lane.b32.xlu0 %v2376, 127
        %v2380 = vpop.permute.xlu0 %2379
        %2381 = vrot.lane.b32.xlu0 %v2378, 127
        %v2382 = vpop.permute.xlu0 %2381
        %v2385 = vadd.f32 %v2364, %v2380
        %v2386 = vadd.f32 %v2365, %v2382
        %s2387 = sld [smem:[#allocation8 + $0x55]]
        %v2388 = vstv %s2387
        %v2389 = vmul.f32 %v2388, %v2253
        %v2390 = vmul.f32 %v2388, %v2254
        %v2391 = vmul.f32 %v2388, %v2255
        %v2395 = vrot.slane %v2389, 2
        %v2396 = vrot.slane %v2390, 2
        %v2397 = vsel %vm438, %v2395, %v2396
        %v2398 = vrot.slane %v2391, 2
        %v2399 = vsel %vm438, %v2396, %v2398
        %2400 = vrot.lane.b32.xlu0 %v2397, 126
        %v2401 = vpop.permute.xlu0 %2400
        %2402 = vrot.lane.b32.xlu0 %v2399, 126
        %v2403 = vpop.permute.xlu0 %2402
        %v2406 = vadd.f32 %v2385, %v2401
        %v2407 = vadd.f32 %v2386, %v2403
        %s2408 = sld [smem:[#allocation3 + $0x6]]
        %v2409 = vstv %s2408
        %v2410 = vmul.f32 %v2409, %v280
        %v2411 = vmul.f32 %v2409, %v281
        %v2412 = vmul.f32 %v2409, %v282
        %v2413 = vadd.f32 %v2410, 0.0
        %v2414 = vadd.f32 %v2411, 0.0
        %v2415 = vadd.f32 %v2412, 0.0
        %s2416 = sld [smem:[#allocation3 + $0x10]]
        %v2417 = vstv %s2416
        %v2418 = vmul.f32 %v2417, %v280
        %v2419 = vmul.f32 %v2417, %v281
        %v2420 = vmul.f32 %v2417, %v282
        %2424 = vrot.lane.b32.xlu0 %v2418, 127
        %v2425 = vpop.permute.xlu0 %2424
        %2426 = vrot.lane.b32.xlu0 %v2419, 127
        %v2427 = vpop.permute.xlu0 %2426
        %2428 = vrot.lane.b32.xlu0 %v2420, 127
        %v2429 = vpop.permute.xlu0 %2428
        %v2433 = vadd.f32 %v2413, %v2425
        %v2434 = vadd.f32 %v2414, %v2427
        %v2435 = vadd.f32 %v2415, %v2429
        %s2436 = sld [smem:[#allocation3 + $0x1a]]
        %v2437 = vstv %s2436
        %v2438 = vmul.f32 %v2437, %v280
        %v2439 = vmul.f32 %v2437, %v281
        %v2440 = vmul.f32 %v2437, %v282
        %2444 = vrot.lane.b32.xlu0 %v2438, 126
        %v2445 = vpop.permute.xlu0 %2444
        %2446 = vrot.lane.b32.xlu0 %v2439, 126
        %v2447 = vpop.permute.xlu0 %2446
        %2448 = vrot.lane.b32.xlu0 %v2440, 126
        %v2449 = vpop.permute.xlu0 %2448
        %v2453 = vadd.f32 %v2433, %v2445
        %v2454 = vadd.f32 %v2434, %v2447
        %v2455 = vadd.f32 %v2435, %v2449
        %s2456 = sld [smem:[#allocation3 + $0x24]]
        %v2457 = vstv %s2456
        %v2458 = vmul.f32 %v2457, %v280
        %v2459 = vmul.f32 %v2457, %v281
        %v2460 = vmul.f32 %v2457, %v282
        %v2464 = vrot.slane %v2458, 1
        %v2465 = vrot.slane %v2459, 1
        %v2466 = vsel %vm368, %v2464, %v2465
        %v2467 = vrot.slane %v2460, 1
        %v2468 = vsel %vm368, %v2465, %v2467
        %v2472 = vadd.f32 %v2453, %v2466
        %v2473 = vadd.f32 %v2454, %v2468
        %v2474 = vadd.f32 %v2455, %v2467
        %s2475 = sld [smem:[#allocation3 + $0x2e]]
        %v2476 = vstv %s2475
        %v2477 = vmul.f32 %v2476, %v280
        %v2478 = vmul.f32 %v2476, %v281
        %v2479 = vmul.f32 %v2476, %v282
        %v2483 = vrot.slane %v2477, 1
        %v2484 = vrot.slane %v2478, 1
        %v2485 = vsel %vm368, %v2483, %v2484
        %v2486 = vrot.slane %v2479, 1
        %v2487 = vsel %vm368, %v2484, %v2486
        %2488 = vrot.lane.b32.xlu0 %v2485, 127
        %v2489 = vpop.permute.xlu0 %2488
        %2490 = vrot.lane.b32.xlu0 %v2487, 127
        %v2491 = vpop.permute.xlu0 %2490
        %2492 = vrot.lane.b32.xlu0 %v2486, 127
        %v2493 = vpop.permute.xlu0 %2492
        %v2497 = vadd.f32 %v2472, %v2489
        %v2498 = vadd.f32 %v2473, %v2491
        %v2499 = vadd.f32 %v2474, %v2493
        %s2500 = sld [smem:[#allocation3 + $0x38]]
        %v2501 = vstv %s2500
        %v2502 = vmul.f32 %v2501, %v280
        %v2503 = vmul.f32 %v2501, %v281
        %v2504 = vmul.f32 %v2501, %v282
        %v2508 = vrot.slane %v2502, 1
        %v2509 = vrot.slane %v2503, 1
        %v2510 = vsel %vm368, %v2508, %v2509
        %v2511 = vrot.slane %v2504, 1
        %v2512 = vsel %vm368, %v2509, %v2511
        %2513 = vrot.lane.b32.xlu0 %v2510, 126
        %v2514 = vpop.permute.xlu0 %2513
        %2515 = vrot.lane.b32.xlu0 %v2512, 126
        %v2516 = vpop.permute.xlu0 %2515
        %2517 = vrot.lane.b32.xlu0 %v2511, 126
        %v2518 = vpop.permute.xlu0 %2517
        %v2522 = vadd.f32 %v2497, %v2514
        %v2523 = vadd.f32 %v2498, %v2516
        %v2524 = vadd.f32 %v2499, %v2518
        %s2525 = sld [smem:[#allocation3 + $0x42]]
        %v2526 = vstv %s2525
        %v2527 = vmul.f32 %v2526, %v280
        %v2528 = vmul.f32 %v2526, %v281
        %v2529 = vmul.f32 %v2526, %v282
        %v2533 = vrot.slane %v2527, 2
        %v2534 = vrot.slane %v2528, 2
        %v2535 = vsel %vm438, %v2533, %v2534
        %v2536 = vrot.slane %v2529, 2
        %v2537 = vsel %vm438, %v2534, %v2536
        %v2541 = vadd.f32 %v2522, %v2535
        %v2542 = vadd.f32 %v2523, %v2537
        %v2543 = vadd.f32 %v2524, %v2536
        %s2544 = sld [smem:[#allocation3 + $0x4c]]
        %v2545 = vstv %s2544
        %v2546 = vmul.f32 %v2545, %v280
        %v2547 = vmul.f32 %v2545, %v281
        %v2548 = vmul.f32 %v2545, %v282
        %v2552 = vrot.slane %v2546, 2
        %v2553 = vrot.slane %v2547, 2
        %v2554 = vsel %vm438, %v2552, %v2553
        %v2555 = vrot.slane %v2548, 2
        %v2556 = vsel %vm438, %v2553, %v2555
        %2557 = vrot.lane.b32.xlu0 %v2554, 127
        %v2558 = vpop.permute.xlu0 %2557
        %2559 = vrot.lane.b32.xlu0 %v2556, 127
        %v2560 = vpop.permute.xlu0 %2559
        %2561 = vrot.lane.b32.xlu0 %v2555, 127
        %v2562 = vpop.permute.xlu0 %2561
        %v2566 = vadd.f32 %v2541, %v2558
        %v2567 = vadd.f32 %v2542, %v2560
        %v2568 = vadd.f32 %v2543, %v2562
        %s2569 = sld [smem:[#allocation3 + $0x56]]
        %v2570 = vstv %s2569
        %v2571 = vmul.f32 %v2570, %v280
        %v2572 = vmul.f32 %v2570, %v281
        %v2573 = vmul.f32 %v2570, %v282
        %v2577 = vrot.slane %v2571, 2
        %v2578 = vrot.slane %v2572, 2
        %v2579 = vsel %vm438, %v2577, %v2578
        %v2580 = vrot.slane %v2573, 2
        %v2581 = vsel %vm438, %v2578, %v2580
        %2582 = vrot.lane.b32.xlu0 %v2579, 126
        %v2583 = vpop.permute.xlu0 %2582
        %2584 = vrot.lane.b32.xlu0 %v2581, 126
        %v2585 = vpop.permute.xlu0 %2584
        %2586 = vrot.lane.b32.xlu0 %v2580, 126
        %v2587 = vpop.permute.xlu0 %2586
        %v2591 = vadd.f32 %v2566, %v2583
        %v2592 = vadd.f32 %v2567, %v2585
        %v2593 = vadd.f32 %v2568, %v2587
        %s2594 = sld [smem:[#allocation6 + $0x6]]
        %v2595 = vstv %s2594
        %v2596 = vadd.f32 %v2591, %v2595
        %v2597 = vadd.f32 %v2592, %v2595
        %v2598 = vadd.f32 %v2593, %v2595
        %v2599 = vmax.f32 %v2596, 0.0
        %v2600 = vmax.f32 %v2597, 0.0
        %v2601 = vmax.f32 %v2598, 0.0
        %v2602 = vsel %vm309, %v2599, 0.0
        %v2603 = vsel %vm310, %v2600, 0.0
        %v2604 = vsel %vm311, %v2601, 0.0
        %s2605 = sld [smem:[#allocation8 + $0x6]]
        %v2606 = vstv %s2605
        %v2607 = vmul.f32 %v2606, %v2602
        %v2608 = vmul.f32 %v2606, %v2603
        %v2609 = vadd.f32 %v2406, %v2607
        %v2610 = vadd.f32 %v2407, %v2608
        %s2611 = sld [smem:[#allocation8 + $0x10]]
        %v2612 = vstv %s2611
        %v2613 = vmul.f32 %v2612, %v2602
        %v2614 = vmul.f32 %v2612, %v2603
        %2617 = vrot.lane.b32.xlu0 %v2613, 127
        %v2618 = vpop.permute.xlu0 %2617
        %2619 = vrot.lane.b32.xlu0 %v2614, 127
        %v2620 = vpop.permute.xlu0 %2619
        %v2623 = vadd.f32 %v2609, %v2618
        %v2624 = vadd.f32 %v2610, %v2620
        %s2625 = sld [smem:[#allocation8 + $0x1a]]
        %v2626 = vstv %s2625
        %v2627 = vmul.f32 %v2626, %v2602
        %v2628 = vmul.f32 %v2626, %v2603
        %2631 = vrot.lane.b32.xlu0 %v2627, 126
        %v2632 = vpop.permute.xlu0 %2631
        %2633 = vrot.lane.b32.xlu0 %v2628, 126
        %v2634 = vpop.permute.xlu0 %2633
        %v2637 = vadd.f32 %v2623, %v2632
        %v2638 = vadd.f32 %v2624, %v2634
        %s2639 = sld [smem:[#allocation8 + $0x24]]
        %v2640 = vstv %s2639
        %v2641 = vmul.f32 %v2640, %v2602
        %v2642 = vmul.f32 %v2640, %v2603
        %v2643 = vmul.f32 %v2640, %v2604
        %v2647 = vrot.slane %v2641, 1
        %v2648 = vrot.slane %v2642, 1
        %v2649 = vsel %vm368, %v2647, %v2648
        %v2650 = vrot.slane %v2643, 1
        %v2651 = vsel %vm368, %v2648, %v2650
        %v2654 = vadd.f32 %v2637, %v2649
        %v2655 = vadd.f32 %v2638, %v2651
        %s2656 = sld [smem:[#allocation8 + $0x2e]]
        %v2657 = vstv %s2656
        %v2658 = vmul.f32 %v2657, %v2602
        %v2659 = vmul.f32 %v2657, %v2603
        %v2660 = vmul.f32 %v2657, %v2604
        %v2664 = vrot.slane %v2658, 1
        %v2665 = vrot.slane %v2659, 1
        %v2666 = vsel %vm368, %v2664, %v2665
        %v2667 = vrot.slane %v2660, 1
        %v2668 = vsel %vm368, %v2665, %v2667
        %2669 = vrot.lane.b32.xlu0 %v2666, 127
        %v2670 = vpop.permute.xlu0 %2669
        %2671 = vrot.lane.b32.xlu0 %v2668, 127
        %v2672 = vpop.permute.xlu0 %2671
        %v2675 = vadd.f32 %v2654, %v2670
        %v2676 = vadd.f32 %v2655, %v2672
        %s2677 = sld [smem:[#allocation8 + $0x38]]
        %v2678 = vstv %s2677
        %v2679 = vmul.f32 %v2678, %v2602
        %v2680 = vmul.f32 %v2678, %v2603
        %v2681 = vmul.f32 %v2678, %v2604
        %v2685 = vrot.slane %v2679, 1
        %v2686 = vrot.slane %v2680, 1
        %v2687 = vsel %vm368, %v2685, %v2686
        %v2688 = vrot.slane %v2681, 1
        %v2689 = vsel %vm368, %v2686, %v2688
        %2690 = vrot.lane.b32.xlu0 %v2687, 126
        %v2691 = vpop.permute.xlu0 %2690
        %2692 = vrot.lane.b32.xlu0 %v2689, 126
        %v2693 = vpop.permute.xlu0 %2692
        %v2696 = vadd.f32 %v2675, %v2691
        %v2697 = vadd.f32 %v2676, %v2693
        %s2698 = sld [smem:[#allocation8 + $0x42]]
        %v2699 = vstv %s2698
        %v2700 = vmul.f32 %v2699, %v2602
        %v2701 = vmul.f32 %v2699, %v2603
        %v2702 = vmul.f32 %v2699, %v2604
        %v2706 = vrot.slane %v2700, 2
        %v2707 = vrot.slane %v2701, 2
        %v2708 = vsel %vm438, %v2706, %v2707
        %v2709 = vrot.slane %v2702, 2
        %v2710 = vsel %vm438, %v2707, %v2709
        %v2713 = vadd.f32 %v2696, %v2708
        %v2714 = vadd.f32 %v2697, %v2710
        %s2715 = sld [smem:[#allocation8 + $0x4c]]
        %v2716 = vstv %s2715
        %v2717 = vmul.f32 %v2716, %v2602
        %v2718 = vmul.f32 %v2716, %v2603
        %v2719 = vmul.f32 %v2716, %v2604
        %v2723 = vrot.slane %v2717, 2
        %v2724 = vrot.slane %v2718, 2
        %v2725 = vsel %vm438, %v2723, %v2724
        %v2726 = vrot.slane %v2719, 2
        %v2727 = vsel %vm438, %v2724, %v2726
        %2728 = vrot.lane.b32.xlu0 %v2725, 127
        %v2729 = vpop.permute.xlu0 %2728
        %2730 = vrot.lane.b32.xlu0 %v2727, 127
        %v2731 = vpop.permute.xlu0 %2730
        %v2734 = vadd.f32 %v2713, %v2729
        %v2735 = vadd.f32 %v2714, %v2731
        %s2736 = sld [smem:[#allocation8 + $0x56]]
        %v2737 = vstv %s2736
        %v2738 = vmul.f32 %v2737, %v2602
        %v2739 = vmul.f32 %v2737, %v2603
        %v2740 = vmul.f32 %v2737, %v2604
        %v2744 = vrot.slane %v2738, 2
        %v2745 = vrot.slane %v2739, 2
        %v2746 = vsel %vm438, %v2744, %v2745
        %v2747 = vrot.slane %v2740, 2
        %v2748 = vsel %vm438, %v2745, %v2747
        %2749 = vrot.lane.b32.xlu0 %v2746, 126
        %v2750 = vpop.permute.xlu0 %2749
        %2751 = vrot.lane.b32.xlu0 %v2748, 126
        %v2752 = vpop.permute.xlu0 %2751
        %v2755 = vadd.f32 %v2734, %v2750
        %v2756 = vadd.f32 %v2735, %v2752
        %s2757 = sld [smem:[#allocation3 + $0x7]]
        %v2758 = vstv %s2757
        %v2759 = vmul.f32 %v2758, %v280
        %v2760 = vmul.f32 %v2758, %v281
        %v2761 = vmul.f32 %v2758, %v282
        %v2762 = vadd.f32 %v2759, 0.0
        %v2763 = vadd.f32 %v2760, 0.0
        %v2764 = vadd.f32 %v2761, 0.0
        %s2765 = sld [smem:[#allocation3 + $0x11]]
        %v2766 = vstv %s2765
        %v2767 = vmul.f32 %v2766, %v280
        %v2768 = vmul.f32 %v2766, %v281
        %v2769 = vmul.f32 %v2766, %v282
        %2773 = vrot.lane.b32.xlu0 %v2767, 127
        %v2774 = vpop.permute.xlu0 %2773
        %2775 = vrot.lane.b32.xlu0 %v2768, 127
        %v2776 = vpop.permute.xlu0 %2775
        %2777 = vrot.lane.b32.xlu0 %v2769, 127
        %v2778 = vpop.permute.xlu0 %2777
        %v2782 = vadd.f32 %v2762, %v2774
        %v2783 = vadd.f32 %v2763, %v2776
        %v2784 = vadd.f32 %v2764, %v2778
        %s2785 = sld [smem:[#allocation3 + $0x1b]]
        %v2786 = vstv %s2785
        %v2787 = vmul.f32 %v2786, %v280
        %v2788 = vmul.f32 %v2786, %v281
        %v2789 = vmul.f32 %v2786, %v282
        %2793 = vrot.lane.b32.xlu0 %v2787, 126
        %v2794 = vpop.permute.xlu0 %2793
        %2795 = vrot.lane.b32.xlu0 %v2788, 126
        %v2796 = vpop.permute.xlu0 %2795
        %2797 = vrot.lane.b32.xlu0 %v2789, 126
        %v2798 = vpop.permute.xlu0 %2797
        %v2802 = vadd.f32 %v2782, %v2794
        %v2803 = vadd.f32 %v2783, %v2796
        %v2804 = vadd.f32 %v2784, %v2798
        %s2805 = sld [smem:[#allocation3 + $0x25]]
        %v2806 = vstv %s2805
        %v2807 = vmul.f32 %v2806, %v280
        %v2808 = vmul.f32 %v2806, %v281
        %v2809 = vmul.f32 %v2806, %v282
        %v2813 = vrot.slane %v2807, 1
        %v2814 = vrot.slane %v2808, 1
        %v2815 = vsel %vm368, %v2813, %v2814
        %v2816 = vrot.slane %v2809, 1
        %v2817 = vsel %vm368, %v2814, %v2816
        %v2821 = vadd.f32 %v2802, %v2815
        %v2822 = vadd.f32 %v2803, %v2817
        %v2823 = vadd.f32 %v2804, %v2816
        %s2824 = sld [smem:[#allocation3 + $0x2f]]
        %v2825 = vstv %s2824
        %v2826 = vmul.f32 %v2825, %v280
        %v2827 = vmul.f32 %v2825, %v281
        %v2828 = vmul.f32 %v2825, %v282
        %v2832 = vrot.slane %v2826, 1
        %v2833 = vrot.slane %v2827, 1
        %v2834 = vsel %vm368, %v2832, %v2833
        %v2835 = vrot.slane %v2828, 1
        %v2836 = vsel %vm368, %v2833, %v2835
        %2837 = vrot.lane.b32.xlu0 %v2834, 127
        %v2838 = vpop.permute.xlu0 %2837
        %2839 = vrot.lane.b32.xlu0 %v2836, 127
        %v2840 = vpop.permute.xlu0 %2839
        %2841 = vrot.lane.b32.xlu0 %v2835, 127
        %v2842 = vpop.permute.xlu0 %2841
        %v2846 = vadd.f32 %v2821, %v2838
        %v2847 = vadd.f32 %v2822, %v2840
        %v2848 = vadd.f32 %v2823, %v2842
        %s2849 = sld [smem:[#allocation3 + $0x39]]
        %v2850 = vstv %s2849
        %v2851 = vmul.f32 %v2850, %v280
        %v2852 = vmul.f32 %v2850, %v281
        %v2853 = vmul.f32 %v2850, %v282
        %v2857 = vrot.slane %v2851, 1
        %v2858 = vrot.slane %v2852, 1
        %v2859 = vsel %vm368, %v2857, %v2858
        %v2860 = vrot.slane %v2853, 1
        %v2861 = vsel %vm368, %v2858, %v2860
        %2862 = vrot.lane.b32.xlu0 %v2859, 126
        %v2863 = vpop.permute.xlu0 %2862
        %2864 = vrot.lane.b32.xlu0 %v2861, 126
        %v2865 = vpop.permute.xlu0 %2864
        %2866 = vrot.lane.b32.xlu0 %v2860, 126
        %v2867 = vpop.permute.xlu0 %2866
        %v2871 = vadd.f32 %v2846, %v2863
        %v2872 = vadd.f32 %v2847, %v2865
        %v2873 = vadd.f32 %v2848, %v2867
        %s2874 = sld [smem:[#allocation3 + $0x43]]
        %v2875 = vstv %s2874
        %v2876 = vmul.f32 %v2875, %v280
        %v2877 = vmul.f32 %v2875, %v281
        %v2878 = vmul.f32 %v2875, %v282
        %v2882 = vrot.slane %v2876, 2
        %v2883 = vrot.slane %v2877, 2
        %v2884 = vsel %vm438, %v2882, %v2883
        %v2885 = vrot.slane %v2878, 2
        %v2886 = vsel %vm438, %v2883, %v2885
        %v2890 = vadd.f32 %v2871, %v2884
        %v2891 = vadd.f32 %v2872, %v2886
        %v2892 = vadd.f32 %v2873, %v2885
        %s2893 = sld [smem:[#allocation3 + $0x4d]]
        %v2894 = vstv %s2893
        %v2895 = vmul.f32 %v2894, %v280
        %v2896 = vmul.f32 %v2894, %v281
        %v2897 = vmul.f32 %v2894, %v282
        %v2901 = vrot.slane %v2895, 2
        %v2902 = vrot.slane %v2896, 2
        %v2903 = vsel %vm438, %v2901, %v2902
        %v2904 = vrot.slane %v2897, 2
        %v2905 = vsel %vm438, %v2902, %v2904
        %2906 = vrot.lane.b32.xlu0 %v2903, 127
        %v2907 = vpop.permute.xlu0 %2906
        %2908 = vrot.lane.b32.xlu0 %v2905, 127
        %v2909 = vpop.permute.xlu0 %2908
        %2910 = vrot.lane.b32.xlu0 %v2904, 127
        %v2911 = vpop.permute.xlu0 %2910
        %v2915 = vadd.f32 %v2890, %v2907
        %v2916 = vadd.f32 %v2891, %v2909
        %v2917 = vadd.f32 %v2892, %v2911
        %s2918 = sld [smem:[#allocation3 + $0x57]]
        %v2919 = vstv %s2918
        %v2920 = vmul.f32 %v2919, %v280
        %v2921 = vmul.f32 %v2919, %v281
        %v2922 = vmul.f32 %v2919, %v282
        %v2926 = vrot.slane %v2920, 2
        %v2927 = vrot.slane %v2921, 2
        %v2928 = vsel %vm438, %v2926, %v2927
        %v2929 = vrot.slane %v2922, 2
        %v2930 = vsel %vm438, %v2927, %v2929
        %2931 = vrot.lane.b32.xlu0 %v2928, 126
        %v2932 = vpop.permute.xlu0 %2931
        %2933 = vrot.lane.b32.xlu0 %v2930, 126
        %v2934 = vpop.permute.xlu0 %2933
        %2935 = vrot.lane.b32.xlu0 %v2929, 126
        %v2936 = vpop.permute.xlu0 %2935
        %v2940 = vadd.f32 %v2915, %v2932
        %v2941 = vadd.f32 %v2916, %v2934
        %v2942 = vadd.f32 %v2917, %v2936
        %s2943 = sld [smem:[#allocation6 + $0x7]]
        %v2944 = vstv %s2943
        %v2945 = vadd.f32 %v2940, %v2944
        %v2946 = vadd.f32 %v2941, %v2944
        %v2947 = vadd.f32 %v2942, %v2944
        %v2948 = vmax.f32 %v2945, 0.0
        %v2949 = vmax.f32 %v2946, 0.0
        %v2950 = vmax.f32 %v2947, 0.0
        %v2951 = vsel %vm309, %v2948, 0.0
        %v2952 = vsel %vm310, %v2949, 0.0
        %v2953 = vsel %vm311, %v2950, 0.0
        %s2954 = sld [smem:[#allocation8 + $0x7]]
        %v2955 = vstv %s2954
        %v2956 = vmul.f32 %v2955, %v2951
        %v2957 = vmul.f32 %v2955, %v2952
        %v2958 = vadd.f32 %v2755, %v2956
        %v2959 = vadd.f32 %v2756, %v2957
        %s2960 = sld [smem:[#allocation8 + $0x11]]
        %v2961 = vstv %s2960
        %v2962 = vmul.f32 %v2961, %v2951
        %v2963 = vmul.f32 %v2961, %v2952
        %2966 = vrot.lane.b32.xlu0 %v2962, 127
        %v2967 = vpop.permute.xlu0 %2966
        %2968 = vrot.lane.b32.xlu0 %v2963, 127
        %v2969 = vpop.permute.xlu0 %2968
        %v2972 = vadd.f32 %v2958, %v2967
        %v2973 = vadd.f32 %v2959, %v2969
        %s2974 = sld [smem:[#allocation8 + $0x1b]]
        %v2975 = vstv %s2974
        %v2976 = vmul.f32 %v2975, %v2951
        %v2977 = vmul.f32 %v2975, %v2952
        %2980 = vrot.lane.b32.xlu0 %v2976, 126
        %v2981 = vpop.permute.xlu0 %2980
        %2982 = vrot.lane.b32.xlu0 %v2977, 126
        %v2983 = vpop.permute.xlu0 %2982
        %v2986 = vadd.f32 %v2972, %v2981
        %v2987 = vadd.f32 %v2973, %v2983
        %s2988 = sld [smem:[#allocation8 + $0x25]]
        %v2989 = vstv %s2988
        %v2990 = vmul.f32 %v2989, %v2951
        %v2991 = vmul.f32 %v2989, %v2952
        %v2992 = vmul.f32 %v2989, %v2953
        %v2996 = vrot.slane %v2990, 1
        %v2997 = vrot.slane %v2991, 1
        %v2998 = vsel %vm368, %v2996, %v2997
        %v2999 = vrot.slane %v2992, 1
        %v3000 = vsel %vm368, %v2997, %v2999
        %v3003 = vadd.f32 %v2986, %v2998
        %v3004 = vadd.f32 %v2987, %v3000
        %s3005 = sld [smem:[#allocation8 + $0x2f]]
        %v3006 = vstv %s3005
        %v3007 = vmul.f32 %v3006, %v2951
        %v3008 = vmul.f32 %v3006, %v2952
        %v3009 = vmul.f32 %v3006, %v2953
        %v3013 = vrot.slane %v3007, 1
        %v3014 = vrot.slane %v3008, 1
        %v3015 = vsel %vm368, %v3013, %v3014
        %v3016 = vrot.slane %v3009, 1
        %v3017 = vsel %vm368, %v3014, %v3016
        %3018 = vrot.lane.b32.xlu0 %v3015, 127
        %v3019 = vpop.permute.xlu0 %3018
        %3020 = vrot.lane.b32.xlu0 %v3017, 127
        %v3021 = vpop.permute.xlu0 %3020
        %v3024 = vadd.f32 %v3003, %v3019
        %v3025 = vadd.f32 %v3004, %v3021
        %s3026 = sld [smem:[#allocation8 + $0x39]]
        %v3027 = vstv %s3026
        %v3028 = vmul.f32 %v3027, %v2951
        %v3029 = vmul.f32 %v3027, %v2952
        %v3030 = vmul.f32 %v3027, %v2953
        %v3034 = vrot.slane %v3028, 1
        %v3035 = vrot.slane %v3029, 1
        %v3036 = vsel %vm368, %v3034, %v3035
        %v3037 = vrot.slane %v3030, 1
        %v3038 = vsel %vm368, %v3035, %v3037
        %3039 = vrot.lane.b32.xlu0 %v3036, 126
        %v3040 = vpop.permute.xlu0 %3039
        %3041 = vrot.lane.b32.xlu0 %v3038, 126
        %v3042 = vpop.permute.xlu0 %3041
        %v3045 = vadd.f32 %v3024, %v3040
        %v3046 = vadd.f32 %v3025, %v3042
        %s3047 = sld [smem:[#allocation8 + $0x43]]
        %v3048 = vstv %s3047
        %v3049 = vmul.f32 %v3048, %v2951
        %v3050 = vmul.f32 %v3048, %v2952
        %v3051 = vmul.f32 %v3048, %v2953
        %v3055 = vrot.slane %v3049, 2
        %v3056 = vrot.slane %v3050, 2
        %v3057 = vsel %vm438, %v3055, %v3056
        %v3058 = vrot.slane %v3051, 2
        %v3059 = vsel %vm438, %v3056, %v3058
        %v3062 = vadd.f32 %v3045, %v3057
        %v3063 = vadd.f32 %v3046, %v3059
        %s3064 = sld [smem:[#allocation8 + $0x4d]]
        %v3065 = vstv %s3064
        %v3066 = vmul.f32 %v3065, %v2951
        %v3067 = vmul.f32 %v3065, %v2952
        %v3068 = vmul.f32 %v3065, %v2953
        %v3072 = vrot.slane %v3066, 2
        %v3073 = vrot.slane %v3067, 2
        %v3074 = vsel %vm438, %v3072, %v3073
        %v3075 = vrot.slane %v3068, 2
        %v3076 = vsel %vm438, %v3073, %v3075
        %3077 = vrot.lane.b32.xlu0 %v3074, 127
        %v3078 = vpop.permute.xlu0 %3077
        %3079 = vrot.lane.b32.xlu0 %v3076, 127
        %v3080 = vpop.permute.xlu0 %3079
        %v3083 = vadd.f32 %v3062, %v3078
        %v3084 = vadd.f32 %v3063, %v3080
        %s3085 = sld [smem:[#allocation8 + $0x57]]
        %v3086 = vstv %s3085
        %v3087 = vmul.f32 %v3086, %v2951
        %v3088 = vmul.f32 %v3086, %v2952
        %v3089 = vmul.f32 %v3086, %v2953
        %v3093 = vrot.slane %v3087, 2
        %v3094 = vrot.slane %v3088, 2
        %v3095 = vsel %vm438, %v3093, %v3094
        %v3096 = vrot.slane %v3089, 2
        %v3097 = vsel %vm438, %v3094, %v3096
        %3098 = vrot.lane.b32.xlu0 %v3095, 126
        %v3099 = vpop.permute.xlu0 %3098
        %3100 = vrot.lane.b32.xlu0 %v3097, 126
        %v3101 = vpop.permute.xlu0 %3100
        %v3104 = vadd.f32 %v3083, %v3099
        %v3105 = vadd.f32 %v3084, %v3101
        %s3106 = sld [smem:[#allocation3 + $0x8]]
        %v3107 = vstv %s3106
        %v3108 = vmul.f32 %v3107, %v280
        %v3109 = vmul.f32 %v3107, %v281
        %v3110 = vmul.f32 %v3107, %v282
        %v3111 = vadd.f32 %v3108, 0.0
        %v3112 = vadd.f32 %v3109, 0.0
        %v3113 = vadd.f32 %v3110, 0.0
        %s3114 = sld [smem:[#allocation3 + $0x12]]
        %v3115 = vstv %s3114
        %v3116 = vmul.f32 %v3115, %v280
        %v3117 = vmul.f32 %v3115, %v281
        %v3118 = vmul.f32 %v3115, %v282
        %3122 = vrot.lane.b32.xlu0 %v3116, 127
        %v3123 = vpop.permute.xlu0 %3122
        %3124 = vrot.lane.b32.xlu0 %v3117, 127
        %v3125 = vpop.permute.xlu0 %3124
        %3126 = vrot.lane.b32.xlu0 %v3118, 127
        %v3127 = vpop.permute.xlu0 %3126
        %v3131 = vadd.f32 %v3111, %v3123
        %v3132 = vadd.f32 %v3112, %v3125
        %v3133 = vadd.f32 %v3113, %v3127
        %s3134 = sld [smem:[#allocation3 + $0x1c]]
        %v3135 = vstv %s3134
        %v3136 = vmul.f32 %v3135, %v280
        %v3137 = vmul.f32 %v3135, %v281
        %v3138 = vmul.f32 %v3135, %v282
        %3142 = vrot.lane.b32.xlu0 %v3136, 126
        %v3143 = vpop.permute.xlu0 %3142
        %3144 = vrot.lane.b32.xlu0 %v3137, 126
        %v3145 = vpop.permute.xlu0 %3144
        %3146 = vrot.lane.b32.xlu0 %v3138, 126
        %v3147 = vpop.permute.xlu0 %3146
        %v3151 = vadd.f32 %v3131, %v3143
        %v3152 = vadd.f32 %v3132, %v3145
        %v3153 = vadd.f32 %v3133, %v3147
        %s3154 = sld [smem:[#allocation3 + $0x26]]
        %v3155 = vstv %s3154
        %v3156 = vmul.f32 %v3155, %v280
        %v3157 = vmul.f32 %v3155, %v281
        %v3158 = vmul.f32 %v3155, %v282
        %v3162 = vrot.slane %v3156, 1
        %v3163 = vrot.slane %v3157, 1
        %v3164 = vsel %vm368, %v3162, %v3163
        %v3165 = vrot.slane %v3158, 1
        %v3166 = vsel %vm368, %v3163, %v3165
        %v3170 = vadd.f32 %v3151, %v3164
        %v3171 = vadd.f32 %v3152, %v3166
        %v3172 = vadd.f32 %v3153, %v3165
        %s3173 = sld [smem:[#allocation3 + $0x30]]
        %v3174 = vstv %s3173
        %v3175 = vmul.f32 %v3174, %v280
        %v3176 = vmul.f32 %v3174, %v281
        %v3177 = vmul.f32 %v3174, %v282
        %v3181 = vrot.slane %v3175, 1
        %v3182 = vrot.slane %v3176, 1
        %v3183 = vsel %vm368, %v3181, %v3182
        %v3184 = vrot.slane %v3177, 1
        %v3185 = vsel %vm368, %v3182, %v3184
        %3186 = vrot.lane.b32.xlu0 %v3183, 127
        %v3187 = vpop.permute.xlu0 %3186
        %3188 = vrot.lane.b32.xlu0 %v3185, 127
        %v3189 = vpop.permute.xlu0 %3188
        %3190 = vrot.lane.b32.xlu0 %v3184, 127
        %v3191 = vpop.permute.xlu0 %3190
        %v3195 = vadd.f32 %v3170, %v3187
        %v3196 = vadd.f32 %v3171, %v3189
        %v3197 = vadd.f32 %v3172, %v3191
        %s3198 = sld [smem:[#allocation3 + $0x3a]]
        %v3199 = vstv %s3198
        %v3200 = vmul.f32 %v3199, %v280
        %v3201 = vmul.f32 %v3199, %v281
        %v3202 = vmul.f32 %v3199, %v282
        %v3206 = vrot.slane %v3200, 1
        %v3207 = vrot.slane %v3201, 1
        %v3208 = vsel %vm368, %v3206, %v3207
        %v3209 = vrot.slane %v3202, 1
        %v3210 = vsel %vm368, %v3207, %v3209
        %3211 = vrot.lane.b32.xlu0 %v3208, 126
        %v3212 = vpop.permute.xlu0 %3211
        %3213 = vrot.lane.b32.xlu0 %v3210, 126
        %v3214 = vpop.permute.xlu0 %3213
        %3215 = vrot.lane.b32.xlu0 %v3209, 126
        %v3216 = vpop.permute.xlu0 %3215
        %v3220 = vadd.f32 %v3195, %v3212
        %v3221 = vadd.f32 %v3196, %v3214
        %v3222 = vadd.f32 %v3197, %v3216
        %s3223 = sld [smem:[#allocation3 + $0x44]]
        %v3224 = vstv %s3223
        %v3225 = vmul.f32 %v3224, %v280
        %v3226 = vmul.f32 %v3224, %v281
        %v3227 = vmul.f32 %v3224, %v282
        %v3231 = vrot.slane %v3225, 2
        %v3232 = vrot.slane %v3226, 2
        %v3233 = vsel %vm438, %v3231, %v3232
        %v3234 = vrot.slane %v3227, 2
        %v3235 = vsel %vm438, %v3232, %v3234
        %v3239 = vadd.f32 %v3220, %v3233
        %v3240 = vadd.f32 %v3221, %v3235
        %v3241 = vadd.f32 %v3222, %v3234
        %s3242 = sld [smem:[#allocation3 + $0x4e]]
        %v3243 = vstv %s3242
        %v3244 = vmul.f32 %v3243, %v280
        %v3245 = vmul.f32 %v3243, %v281
        %v3246 = vmul.f32 %v3243, %v282
        %v3250 = vrot.slane %v3244, 2
        %v3251 = vrot.slane %v3245, 2
        %v3252 = vsel %vm438, %v3250, %v3251
        %v3253 = vrot.slane %v3246, 2
        %v3254 = vsel %vm438, %v3251, %v3253
        %3255 = vrot.lane.b32.xlu0 %v3252, 127
        %v3256 = vpop.permute.xlu0 %3255
        %3257 = vrot.lane.b32.xlu0 %v3254, 127
        %v3258 = vpop.permute.xlu0 %3257
        %3259 = vrot.lane.b32.xlu0 %v3253, 127
        %v3260 = vpop.permute.xlu0 %3259
        %v3264 = vadd.f32 %v3239, %v3256
        %v3265 = vadd.f32 %v3240, %v3258
        %v3266 = vadd.f32 %v3241, %v3260
        %s3267 = sld [smem:[#allocation3 + $0x58]]
        %v3268 = vstv %s3267
        %v3269 = vmul.f32 %v3268, %v280
        %v3270 = vmul.f32 %v3268, %v281
        %v3271 = vmul.f32 %v3268, %v282
        %v3275 = vrot.slane %v3269, 2
        %v3276 = vrot.slane %v3270, 2
        %v3277 = vsel %vm438, %v3275, %v3276
        %v3278 = vrot.slane %v3271, 2
        %v3279 = vsel %vm438, %v3276, %v3278
        %3280 = vrot.lane.b32.xlu0 %v3277, 126
        %v3281 = vpop.permute.xlu0 %3280
        %3282 = vrot.lane.b32.xlu0 %v3279, 126
        %v3283 = vpop.permute.xlu0 %3282
        %3284 = vrot.lane.b32.xlu0 %v3278, 126
        %v3285 = vpop.permute.xlu0 %3284
        %v3289 = vadd.f32 %v3264, %v3281
        %v3290 = vadd.f32 %v3265, %v3283
        %v3291 = vadd.f32 %v3266, %v3285
        %s3292 = sld [smem:[#allocation6 + $0x8]]
        %v3293 = vstv %s3292
        %v3294 = vadd.f32 %v3289, %v3293
        %v3295 = vadd.f32 %v3290, %v3293
        %v3296 = vadd.f32 %v3291, %v3293
        %v3297 = vmax.f32 %v3294, 0.0
        %v3298 = vmax.f32 %v3295, 0.0
        %v3299 = vmax.f32 %v3296, 0.0
        %v3300 = vsel %vm309, %v3297, 0.0
        %v3301 = vsel %vm310, %v3298, 0.0
        %v3302 = vsel %vm311, %v3299, 0.0
        %s3303 = sld [smem:[#allocation8 + $0x8]]
        %v3304 = vstv %s3303
        %v3305 = vmul.f32 %v3304, %v3300
        %v3306 = vmul.f32 %v3304, %v3301
        %v3307 = vadd.f32 %v3104, %v3305
        %v3308 = vadd.f32 %v3105, %v3306
        %s3309 = sld [smem:[#allocation8 + $0x12]]
        %v3310 = vstv %s3309
        %v3311 = vmul.f32 %v3310, %v3300
        %v3312 = vmul.f32 %v3310, %v3301
        %3315 = vrot.lane.b32.xlu0 %v3311, 127
        %v3316 = vpop.permute.xlu0 %3315
        %3317 = vrot.lane.b32.xlu0 %v3312, 127
        %v3318 = vpop.permute.xlu0 %3317
        %v3321 = vadd.f32 %v3307, %v3316
        %v3322 = vadd.f32 %v3308, %v3318
        %s3323 = sld [smem:[#allocation8 + $0x1c]]
        %v3324 = vstv %s3323
        %v3325 = vmul.f32 %v3324, %v3300
        %v3326 = vmul.f32 %v3324, %v3301
        %3329 = vrot.lane.b32.xlu0 %v3325, 126
        %v3330 = vpop.permute.xlu0 %3329
        %3331 = vrot.lane.b32.xlu0 %v3326, 126
        %v3332 = vpop.permute.xlu0 %3331
        %v3335 = vadd.f32 %v3321, %v3330
        %v3336 = vadd.f32 %v3322, %v3332
        %s3337 = sld [smem:[#allocation8 + $0x26]]
        %v3338 = vstv %s3337
        %v3339 = vmul.f32 %v3338, %v3300
        %v3340 = vmul.f32 %v3338, %v3301
        %v3341 = vmul.f32 %v3338, %v3302
        %v3345 = vrot.slane %v3339, 1
        %v3346 = vrot.slane %v3340, 1
        %v3347 = vsel %vm368, %v3345, %v3346
        %v3348 = vrot.slane %v3341, 1
        %v3349 = vsel %vm368, %v3346, %v3348
        %v3352 = vadd.f32 %v3335, %v3347
        %v3353 = vadd.f32 %v3336, %v3349
        %s3354 = sld [smem:[#allocation8 + $0x30]]
        %v3355 = vstv %s3354
        %v3356 = vmul.f32 %v3355, %v3300
        %v3357 = vmul.f32 %v3355, %v3301
        %v3358 = vmul.f32 %v3355, %v3302
        %v3362 = vrot.slane %v3356, 1
        %v3363 = vrot.slane %v3357, 1
        %v3364 = vsel %vm368, %v3362, %v3363
        %v3365 = vrot.slane %v3358, 1
        %v3366 = vsel %vm368, %v3363, %v3365
        %3367 = vrot.lane.b32.xlu0 %v3364, 127
        %v3368 = vpop.permute.xlu0 %3367
        %3369 = vrot.lane.b32.xlu0 %v3366, 127
        %v3370 = vpop.permute.xlu0 %3369
        %v3373 = vadd.f32 %v3352, %v3368
        %v3374 = vadd.f32 %v3353, %v3370
        %s3375 = sld [smem:[#allocation8 + $0x3a]]
        %v3376 = vstv %s3375
        %v3377 = vmul.f32 %v3376, %v3300
        %v3378 = vmul.f32 %v3376, %v3301
        %v3379 = vmul.f32 %v3376, %v3302
        %v3383 = vrot.slane %v3377, 1
        %v3384 = vrot.slane %v3378, 1
        %v3385 = vsel %vm368, %v3383, %v3384
        %v3386 = vrot.slane %v3379, 1
        %v3387 = vsel %vm368, %v3384, %v3386
        %3388 = vrot.lane.b32.xlu0 %v3385, 126
        %v3389 = vpop.permute.xlu0 %3388
        %3390 = vrot.lane.b32.xlu0 %v3387, 126
        %v3391 = vpop.permute.xlu0 %3390
        %v3394 = vadd.f32 %v3373, %v3389
        %v3395 = vadd.f32 %v3374, %v3391
        %s3396 = sld [smem:[#allocation8 + $0x44]]
        %v3397 = vstv %s3396
        %v3398 = vmul.f32 %v3397, %v3300
        %v3399 = vmul.f32 %v3397, %v3301
        %v3400 = vmul.f32 %v3397, %v3302
        %v3404 = vrot.slane %v3398, 2
        %v3405 = vrot.slane %v3399, 2
        %v3406 = vsel %vm438, %v3404, %v3405
        %v3407 = vrot.slane %v3400, 2
        %v3408 = vsel %vm438, %v3405, %v3407
        %v3411 = vadd.f32 %v3394, %v3406
        %v3412 = vadd.f32 %v3395, %v3408
        %s3413 = sld [smem:[#allocation8 + $0x4e]]
        %v3414 = vstv %s3413
        %v3415 = vmul.f32 %v3414, %v3300
        %v3416 = vmul.f32 %v3414, %v3301
        %v3417 = vmul.f32 %v3414, %v3302
        %v3421 = vrot.slane %v3415, 2
        %v3422 = vrot.slane %v3416, 2
        %v3423 = vsel %vm438, %v3421, %v3422
        %v3424 = vrot.slane %v3417, 2
        %v3425 = vsel %vm438, %v3422, %v3424
        %3426 = vrot.lane.b32.xlu0 %v3423, 127
        %v3427 = vpop.permute.xlu0 %3426
        %3428 = vrot.lane.b32.xlu0 %v3425, 127
        %v3429 = vpop.permute.xlu0 %3428
        %v3432 = vadd.f32 %v3411, %v3427
        %v3433 = vadd.f32 %v3412, %v3429
        %s3434 = sld [smem:[#allocation8 + $0x58]]
        %v3435 = vstv %s3434
        %v3436 = vmul.f32 %v3435, %v3300
        %v3437 = vmul.f32 %v3435, %v3301
        %v3438 = vmul.f32 %v3435, %v3302
        %v3442 = vrot.slane %v3436, 2
        %v3443 = vrot.slane %v3437, 2
        %v3444 = vsel %vm438, %v3442, %v3443
        %v3445 = vrot.slane %v3438, 2
        %v3446 = vsel %vm438, %v3443, %v3445
        %3447 = vrot.lane.b32.xlu0 %v3444, 126
        %v3448 = vpop.permute.xlu0 %3447
        %3449 = vrot.lane.b32.xlu0 %v3446, 126
        %v3450 = vpop.permute.xlu0 %3449
        %v3453 = vadd.f32 %v3432, %v3448
        %v3454 = vadd.f32 %v3433, %v3450
        %s3455 = sld [smem:[#allocation3 + $0x9]]
        %v3456 = vstv %s3455
        %v3457 = vmul.f32 %v3456, %v280
        %v3458 = vmul.f32 %v3456, %v281
        %v3459 = vmul.f32 %v3456, %v282
        %v3460 = vadd.f32 %v3457, 0.0
        %v3461 = vadd.f32 %v3458, 0.0
        %v3462 = vadd.f32 %v3459, 0.0
        %s3463 = sld [smem:[#allocation3 + $0x13]]
        %v3464 = vstv %s3463
        %v3465 = vmul.f32 %v3464, %v280
        %v3466 = vmul.f32 %v3464, %v281
        %v3467 = vmul.f32 %v3464, %v282
        %3471 = vrot.lane.b32.xlu0 %v3465, 127
        %v3472 = vpop.permute.xlu0 %3471
        %3473 = vrot.lane.b32.xlu0 %v3466, 127
        %v3474 = vpop.permute.xlu0 %3473
        %3475 = vrot.lane.b32.xlu0 %v3467, 127
        %v3476 = vpop.permute.xlu0 %3475
        %v3480 = vadd.f32 %v3460, %v3472
        %v3481 = vadd.f32 %v3461, %v3474
        %v3482 = vadd.f32 %v3462, %v3476
        %s3483 = sld [smem:[#allocation3 + $0x1d]]
        %v3484 = vstv %s3483
        %v3485 = vmul.f32 %v3484, %v280
        %v3486 = vmul.f32 %v3484, %v281
        %v3487 = vmul.f32 %v3484, %v282
        %3491 = vrot.lane.b32.xlu0 %v3485, 126
        %v3492 = vpop.permute.xlu0 %3491
        %3493 = vrot.lane.b32.xlu0 %v3486, 126
        %v3494 = vpop.permute.xlu0 %3493
        %3495 = vrot.lane.b32.xlu0 %v3487, 126
        %v3496 = vpop.permute.xlu0 %3495
        %v3500 = vadd.f32 %v3480, %v3492
        %v3501 = vadd.f32 %v3481, %v3494
        %v3502 = vadd.f32 %v3482, %v3496
        %s3503 = sld [smem:[#allocation3 + $0x27]]
        %v3504 = vstv %s3503
        %v3505 = vmul.f32 %v3504, %v280
        %v3506 = vmul.f32 %v3504, %v281
        %v3507 = vmul.f32 %v3504, %v282
        %v3511 = vrot.slane %v3505, 1
        %v3512 = vrot.slane %v3506, 1
        %v3513 = vsel %vm368, %v3511, %v3512
        %v3514 = vrot.slane %v3507, 1
        %v3515 = vsel %vm368, %v3512, %v3514
        %v3519 = vadd.f32 %v3500, %v3513
        %v3520 = vadd.f32 %v3501, %v3515
        %v3521 = vadd.f32 %v3502, %v3514
        %s3522 = sld [smem:[#allocation3 + $0x31]]
        %v3523 = vstv %s3522
        %v3524 = vmul.f32 %v3523, %v280
        %v3525 = vmul.f32 %v3523, %v281
        %v3526 = vmul.f32 %v3523, %v282
        %v3530 = vrot.slane %v3524, 1
        %v3531 = vrot.slane %v3525, 1
        %v3532 = vsel %vm368, %v3530, %v3531
        %v3533 = vrot.slane %v3526, 1
        %v3534 = vsel %vm368, %v3531, %v3533
        %3535 = vrot.lane.b32.xlu0 %v3532, 127
        %v3536 = vpop.permute.xlu0 %3535
        %3537 = vrot.lane.b32.xlu0 %v3534, 127
        %v3538 = vpop.permute.xlu0 %3537
        %3539 = vrot.lane.b32.xlu0 %v3533, 127
        %v3540 = vpop.permute.xlu0 %3539
        %v3544 = vadd.f32 %v3519, %v3536
        %v3545 = vadd.f32 %v3520, %v3538
        %v3546 = vadd.f32 %v3521, %v3540
        %s3547 = sld [smem:[#allocation3 + $0x3b]]
        %v3548 = vstv %s3547
        %v3549 = vmul.f32 %v3548, %v280
        %v3550 = vmul.f32 %v3548, %v281
        %v3551 = vmul.f32 %v3548, %v282
        %v3555 = vrot.slane %v3549, 1
        %v3556 = vrot.slane %v3550, 1
        %v3557 = vsel %vm368, %v3555, %v3556
        %v3558 = vrot.slane %v3551, 1
        %v3559 = vsel %vm368, %v3556, %v3558
        %3560 = vrot.lane.b32.xlu0 %v3557, 126
        %v3561 = vpop.permute.xlu0 %3560
        %3562 = vrot.lane.b32.xlu0 %v3559, 126
        %v3563 = vpop.permute.xlu0 %3562
        %3564 = vrot.lane.b32.xlu0 %v3558, 126
        %v3565 = vpop.permute.xlu0 %3564
        %v3569 = vadd.f32 %v3544, %v3561
        %v3570 = vadd.f32 %v3545, %v3563
        %v3571 = vadd.f32 %v3546, %v3565
        %s3572 = sld [smem:[#allocation3 + $0x45]]
        %v3573 = vstv %s3572
        %v3574 = vmul.f32 %v3573, %v280
        %v3575 = vmul.f32 %v3573, %v281
        %v3576 = vmul.f32 %v3573, %v282
        %v3580 = vrot.slane %v3574, 2
        %v3581 = vrot.slane %v3575, 2
        %v3582 = vsel %vm438, %v3580, %v3581
        %v3583 = vrot.slane %v3576, 2
        %v3584 = vsel %vm438, %v3581, %v3583
        %v3588 = vadd.f32 %v3569, %v3582
        %v3589 = vadd.f32 %v3570, %v3584
        %v3590 = vadd.f32 %v3571, %v3583
        %s3591 = sld [smem:[#allocation3 + $0x4f]]
        %v3592 = vstv %s3591
        %v3593 = vmul.f32 %v3592, %v280
        %v3594 = vmul.f32 %v3592, %v281
        %v3595 = vmul.f32 %v3592, %v282
        %v3599 = vrot.slane %v3593, 2
        %v3600 = vrot.slane %v3594, 2
        %v3601 = vsel %vm438, %v3599, %v3600
        %v3602 = vrot.slane %v3595, 2
        %v3603 = vsel %vm438, %v3600, %v3602
        %3604 = vrot.lane.b32.xlu0 %v3601, 127
        %v3605 = vpop.permute.xlu0 %3604
        %3606 = vrot.lane.b32.xlu0 %v3603, 127
        %v3607 = vpop.permute.xlu0 %3606
        %3608 = vrot.lane.b32.xlu0 %v3602, 127
        %v3609 = vpop.permute.xlu0 %3608
        %v3613 = vadd.f32 %v3588, %v3605
        %v3614 = vadd.f32 %v3589, %v3607
        %v3615 = vadd.f32 %v3590, %v3609
        %s3616 = sld [smem:[#allocation3 + $0x59]]
        %v3617 = vstv %s3616
        %v3618 = vmul.f32 %v3617, %v280
        %v3619 = vmul.f32 %v3617, %v281
        %v3620 = vmul.f32 %v3617, %v282
        %v3624 = vrot.slane %v3618, 2
        %v3625 = vrot.slane %v3619, 2
        %v3626 = vsel %vm438, %v3624, %v3625
        %v3627 = vrot.slane %v3620, 2
        %v3628 = vsel %vm438, %v3625, %v3627
        %3629 = vrot.lane.b32.xlu0 %v3626, 126
        %v3630 = vpop.permute.xlu0 %3629
        %3631 = vrot.lane.b32.xlu0 %v3628, 126
        %v3632 = vpop.permute.xlu0 %3631
        %3633 = vrot.lane.b32.xlu0 %v3627, 126
        %v3634 = vpop.permute.xlu0 %3633
        %v3638 = vadd.f32 %v3613, %v3630
        %v3639 = vadd.f32 %v3614, %v3632
        %v3640 = vadd.f32 %v3615, %v3634
        %s3641 = sld [smem:[#allocation6 + $0x9]]
        %v3642 = vstv %s3641
        %v3643 = vadd.f32 %v3638, %v3642
        %v3644 = vadd.f32 %v3639, %v3642
        %v3645 = vadd.f32 %v3640, %v3642
        %v3646 = vmax.f32 %v3643, 0.0
        %v3647 = vmax.f32 %v3644, 0.0
        %v3648 = vmax.f32 %v3645, 0.0
        %v3649 = vsel %vm309, %v3646, 0.0
        %v3650 = vsel %vm310, %v3647, 0.0
        %v3651 = vsel %vm311, %v3648, 0.0
        %s3652 = sld [smem:[#allocation8 + $0x9]]
        %v3653 = vstv %s3652
        %v3654 = vmul.f32 %v3653, %v3649
        %v3655 = vmul.f32 %v3653, %v3650
        %v3656 = vadd.f32 %v3453, %v3654
        %v3657 = vadd.f32 %v3454, %v3655
        %s3658 = sld [smem:[#allocation8 + $0x13]]
        %v3659 = vstv %s3658
        %v3660 = vmul.f32 %v3659, %v3649
        %v3661 = vmul.f32 %v3659, %v3650
        %3664 = vrot.lane.b32.xlu0 %v3660, 127
        %v3665 = vpop.permute.xlu0 %3664
        %3666 = vrot.lane.b32.xlu0 %v3661, 127
        %v3667 = vpop.permute.xlu0 %3666
        %v3670 = vadd.f32 %v3656, %v3665
        %v3671 = vadd.f32 %v3657, %v3667
        %s3672 = sld [smem:[#allocation8 + $0x1d]]
        %v3673 = vstv %s3672
        %v3674 = vmul.f32 %v3673, %v3649
        %v3675 = vmul.f32 %v3673, %v3650
        %3678 = vrot.lane.b32.xlu0 %v3674, 126
        %v3679 = vpop.permute.xlu0 %3678
        %3680 = vrot.lane.b32.xlu0 %v3675, 126
        %v3681 = vpop.permute.xlu0 %3680
        %v3684 = vadd.f32 %v3670, %v3679
        %v3685 = vadd.f32 %v3671, %v3681
        %s3686 = sld [smem:[#allocation8 + $0x27]]
        %v3687 = vstv %s3686
        %v3688 = vmul.f32 %v3687, %v3649
        %v3689 = vmul.f32 %v3687, %v3650
        %v3690 = vmul.f32 %v3687, %v3651
        %v3694 = vrot.slane %v3688, 1
        %v3695 = vrot.slane %v3689, 1
        %v3696 = vsel %vm368, %v3694, %v3695
        %v3697 = vrot.slane %v3690, 1
        %v3698 = vsel %vm368, %v3695, %v3697
        %v3701 = vadd.f32 %v3684, %v3696
        %v3702 = vadd.f32 %v3685, %v3698
        %s3703 = sld [smem:[#allocation8 + $0x31]]
        %v3704 = vstv %s3703
        %v3705 = vmul.f32 %v3704, %v3649
        %v3706 = vmul.f32 %v3704, %v3650
        %v3707 = vmul.f32 %v3704, %v3651
        %v3711 = vrot.slane %v3705, 1
        %v3712 = vrot.slane %v3706, 1
        %v3713 = vsel %vm368, %v3711, %v3712
        %v3714 = vrot.slane %v3707, 1
        %v3715 = vsel %vm368, %v3712, %v3714
        %3716 = vrot.lane.b32.xlu0 %v3713, 127
        %v3717 = vpop.permute.xlu0 %3716
        %3718 = vrot.lane.b32.xlu0 %v3715, 127
        %v3719 = vpop.permute.xlu0 %3718
        %v3722 = vadd.f32 %v3701, %v3717
        %v3723 = vadd.f32 %v3702, %v3719
        %s3724 = sld [smem:[#allocation8 + $0x3b]]
        %v3725 = vstv %s3724
        %v3726 = vmul.f32 %v3725, %v3649
        %v3727 = vmul.f32 %v3725, %v3650
        %v3728 = vmul.f32 %v3725, %v3651
        %v3732 = vrot.slane %v3726, 1
        %v3733 = vrot.slane %v3727, 1
        %v3734 = vsel %vm368, %v3732, %v3733
        %v3735 = vrot.slane %v3728, 1
        %v3736 = vsel %vm368, %v3733, %v3735
        %3737 = vrot.lane.b32.xlu0 %v3734, 126
        %v3738 = vpop.permute.xlu0 %3737
        %3739 = vrot.lane.b32.xlu0 %v3736, 126
        %v3740 = vpop.permute.xlu0 %3739
        %v3743 = vadd.f32 %v3722, %v3738
        %v3744 = vadd.f32 %v3723, %v3740
        %s3745 = sld [smem:[#allocation8 + $0x45]]
        %v3746 = vstv %s3745
        %v3747 = vmul.f32 %v3746, %v3649
        %v3748 = vmul.f32 %v3746, %v3650
        %v3749 = vmul.f32 %v3746, %v3651
        %v3753 = vrot.slane %v3747, 2
        %v3754 = vrot.slane %v3748, 2
        %v3755 = vsel %vm438, %v3753, %v3754
        %v3756 = vrot.slane %v3749, 2
        %v3757 = vsel %vm438, %v3754, %v3756
        %v3760 = vadd.f32 %v3743, %v3755
        %v3761 = vadd.f32 %v3744, %v3757
        %s3762 = sld [smem:[#allocation8 + $0x4f]]
        %v3763 = vstv %s3762
        %v3764 = vmul.f32 %v3763, %v3649
        %v3765 = vmul.f32 %v3763, %v3650
        %v3766 = vmul.f32 %v3763, %v3651
        %v3770 = vrot.slane %v3764, 2
        %v3771 = vrot.slane %v3765, 2
        %v3772 = vsel %vm438, %v3770, %v3771
        %v3773 = vrot.slane %v3766, 2
        %v3774 = vsel %vm438, %v3771, %v3773
        %3775 = vrot.lane.b32.xlu0 %v3772, 127
        %v3776 = vpop.permute.xlu0 %3775
        %3777 = vrot.lane.b32.xlu0 %v3774, 127
        %v3778 = vpop.permute.xlu0 %3777
        %v3781 = vadd.f32 %v3760, %v3776
        %v3782 = vadd.f32 %v3761, %v3778
        %s3783 = sld [smem:[#allocation8 + $0x59]]
        %v3784 = vstv %s3783
        %v3785 = vmul.f32 %v3784, %v3649
        %v3786 = vmul.f32 %v3784, %v3650
        %v3787 = vmul.f32 %v3784, %v3651
        %v3791 = vrot.slane %v3785, 2
        %v3792 = vrot.slane %v3786, 2
        %v3793 = vsel %vm438, %v3791, %v3792
        %v3794 = vrot.slane %v3787, 2
        %v3795 = vsel %vm438, %v3792, %v3794
        %3796 = vrot.lane.b32.xlu0 %v3793, 126
        %v3797 = vpop.permute.xlu0 %3796
        %3798 = vrot.lane.b32.xlu0 %v3795, 126
        %v3799 = vpop.permute.xlu0 %3798
        %v3802 = vadd.f32 %v3781, %v3797
        %v3803 = vadd.f32 %v3782, %v3799
        %s3804 = sld [smem:[#allocation2]]
        %v3805 = vstv %s3804
        %v3806 = vadd.f32 %v3802, %v3805
        %v3807 = vadd.f32 %v3803, %v3805
        %v3808 = vxor.u32 %v3806, 2147483648
        %v3809 = vxor.u32 %v3807, 2147483648
        %v3810 = vmul.f32 %v3808, 1.442695
        %v3811 = vpow.pop %v3810
        %v3812 = vmul.f32 %v3809, 1.442695
        %v3813 = vpow.pop %v3812
        %v3814 = vadd.f32 %v3811, 1.0
        %v3815 = vadd.f32 %v3813, 1.0
        %v3816 = vrcp.pop %v3814
        %v3817 = vmul.f32 %v3814, %v3816
        %v3818 = vsub.f32 1.0, %v3817
        %v3819 = vmul.f32 %v3816, %v3818
        %v3820 = vadd.f32 %v3816, %v3819
        %vm3821 = vweird.f32 %v3814
        %vm3822 = vweird.f32 %v3816
        %vm3823 = vmor %vm3821, %vm3822
        %v3824 = vsel %vm3823, %v3816, %v3820
        %v3825 = vand.u32 2147483647, %v3814
        %vm3826 = vcmp.eq.f32.partialorder %v3825, 8.507059e+37
        %v3827 = vand.u32 %v3814, 2147483648
        %v3828 = vor.u32 1.1754944e-38, %v3827
        %v3829 = vsel %vm3826, %v3828, %v3824
        %v3830 = vmul.f32 1.0, %v3829
        %v3831 = vrcp.pop %v3815
        %v3832 = vmul.f32 %v3815, %v3831
        %v3833 = vsub.f32 1.0, %v3832
        %v3834 = vmul.f32 %v3831, %v3833
        %v3835 = vadd.f32 %v3831, %v3834
        %vm3836 = vweird.f32 %v3815
        %vm3837 = vweird.f32 %v3831
        %vm3838 = vmor %vm3836, %vm3837
        %v3839 = vsel %vm3838, %v3831, %v3835
        %v3840 = vand.u32 2147483647, %v3815
        %vm3841 = vcmp.eq.f32.partialorder %v3840, 8.507059e+37
        %v3842 = vand.u32 %v3815, 2147483648
        %v3843 = vor.u32 1.1754944e-38, %v3842
        %v3844 = vsel %vm3841, %v3843, %v3839
        %v3845 = vmul.f32 1.0, %v3844
        %vm3846 = vcmask 130048
        %3847 = vst.msk [vmem:[%s271] sm:$0xff] %vm3846, %v3830
        %3848 = vst.msk [vmem:[%s271 + $0x8] sm:$0xff] %vm3846, %v3845
        %s3849 = sand.u32 %s154, 1
        %s3850 = scalar_lea.sflag [#allocation4], %s3849
        %s3851 = sand.u32 %s154, 1
        %s3852 = smul.addr %s3851, 16
        %s3853 = scalar_lea.vmem [#allocation9], %s3852
        // Predicated region
        $region53: #{tpu_custom_call.1} parent=39 // pred_check
          %p3854 = pneg %p164
        $region54: #{tpu_custom_call.1} parent=39 // pred_check_branch
          %3856 = sbr.rel (%p3854) target = $region56
        $region55: #{tpu_custom_call.1} parent=39 // pred_region
          %s3857 = smul.u32 2, %s27
          %3859 = vsyncadd %s3850, 0
          %s3860 = smul.addr %s26, 2
          %s3861 = sadd.s32 %s3857, %s3860
          %s3862 = smul.addr %s3861, 8
          %s3863 = scalar_lea.hbm %s5, %s3862
          %s3864 = sshll.u32 %s3853, 4
          %s3865 = int_to_ptr.vmem [resolvable:$true] %s3864
          %s3866 = sshll.u32 %s3863, 4
          %s3867 = int_to_ptr.hbm [resolvable:$true] %s3866
          %3872 = dma.vmem_to_hbm [thread:$0]  %s3865, 256, %s3867, %s3850, 128, 128, 8
        $region56: #{tpu_custom_call.1} parent=39 // pred_fallthru
          _
      $region40: #{tpu_custom_call.1} parent=5 // pred_fallthru
        _
      %p3873 = scmp.le.s32.totalorder 2, %s17
      // Predicated region
      $region57: #{tpu_custom_call.1} parent=5 // pred_check
        %p3874 = pneg %p3873
      $region58: #{tpu_custom_call.1} parent=5 // pred_check_branch
        %3876 = sbr.rel (%p3874) target = $region60
      $region59: #{tpu_custom_call.1} parent=5 // pred_region
        %s3877 = ssub.s32 %s17, 2
        // Predicated region
        $region61: #{tpu_custom_call.1} parent=59 // pred_check
          %p3878 = pneg %p170
        $region62: #{tpu_custom_call.1} parent=59 // pred_check_branch
          %3880 = sbr.rel (%p3878) target = $region64
        $region63: #{tpu_custom_call.1} parent=59 // pred_region
          %s3881 = sand.u32 %s155, 1
          %s3882 = scalar_lea.sflag [#allocation4], %s3881
          %s3883 = sand.u32 %s155, 1
          %s3884 = smul.addr %s3883, 16
          %s3885 = scalar_lea.vmem [#allocation9], %s3884
          %3887 = dma.done %s3882, 256
        $region64: #{tpu_custom_call.1} parent=59 // pred_fallthru
          _
      $region60: #{tpu_custom_call.1} parent=5 // pred_fallthru
        _
    $region6: #{tpu_custom_call.1} parent=1 // loop_footer
      %s21 = sadd.s32 1, %s17
    $region7: #{tpu_custom_call.1} parent=1 // loop_footer_branch
      %16 = sbr.rel target = $region3
    $region8: #{tpu_custom_call.1} parent=1 // loop_exit
      _
    %3888 = vsyncpa [#allocation4], 1
    %s3889 = scalar_lea.sflag [#allocation4], 1
    %3890 = vsyncpa %s3889, 1
    %3891 = vsyncpa [#allocation5], 1
    %s3892 = scalar_lea.sflag [#allocation5], 1
    %3893 = vsyncpa %s3892, 1
    %3894 = vsyncpa [#allocation7], 1

</llo_original>
